<compile_context>
chip_gen: v6e
topology: v6e:2x2x1
jax: 0.10.0
libtpu: 0.0.40
codegen_flags: <defaults>
</compile_context>

<pallas_src>
import functools

import jax
import jax.numpy as jnp
import numpy as np
from jax.experimental import pallas as pl
from jax.experimental.pallas import tpu as pltpu


def _fpn_conv3x3_kernel(x_ref, w_ref, b_ref, o_ref, patch_ref, *, H, W, Cp, N):
    # x_ref     : (1, N, H+2, W+2, Cp)  one level, all batches, NHWC, zero halo baked in
    # w_ref     : (1, Cout, 9*Cp)       per-level weight slab, K ordered [kh, kw, c]
    # b_ref     : (1, Cout, 1)          f32 bias column
    # o_ref     : (1, N, Cout, H*W)     flattened NCHW output (lane-dense, H*W lanes)
    # patch_ref : (N*H*W, 9*Cp)         VMEM scratch: im2col patch matrix (all batches)
    HW = H * W

    # im2col: place the 9 shifted (H, W, Cp) windows of every batch element side
    # by side along K -> one big MXU contraction instead of 9 small K=Cp ones.
    for n in range(N):
        for kh in range(3):
            for kw in range(3):
                win = x_ref[0, n, pl.ds(kh, H), pl.ds(kw, W), :]        # (H, W, Cp)
                patch_ref[pl.ds(n * HW, HW),
                          pl.ds((kh * 3 + kw) * Cp, Cp)] = win.reshape(HW, Cp)

    w = w_ref[0]                     # (Cout, 9*Cp)
    patch = patch_ref[...]           # (N*H*W, 9*Cp)
    dn = (((1,), (1,)), ((), ()))    # contract the 9*Cp axis of both (A @ B^T form)
    acc = jax.lax.dot_general(w, patch, dn, preferred_element_type=jnp.float32)
    out = (acc + b_ref[0]).astype(o_ref.dtype)       # (Cout, N*H*W)

    for n in range(N):               # 256-lane-aligned, unmasked stores
        o_ref[0, n, :, :] = out[:, n * HW:(n + 1) * HW]


def fused_fpn_conv3x3(x_packed, w_packed, b_packed, *, H, W):
    """One pallas_call; one grid step per pyramid level (full batch inside)."""
    L, N = x_packed.shape[0], x_packed.shape[1]
    Cp = x_packed.shape[-1]
    Cout = w_packed.shape[1]
    kernel = functools.partial(_fpn_conv3x3_kernel, H=H, W=W, Cp=Cp, N=N)
    return pl.pallas_call(
        kernel,
        out_shape=jax.ShapeDtypeStruct((L, N, Cout, H * W), x_packed.dtype),
        grid_spec=pltpu.PrefetchScalarGridSpec(
            num_scalar_prefetch=0,
            grid=(L,),
            in_specs=[
                pl.BlockSpec((1, N, H + 2, W + 2, Cp), lambda l: (l, 0, 0, 0, 0)),
                pl.BlockSpec((1, Cout, 9 * Cp), lambda l: (l, 0, 0)),
                pl.BlockSpec((1, Cout, 1), lambda l: (l, 0, 0)),
            ],
            out_specs=pl.BlockSpec((1, N, Cout, H * W), lambda l: (l, 0, 0, 0)),
            scratch_shapes=[pltpu.VMEM((N * H * W, 9 * Cp), x_packed.dtype)],
        ),
        compiler_params=pltpu.CompilerParams(
            dimension_semantics=("parallel",)),
    )(x_packed, w_packed, b_packed)


class VisionFPNPallas:
    """need_conv_fpn=False: one 3x3 conv per in_channel level (fused Pallas kernel)."""

    def __init__(self, in_channels=(4, 8, 16, 32), inner_channels=16, key=None):
        self.in_channels = tuple(in_channels)
        self.inner_channels = inner_channels
        self.cp = max(self.in_channels)          # Cin padded to the widest level
        key = jax.random.PRNGKey(42) if key is None else key

        self.params = {}   # channel-count -> (HWIO weight, bias), like the ModuleDict
        self.packed = {}   # channel-count -> ((Cout, 9*Cp) slab, (Cout, 1) bias)
        for c in self.in_channels:
            key, kw_, kb_ = jax.random.split(key, 3)
            fan_in = c * 9
            bound = 1.0 / np.sqrt(fan_in)
            # PyTorch conv weight layout (Cout, Cin, 3, 3) -> HWIO
            w_oihw = jax.random.uniform(kw_, (inner_channels, c, 3, 3),
                                        jnp.float32, -bound, bound)
            b = jax.random.uniform(kb_, (inner_channels,), jnp.float32, -bound, bound)
            w_hwio = jnp.transpose(w_oihw, (2, 3, 1, 0))          # (3, 3, c, Cout)
            self.params[str(c)] = (w_hwio, b)

            # pad Cin -> Cp with zeros, fold taps: (Cout, 9*Cp), K ordered [kh, kw, c]
            w_pad = jnp.zeros((3, 3, self.cp, inner_channels), jnp.float32)
            w_pad = w_pad.at[:, :, :c, :].set(w_hwio)
            w_slab = jnp.transpose(w_pad, (3, 0, 1, 2)).reshape(inner_channels,
                                                                9 * self.cp)
            self.packed[str(c)] = (w_slab, b.reshape(inner_channels, 1))

    def __call__(self, features):
        # features: list of NCHW arrays; each level routes to the conv keyed by
        # its channel count (same semantics as the PyTorch ModuleDict lookup).
        L = len(features)
        N = features[0].shape[0]
        dtype = features[0].dtype
        hs = [int(f.shape[2]) for f in features]
        ws = [int(f.shape[3]) for f in features]
        Hm, Wm = max(hs), max(ws)
        Cp, Cout = self.cp, self.inner_channels

        # Pack all levels into one zero canvas (halo + channel/spatial padding
        # in a single copy).  Zeros outside each level's valid region reproduce
        # the conv's padding=1 exactly.
        x_packed = jnp.zeros((L, N, Hm + 2, Wm + 2, Cp), dtype)
        w_list, b_list = [], []
        for l, f in enumerate(features):
            c, h, w = int(f.shape[1]), int(f.shape[2]), int(f.shape[3])
            x_nhwc = jnp.transpose(f, (0, 2, 3, 1))               # (N, h, w, c)
            x_packed = x_packed.at[l, :, 1:h + 1, 1:w + 1, :c].set(x_nhwc)
            w_slab, b_col = self.packed[str(c)]
            w_list.append(w_slab)
            b_list.append(b_col)
        w_packed = jnp.stack(w_list).astype(dtype)                # (L, Cout, 9*Cp)
        b_packed = jnp.stack(b_list)                              # (L, Cout, 1) f32

        out = fused_fpn_conv3x3(x_packed, w_packed, b_packed, H=Hm, W=Wm)
        # out: (L, N, Cout, Hm*Wm) == flattened NCHW; crop each level's valid region.
        outs = []
        for l in range(L):
            y = out[l].reshape(N, Cout, Hm, Wm)[:, :, :hs[l], :ws[l]]
            outs.append(y)
        return outs


def _reference(features, model):
    # Pure-JAX reference (lax conv) for correctness check.
    outs = []
    for f in features:
        c = f.shape[1]
        w_hwio, b = model.params[str(c)]
        x_nhwc = jnp.transpose(f, (0, 2, 3, 1))
        y = jax.lax.conv_general_dilated(
            x_nhwc, w_hwio, window_strides=(1, 1), padding=((1, 1), (1, 1)),
            dimension_numbers=("NHWC", "HWIO", "NHWC"))
        y = y + b[None, None, None, :]
        outs.append(jnp.transpose(y, (0, 3, 1, 2)))
    return outs


if __name__ == "__main__":
    key = jax.random.PRNGKey(0)
    in_channels = (4, 8, 16, 32)
    spatials = (16, 8, 4, 2)
    batch = 2

    feats = []
    for c, s in zip(in_channels, spatials):
        key, sub = jax.random.split(key)
        feats.append(jax.random.normal(sub, (batch, c, s, s), jnp.float32))

    model = VisionFPNPallas(in_channels=in_channels, inner_channels=16)

    outs = model(feats)
    outs = [jax.block_until_ready(o) for o in outs]

    refs = _reference(feats, model)
    for o, r, s in zip(outs, refs, spatials):
        assert o.shape == (batch, 16, s, s), o.shape
        np.testing.assert_allclose(np.asarray(o), np.asarray(r),
                                   rtol=1e-4, atol=1e-4)

    print("KERNEL_OK")
</pallas_src>

<mosaic_0001>
module attributes {stable_mosaic.version = 11 : i64} {
  func.func @_fpn_conv3x3_kernel(%arg0: i32, %arg1: memref<1x2x18x18x32xf32, #tpu.memory_space<vmem>>, %arg2: memref<1x16x288xf32, #tpu.memory_space<vmem>>, %arg3: memref<1x16x1xf32, #tpu.memory_space<vmem>>, %arg4: memref<1x2x16x256xf32, #tpu.memory_space<vmem>>, %arg5: memref<512x288xf32, #tpu.memory_space<vmem>>) attributes {dimension_semantics = [#tpu.dimension_semantics<parallel>], iteration_bounds = array<i64: 4>, scalar_prefetch = 0 : i64, scratch_operands = 1 : i64, tpu.core_type = #tpu.core_type<tc>, window_params = [{transform_indices = @transform_0, window_bounds = array<i64: 1, 2, 18, 18, 32>}, {transform_indices = @transform_1, window_bounds = array<i64: 1, 16, 288>}, {transform_indices = @transform_2, window_bounds = array<i64: 1, 16, 1>}, {transform_indices = @transform_3, window_bounds = array<i64: 1, 2, 16, 256>}]} {
    %c0 = arith.constant 0 : index
    %c0_0 = arith.constant 0 : index
    %c0_1 = arith.constant 0 : index
    %c0_2 = arith.constant 0 : index
    %c0_3 = arith.constant 0 : index
    %0 = vector.load %arg1[%c0, %c0_0, %c0_1, %c0_2, %c0_3] : memref<1x2x18x18x32xf32, #tpu.memory_space<vmem>>, vector<1x1x16x16x32xf32>
    %1 = vector.shape_cast %0 : vector<1x1x16x16x32xf32> to vector<16x16x32xf32>
    %2 = vector.shape_cast %1 : vector<16x16x32xf32> to vector<256x32xf32>
    %c0_4 = arith.constant 0 : index
    %c0_5 = arith.constant 0 : index
    %3 = vector.load %arg5[%c0_4, %c0_5] : memref<512x288xf32, #tpu.memory_space<vmem>>, vector<256x32xf32>
    tpu.vector_store %arg5[%c0_4, %c0_5], %2 {strides = array<i32>} : memref<512x288xf32, #tpu.memory_space<vmem>>, vector<256x32xf32>,
    %c0_6 = arith.constant 0 : index
    %c0_7 = arith.constant 0 : index
    %c0_8 = arith.constant 0 : index
    %c1 = arith.constant 1 : index
    %c0_9 = arith.constant 0 : index
    %4 = vector.load %arg1[%c0_6, %c0_7, %c0_8, %c1, %c0_9] : memref<1x2x18x18x32xf32, #tpu.memory_space<vmem>>, vector<1x1x16x16x32xf32>
    %5 = vector.shape_cast %4 : vector<1x1x16x16x32xf32> to vector<16x16x32xf32>
    %6 = vector.shape_cast %5 : vector<16x16x32xf32> to vector<256x32xf32>
    %c0_10 = arith.constant 0 : index
    %c32 = arith.constant 32 : index
    %7 = vector.load %arg5[%c0_10, %c32] : memref<512x288xf32, #tpu.memory_space<vmem>>, vector<256x32xf32>
    tpu.vector_store %arg5[%c0_10, %c32], %6 {strides = array<i32>} : memref<512x288xf32, #tpu.memory_space<vmem>>, vector<256x32xf32>,
    %c0_11 = arith.constant 0 : index
    %c0_12 = arith.constant 0 : index
    %c0_13 = arith.constant 0 : index
    %c2 = arith.constant 2 : index
    %c0_14 = arith.constant 0 : index
    %8 = vector.load %arg1[%c0_11, %c0_12, %c0_13, %c2, %c0_14] : memref<1x2x18x18x32xf32, #tpu.memory_space<vmem>>, vector<1x1x16x16x32xf32>
    %9 = vector.shape_cast %8 : vector<1x1x16x16x32xf32> to vector<16x16x32xf32>
    %10 = vector.shape_cast %9 : vector<16x16x32xf32> to vector<256x32xf32>
    %c0_15 = arith.constant 0 : index
    %c64 = arith.constant 64 : index
    %11 = vector.load %arg5[%c0_15, %c64] : memref<512x288xf32, #tpu.memory_space<vmem>>, vector<256x32xf32>
    tpu.vector_store %arg5[%c0_15, %c64], %10 {strides = array<i32>} : memref<512x288xf32, #tpu.memory_space<vmem>>, vector<256x32xf32>,
    %c0_16 = arith.constant 0 : index
    %c0_17 = arith.constant 0 : index
    %c1_18 = arith.constant 1 : index
    %c0_19 = arith.constant 0 : index
    %c0_20 = arith.constant 0 : index
    %12 = vector.load %arg1[%c0_16, %c0_17, %c1_18, %c0_19, %c0_20] : memref<1x2x18x18x32xf32, #tpu.memory_space<vmem>>, vector<1x1x16x16x32xf32>
    %13 = vector.shape_cast %12 : vector<1x1x16x16x32xf32> to vector<16x16x32xf32>
    %14 = vector.shape_cast %13 : vector<16x16x32xf32> to vector<256x32xf32>
    %c0_21 = arith.constant 0 : index
    %c96 = arith.constant 96 : index
    %15 = vector.load %arg5[%c0_21, %c96] : memref<512x288xf32, #tpu.memory_space<vmem>>, vector<256x32xf32>
    tpu.vector_store %arg5[%c0_21, %c96], %14 {strides = array<i32>} : memref<512x288xf32, #tpu.memory_space<vmem>>, vector<256x32xf32>,
    %c0_22 = arith.constant 0 : index
    %c0_23 = arith.constant 0 : index
    %c1_24 = arith.constant 1 : index
    %c1_25 = arith.constant 1 : index
    %c0_26 = arith.constant 0 : index
    %16 = vector.load %arg1[%c0_22, %c0_23, %c1_24, %c1_25, %c0_26] : memref<1x2x18x18x32xf32, #tpu.memory_space<vmem>>, vector<1x1x16x16x32xf32>
    %17 = vector.shape_cast %16 : vector<1x1x16x16x32xf32> to vector<16x16x32xf32>
    %18 = vector.shape_cast %17 : vector<16x16x32xf32> to vector<256x32xf32>
    %c0_27 = arith.constant 0 : index
    %c128 = arith.constant 128 : index
    %19 = vector.load %arg5[%c0_27, %c128] : memref<512x288xf32, #tpu.memory_space<vmem>>, vector<256x32xf32>
    tpu.vector_store %arg5[%c0_27, %c128], %18 {strides = array<i32>} : memref<512x288xf32, #tpu.memory_space<vmem>>, vector<256x32xf32>,
    %c0_28 = arith.constant 0 : index
    %c0_29 = arith.constant 0 : index
    %c1_30 = arith.constant 1 : index
    %c2_31 = arith.constant 2 : index
    %c0_32 = arith.constant 0 : index
    %20 = vector.load %arg1[%c0_28, %c0_29, %c1_30, %c2_31, %c0_32] : memref<1x2x18x18x32xf32, #tpu.memory_space<vmem>>, vector<1x1x16x16x32xf32>
    %21 = vector.shape_cast %20 : vector<1x1x16x16x32xf32> to vector<16x16x32xf32>
    %22 = vector.shape_cast %21 : vector<16x16x32xf32> to vector<256x32xf32>
    %c0_33 = arith.constant 0 : index
    %c160 = arith.constant 160 : index
    %23 = vector.load %arg5[%c0_33, %c160] : memref<512x288xf32, #tpu.memory_space<vmem>>, vector<256x32xf32>
    tpu.vector_store %arg5[%c0_33, %c160], %22 {strides = array<i32>} : memref<512x288xf32, #tpu.memory_space<vmem>>, vector<256x32xf32>,
    %c0_34 = arith.constant 0 : index
    %c0_35 = arith.constant 0 : index
    %c2_36 = arith.constant 2 : index
    %c0_37 = arith.constant 0 : index
    %c0_38 = arith.constant 0 : index
    %24 = vector.load %arg1[%c0_34, %c0_35, %c2_36, %c0_37, %c0_38] : memref<1x2x18x18x32xf32, #tpu.memory_space<vmem>>, vector<1x1x16x16x32xf32>
    %25 = vector.shape_cast %24 : vector<1x1x16x16x32xf32> to vector<16x16x32xf32>
    %26 = vector.shape_cast %25 : vector<16x16x32xf32> to vector<256x32xf32>
    %c0_39 = arith.constant 0 : index
    %c192 = arith.constant 192 : index
    %27 = vector.load %arg5[%c0_39, %c192] : memref<512x288xf32, #tpu.memory_space<vmem>>, vector<256x32xf32>
    tpu.vector_store %arg5[%c0_39, %c192], %26 {strides = array<i32>} : memref<512x288xf32, #tpu.memory_space<vmem>>, vector<256x32xf32>,
    %c0_40 = arith.constant 0 : index
    %c0_41 = arith.constant 0 : index
    %c2_42 = arith.constant 2 : index
    %c1_43 = arith.constant 1 : index
    %c0_44 = arith.constant 0 : index
    %28 = vector.load %arg1[%c0_40, %c0_41, %c2_42, %c1_43, %c0_44] : memref<1x2x18x18x32xf32, #tpu.memory_space<vmem>>, vector<1x1x16x16x32xf32>
    %29 = vector.shape_cast %28 : vector<1x1x16x16x32xf32> to vector<16x16x32xf32>
    %30 = vector.shape_cast %29 : vector<16x16x32xf32> to vector<256x32xf32>
    %c0_45 = arith.constant 0 : index
    %c224 = arith.constant 224 : index
    %31 = vector.load %arg5[%c0_45, %c224] : memref<512x288xf32, #tpu.memory_space<vmem>>, vector<256x32xf32>
    tpu.vector_store %arg5[%c0_45, %c224], %30 {strides = array<i32>} : memref<512x288xf32, #tpu.memory_space<vmem>>, vector<256x32xf32>,
    %c0_46 = arith.constant 0 : index
    %c0_47 = arith.constant 0 : index
    %c2_48 = arith.constant 2 : index
    %c2_49 = arith.constant 2 : index
    %c0_50 = arith.constant 0 : index
    %32 = vector.load %arg1[%c0_46, %c0_47, %c2_48, %c2_49, %c0_50] : memref<1x2x18x18x32xf32, #tpu.memory_space<vmem>>, vector<1x1x16x16x32xf32>
    %33 = vector.shape_cast %32 : vector<1x1x16x16x32xf32> to vector<16x16x32xf32>
    %34 = vector.shape_cast %33 : vector<16x16x32xf32> to vector<256x32xf32>
    %c0_51 = arith.constant 0 : index
    %c256 = arith.constant 256 : index
    %35 = vector.load %arg5[%c0_51, %c256] : memref<512x288xf32, #tpu.memory_space<vmem>>, vector<256x32xf32>
    tpu.vector_store %arg5[%c0_51, %c256], %34 {strides = array<i32>} : memref<512x288xf32, #tpu.memory_space<vmem>>, vector<256x32xf32>,
    %c0_52 = arith.constant 0 : index
    %c1_53 = arith.constant 1 : index
    %c0_54 = arith.constant 0 : index
    %c0_55 = arith.constant 0 : index
    %c0_56 = arith.constant 0 : index
    %36 = vector.load %arg1[%c0_52, %c1_53, %c0_54, %c0_55, %c0_56] : memref<1x2x18x18x32xf32, #tpu.memory_space<vmem>>, vector<1x1x16x16x32xf32>
    %37 = vector.shape_cast %36 : vector<1x1x16x16x32xf32> to vector<16x16x32xf32>
    %38 = vector.shape_cast %37 : vector<16x16x32xf32> to vector<256x32xf32>
    %c256_57 = arith.constant 256 : index
    %c0_58 = arith.constant 0 : index
    %39 = vector.load %arg5[%c256_57, %c0_58] : memref<512x288xf32, #tpu.memory_space<vmem>>, vector<256x32xf32>
    tpu.vector_store %arg5[%c256_57, %c0_58], %38 {strides = array<i32>} : memref<512x288xf32, #tpu.memory_space<vmem>>, vector<256x32xf32>,
    %c0_59 = arith.constant 0 : index
    %c1_60 = arith.constant 1 : index
    %c0_61 = arith.constant 0 : index
    %c1_62 = arith.constant 1 : index
    %c0_63 = arith.constant 0 : index
    %40 = vector.load %arg1[%c0_59, %c1_60, %c0_61, %c1_62, %c0_63] : memref<1x2x18x18x32xf32, #tpu.memory_space<vmem>>, vector<1x1x16x16x32xf32>
    %41 = vector.shape_cast %40 : vector<1x1x16x16x32xf32> to vector<16x16x32xf32>
    %42 = vector.shape_cast %41 : vector<16x16x32xf32> to vector<256x32xf32>
    %c256_64 = arith.constant 256 : index
    %c32_65 = arith.constant 32 : index
    %43 = vector.load %arg5[%c256_64, %c32_65] : memref<512x288xf32, #tpu.memory_space<vmem>>, vector<256x32xf32>
    tpu.vector_store %arg5[%c256_64, %c32_65], %42 {strides = array<i32>} : memref<512x288xf32, #tpu.memory_space<vmem>>, vector<256x32xf32>,
    %c0_66 = arith.constant 0 : index
    %c1_67 = arith.constant 1 : index
    %c0_68 = arith.constant 0 : index
    %c2_69 = arith.constant 2 : index
    %c0_70 = arith.constant 0 : index
    %44 = vector.load %arg1[%c0_66, %c1_67, %c0_68, %c2_69, %c0_70] : memref<1x2x18x18x32xf32, #tpu.memory_space<vmem>>, vector<1x1x16x16x32xf32>
    %45 = vector.shape_cast %44 : vector<1x1x16x16x32xf32> to vector<16x16x32xf32>
    %46 = vector.shape_cast %45 : vector<16x16x32xf32> to vector<256x32xf32>
    %c256_71 = arith.constant 256 : index
    %c64_72 = arith.constant 64 : index
    %47 = vector.load %arg5[%c256_71, %c64_72] : memref<512x288xf32, #tpu.memory_space<vmem>>, vector<256x32xf32>
    tpu.vector_store %arg5[%c256_71, %c64_72], %46 {strides = array<i32>} : memref<512x288xf32, #tpu.memory_space<vmem>>, vector<256x32xf32>,
    %c0_73 = arith.constant 0 : index
    %c1_74 = arith.constant 1 : index
    %c1_75 = arith.constant 1 : index
    %c0_76 = arith.constant 0 : index
    %c0_77 = arith.constant 0 : index
    %48 = vector.load %arg1[%c0_73, %c1_74, %c1_75, %c0_76, %c0_77] : memref<1x2x18x18x32xf32, #tpu.memory_space<vmem>>, vector<1x1x16x16x32xf32>
    %49 = vector.shape_cast %48 : vector<1x1x16x16x32xf32> to vector<16x16x32xf32>
    %50 = vector.shape_cast %49 : vector<16x16x32xf32> to vector<256x32xf32>
    %c256_78 = arith.constant 256 : index
    %c96_79 = arith.constant 96 : index
    %51 = vector.load %arg5[%c256_78, %c96_79] : memref<512x288xf32, #tpu.memory_space<vmem>>, vector<256x32xf32>
    tpu.vector_store %arg5[%c256_78, %c96_79], %50 {strides = array<i32>} : memref<512x288xf32, #tpu.memory_space<vmem>>, vector<256x32xf32>,
    %c0_80 = arith.constant 0 : index
    %c1_81 = arith.constant 1 : index
    %c1_82 = arith.constant 1 : index
    %c1_83 = arith.constant 1 : index
    %c0_84 = arith.constant 0 : index
    %52 = vector.load %arg1[%c0_80, %c1_81, %c1_82, %c1_83, %c0_84] : memref<1x2x18x18x32xf32, #tpu.memory_space<vmem>>, vector<1x1x16x16x32xf32>
    %53 = vector.shape_cast %52 : vector<1x1x16x16x32xf32> to vector<16x16x32xf32>
    %54 = vector.shape_cast %53 : vector<16x16x32xf32> to vector<256x32xf32>
    %c256_85 = arith.constant 256 : index
    %c128_86 = arith.constant 128 : index
    %55 = vector.load %arg5[%c256_85, %c128_86] : memref<512x288xf32, #tpu.memory_space<vmem>>, vector<256x32xf32>
    tpu.vector_store %arg5[%c256_85, %c128_86], %54 {strides = array<i32>} : memref<512x288xf32, #tpu.memory_space<vmem>>, vector<256x32xf32>,
    %c0_87 = arith.constant 0 : index
    %c1_88 = arith.constant 1 : index
    %c1_89 = arith.constant 1 : index
    %c2_90 = arith.constant 2 : index
    %c0_91 = arith.constant 0 : index
    %56 = vector.load %arg1[%c0_87, %c1_88, %c1_89, %c2_90, %c0_91] : memref<1x2x18x18x32xf32, #tpu.memory_space<vmem>>, vector<1x1x16x16x32xf32>
    %57 = vector.shape_cast %56 : vector<1x1x16x16x32xf32> to vector<16x16x32xf32>
    %58 = vector.shape_cast %57 : vector<16x16x32xf32> to vector<256x32xf32>
    %c256_92 = arith.constant 256 : index
    %c160_93 = arith.constant 160 : index
    %59 = vector.load %arg5[%c256_92, %c160_93] : memref<512x288xf32, #tpu.memory_space<vmem>>, vector<256x32xf32>
    tpu.vector_store %arg5[%c256_92, %c160_93], %58 {strides = array<i32>} : memref<512x288xf32, #tpu.memory_space<vmem>>, vector<256x32xf32>,
    %c0_94 = arith.constant 0 : index
    %c1_95 = arith.constant 1 : index
    %c2_96 = arith.constant 2 : index
    %c0_97 = arith.constant 0 : index
    %c0_98 = arith.constant 0 : index
    %60 = vector.load %arg1[%c0_94, %c1_95, %c2_96, %c0_97, %c0_98] : memref<1x2x18x18x32xf32, #tpu.memory_space<vmem>>, vector<1x1x16x16x32xf32>
    %61 = vector.shape_cast %60 : vector<1x1x16x16x32xf32> to vector<16x16x32xf32>
    %62 = vector.shape_cast %61 : vector<16x16x32xf32> to vector<256x32xf32>
    %c256_99 = arith.constant 256 : index
    %c192_100 = arith.constant 192 : index
    %63 = vector.load %arg5[%c256_99, %c192_100] : memref<512x288xf32, #tpu.memory_space<vmem>>, vector<256x32xf32>
    tpu.vector_store %arg5[%c256_99, %c192_100], %62 {strides = array<i32>} : memref<512x288xf32, #tpu.memory_space<vmem>>, vector<256x32xf32>,
    %c0_101 = arith.constant 0 : index
    %c1_102 = arith.constant 1 : index
    %c2_103 = arith.constant 2 : index
    %c1_104 = arith.constant 1 : index
    %c0_105 = arith.constant 0 : index
    %64 = vector.load %arg1[%c0_101, %c1_102, %c2_103, %c1_104, %c0_105] : memref<1x2x18x18x32xf32, #tpu.memory_space<vmem>>, vector<1x1x16x16x32xf32>
    %65 = vector.shape_cast %64 : vector<1x1x16x16x32xf32> to vector<16x16x32xf32>
    %66 = vector.shape_cast %65 : vector<16x16x32xf32> to vector<256x32xf32>
    %c256_106 = arith.constant 256 : index
    %c224_107 = arith.constant 224 : index
    %67 = vector.load %arg5[%c256_106, %c224_107] : memref<512x288xf32, #tpu.memory_space<vmem>>, vector<256x32xf32>
    tpu.vector_store %arg5[%c256_106, %c224_107], %66 {strides = array<i32>} : memref<512x288xf32, #tpu.memory_space<vmem>>, vector<256x32xf32>,
    %c0_108 = arith.constant 0 : index
    %c1_109 = arith.constant 1 : index
    %c2_110 = arith.constant 2 : index
    %c2_111 = arith.constant 2 : index
    %c0_112 = arith.constant 0 : index
    %68 = vector.load %arg1[%c0_108, %c1_109, %c2_110, %c2_111, %c0_112] : memref<1x2x18x18x32xf32, #tpu.memory_space<vmem>>, vector<1x1x16x16x32xf32>
    %69 = vector.shape_cast %68 : vector<1x1x16x16x32xf32> to vector<16x16x32xf32>
    %70 = vector.shape_cast %69 : vector<16x16x32xf32> to vector<256x32xf32>
    %c256_113 = arith.constant 256 : index
    %c256_114 = arith.constant 256 : index
    %71 = vector.load %arg5[%c256_113, %c256_114] : memref<512x288xf32, #tpu.memory_space<vmem>>, vector<256x32xf32>
    tpu.vector_store %arg5[%c256_113, %c256_114], %70 {strides = array<i32>} : memref<512x288xf32, #tpu.memory_space<vmem>>, vector<256x32xf32>,
    %c0_115 = arith.constant 0 : index
    %c0_116 = arith.constant 0 : index
    %c0_117 = arith.constant 0 : index
    %72 = vector.load %arg2[%c0_115, %c0_116, %c0_117] : memref<1x16x288xf32, #tpu.memory_space<vmem>>, vector<1x16x288xf32>
    %73 = vector.shape_cast %72 : vector<1x16x288xf32> to vector<16x288xf32>
    %c0_118 = arith.constant 0 : index
    %c0_119 = arith.constant 0 : index
    %74 = vector.load %arg5[%c0_118, %c0_119] : memref<512x288xf32, #tpu.memory_space<vmem>>, vector<512x288xf32>
    %cst = arith.constant dense<0.000000e+00> : vector<16x512xf32>
    %75 = tpu.matmul %73, %74, %cst {dimension_numbers = #tpu.dot_dimension_numbers<[1], [1], [0], [0], [0, 0, 1, 0], [], []>} : vector<16x288xf32>, vector<512x288xf32>, vector<16x512xf32> -> vector<16x512xf32>
    %c0_120 = arith.constant 0 : index
    %c0_121 = arith.constant 0 : index
    %c0_122 = arith.constant 0 : index
    %76 = vector.load %arg3[%c0_120, %c0_121, %c0_122] : memref<1x16x1xf32, #tpu.memory_space<vmem>>, vector<1x16x1xf32>
    %77 = vector.shape_cast %76 : vector<1x16x1xf32> to vector<16x1xf32>
    %78 = vector.broadcast %77 : vector<16x1xf32> to vector<16x512xf32>
    %79 = arith.addf %75, %78 : vector<16x512xf32>
    %80 = vector.extract_strided_slice %79 {offsets = [0, 0], sizes = [16, 256], strides = [1, 1]} : vector<16x512xf32> to vector<16x256xf32>
    %c0_123 = arith.constant 0 : index
    %c0_124 = arith.constant 0 : index
    %c0_125 = arith.constant 0 : index
    %c0_126 = arith.constant 0 : index
    %81 = vector.load %arg4[%c0_123, %c0_124, %c0_125, %c0_126] : memref<1x2x16x256xf32, #tpu.memory_space<vmem>>, vector<1x1x16x256xf32>
    %82 = vector.shape_cast %81 : vector<1x1x16x256xf32> to vector<16x256xf32>
    %83 = vector.shape_cast %80 : vector<16x256xf32> to vector<1x1x16x256xf32>
    tpu.vector_store %arg4[%c0_123, %c0_124, %c0_125, %c0_126], %83 {strides = array<i32>} : memref<1x2x16x256xf32, #tpu.memory_space<vmem>>, vector<1x1x16x256xf32>,
    %84 = vector.extract_strided_slice %79 {offsets = [0, 256], sizes = [16, 256], strides = [1, 1]} : vector<16x512xf32> to vector<16x256xf32>
    %c0_127 = arith.constant 0 : index
    %c1_128 = arith.constant 1 : index
    %c0_129 = arith.constant 0 : index
    %c0_130 = arith.constant 0 : index
    %85 = vector.load %arg4[%c0_127, %c1_128, %c0_129, %c0_130] : memref<1x2x16x256xf32, #tpu.memory_space<vmem>>, vector<1x1x16x256xf32>
    %86 = vector.shape_cast %85 : vector<1x1x16x256xf32> to vector<16x256xf32>
    %87 = vector.shape_cast %84 : vector<16x256xf32> to vector<1x1x16x256xf32>
    tpu.vector_store %arg4[%c0_127, %c1_128, %c0_129, %c0_130], %87 {strides = array<i32>} : memref<1x2x16x256xf32, #tpu.memory_space<vmem>>, vector<1x1x16x256xf32>,
    return
  }
  func.func @transform_0(%arg0: i32) -> (i32, i32, i32, i32, i32) {
    %c0_i32 = arith.constant 0 : i32
    %c0_i32_0 = arith.constant 0 : i32
    %c0_i32_1 = arith.constant 0 : i32
    %c0_i32_2 = arith.constant 0 : i32
    %c0_i32_3 = arith.constant 0 : i32
    return %arg0, %c0_i32, %c0_i32_0, %c0_i32_1, %c0_i32_2 : i32, i32, i32, i32, i32
  }
  func.func @transform_1(%arg0: i32) -> (i32, i32, i32) {
    %c0_i32 = arith.constant 0 : i32
    %c0_i32_0 = arith.constant 0 : i32
    %c0_i32_1 = arith.constant 0 : i32
    return %arg0, %c0_i32, %c0_i32_0 : i32, i32, i32
  }
  func.func @transform_2(%arg0: i32) -> (i32, i32, i32) {
    %c0_i32 = arith.constant 0 : i32
    %c0_i32_0 = arith.constant 0 : i32
    %c0_i32_1 = arith.constant 0 : i32
    return %arg0, %c0_i32, %c0_i32_0 : i32, i32, i32
  }
  func.func @transform_3(%arg0: i32) -> (i32, i32, i32, i32) {
    %c0_i32 = arith.constant 0 : i32
    %c0_i32_0 = arith.constant 0 : i32
    %c0_i32_1 = arith.constant 0 : i32
    %c0_i32_2 = arith.constant 0 : i32
    return %arg0, %c0_i32, %c0_i32_0, %c0_i32_1 : i32, i32, i32, i32
  }
}

</mosaic_0001>

<llo_original>
// kernel: tpu_custom_call.1
$region0: #{tpu_custom_call.1}
  #allocation0 [shape = 'u32[]', space=smem, size = 0x4, offset = 0x4, fixed_abs, tag = 'smem constant byte address 0x4 - core index']
  #allocation1 [shape = 'u32[144,128]{1,0:T(1,128)}', space=vmem, size = 0x12000, scoped, tag = 'internal scratch']
  #allocation2 [shape = 'f32[512,288]{1,0:T(8,128)}', space=vmem, size = 0xc0000, scoped, tag = 'scratch operand']
  %s0 = inlined_call_operand.vmem [shape: f32[4,2,18,18,32], index: 0, kind: input, shape index: {}]
  %s1 = inlined_call_operand.vmem [shape: f32[4,16,288], index: 1, kind: input, shape index: {}]
  %s2 = inlined_call_operand.vmem [shape: f32[4,16,1], index: 2, kind: input, shape index: {}]
  %s3 = inlined_call_operand.hbm [shape: f32[4,2,16,256], index: 3, kind: output, shape index: {}]
  %s4 = sld [smem:[#allocation0]]
  $region45: #{tpu_custom_call.1} parent=0
    _
  %s6 = ssub.s32 1, %s4
  %s7 = scalar_select 0, %s6, %s4
  $region1: #{tpu_custom_call.1} parent=0
    #allocation3 [shape = 'u8[65536]{0}', space=vmem, size = 0x10000, scoped, tag = 'output window, operand 0']
    #allocation4 [shape = 's32[2]{0}', space=sflag, size = 0x8, scoped, tag = 'scoped memory for tpu_custom_call.1']
    %8 = vsyncpa [#allocation4], 0
    %s9 = scalar_lea.sflag [#allocation4], 1
    %10 = vsyncpa %s9, 0
    loop: start=0, step=1, limit=6
    $region2: #{tpu_custom_call.1} parent=1 // loop_pre_header
      _
    $region3: #{tpu_custom_call.1} parent=1 // loop_header
      %s12 = sphi 0, %s16
      %p13 = scmp.ge.s32.totalorder %s12, 6
      %s22 = sphi 0, %s24
      %s25 = sphi 0, %s22
      %s26 = sphi 0, %s25
      %s42 = sphi 0, %s26
      %s48 = sphi 0, %s50
      %s51 = sphi 0, %s48
      %s52 = sphi 0, %s51
      %s68 = sphi 0, %s52
      %s74 = sphi 0, %s76
      %s77 = sphi 0, %s74
      %s78 = sphi 0, %s77
      %s94 = sphi 0, %s78
      %s100 = sphi 0, %s102
      %s103 = sphi 0, %s100
      %s104 = sphi 0, %s103
      %s120 = sphi 0, %s104
    $region4: #{tpu_custom_call.1} parent=1 // loop_header_branch
      %15 = sbr.rel (%p13) target = $region8
    $region5: #{tpu_custom_call.1} parent=1 // loop_body
      %s17 = ssub.s32 %s12, 1
      %s18 = ssub.s32 %s12, 2
      %s19 = sadd.s32 %s12, 1
      %s20 = ssub.s32 %s12, %s19
      %p21 = scmp.eq.s32.totalorder %s20, 0
      %s23 = sadd.s32 %s22, 1
      %s24 = scalar_select %p21, %s22, %s23
      %p27 = pneg %p21
      %p28 = scmp.eq.s32.totalorder %s12, 3
      %p29 = por %p27, %p28
      %p30 = scmp.ne.s32.totalorder %s22, %s25
      %p31 = scmp.eq.s32.totalorder %s12, 0
      %p32 = por %p30, %p31
      %p33 = scmp.ne.s32.totalorder %s22, %s25
      %p34 = scmp.eq.s32.totalorder %s17, 3
      %p35 = por %p33, %p34
      %p36 = scmp.ne.s32.totalorder %s25, %s26
      %p37 = scmp.eq.s32.totalorder %s17, 0
      %p38 = por %p36, %p37
      %p39 = scmp.ne.s32.totalorder %s25, %s26
      %p40 = scmp.eq.s32.totalorder %s18, 3
      %p41 = por %p39, %p40
      %p43 = scmp.ne.s32.totalorder %s26, %s42
      %p44 = scmp.eq.s32.totalorder %s18, 0
      %p45 = por %p43, %p44
      %s46 = ssub.s32 %s12, %s19
      %p47 = scmp.eq.s32.totalorder %s46, 0
      %s49 = sadd.s32 %s48, 1
      %s50 = scalar_select %p47, %s48, %s49
      %p53 = pneg %p47
      %p54 = scmp.eq.s32.totalorder %s12, 3
      %p55 = por %p53, %p54
      %p56 = scmp.ne.s32.totalorder %s48, %s51
      %p57 = scmp.eq.s32.totalorder %s12, 0
      %p58 = por %p56, %p57
      %p59 = scmp.ne.s32.totalorder %s48, %s51
      %p60 = scmp.eq.s32.totalorder %s17, 3
      %p61 = por %p59, %p60
      %p62 = scmp.ne.s32.totalorder %s51, %s52
      %p63 = scmp.eq.s32.totalorder %s17, 0
      %p64 = por %p62, %p63
      %p65 = scmp.ne.s32.totalorder %s51, %s52
      %p66 = scmp.eq.s32.totalorder %s18, 3
      %p67 = por %p65, %p66
      %p69 = scmp.ne.s32.totalorder %s52, %s68
      %p70 = scmp.eq.s32.totalorder %s18, 0
      %p71 = por %p69, %p70
      %s72 = ssub.s32 %s12, %s19
      %p73 = scmp.eq.s32.totalorder %s72, 0
      %s75 = sadd.s32 %s74, 1
      %s76 = scalar_select %p73, %s74, %s75
      %p79 = pneg %p73
      %p80 = scmp.eq.s32.totalorder %s12, 3
      %p81 = por %p79, %p80
      %p82 = scmp.ne.s32.totalorder %s74, %s77
      %p83 = scmp.eq.s32.totalorder %s12, 0
      %p84 = por %p82, %p83
      %p85 = scmp.ne.s32.totalorder %s74, %s77
      %p86 = scmp.eq.s32.totalorder %s17, 3
      %p87 = por %p85, %p86
      %p88 = scmp.ne.s32.totalorder %s77, %s78
      %p89 = scmp.eq.s32.totalorder %s17, 0
      %p90 = por %p88, %p89
      %p91 = scmp.ne.s32.totalorder %s77, %s78
      %p92 = scmp.eq.s32.totalorder %s18, 3
      %p93 = por %p91, %p92
      %p95 = scmp.ne.s32.totalorder %s78, %s94
      %p96 = scmp.eq.s32.totalorder %s18, 0
      %p97 = por %p95, %p96
      %s98 = ssub.s32 %s12, %s19
      %p99 = scmp.eq.s32.totalorder %s98, 0
      %s101 = sadd.s32 %s100, 1
      %s102 = scalar_select %p99, %s100, %s101
      %p105 = pneg %p99
      %p106 = scmp.eq.s32.totalorder %s12, 3
      %p107 = por %p105, %p106
      %p108 = scmp.ne.s32.totalorder %s100, %s103
      %p109 = scmp.eq.s32.totalorder %s12, 0
      %p110 = por %p108, %p109
      %p111 = scmp.ne.s32.totalorder %s100, %s103
      %p112 = scmp.eq.s32.totalorder %s17, 3
      %p113 = por %p111, %p112
      %p114 = scmp.ne.s32.totalorder %s103, %s104
      %p115 = scmp.eq.s32.totalorder %s17, 0
      %p116 = por %p114, %p115
      %p117 = scmp.ne.s32.totalorder %s103, %s104
      %p118 = scmp.eq.s32.totalorder %s18, 3
      %p119 = por %p117, %p118
      %p121 = scmp.ne.s32.totalorder %s104, %s120
      %p122 = scmp.eq.s32.totalorder %s18, 0
      %p123 = por %p121, %p122
      %p124 = scmp.le.s32.totalorder 1, %s12
      %p125 = scmp.lt.s32.totalorder %s12, 5
      %p126 = pnand %p124, %p125
      %p127 = pneg %p126
      // Predicated region
      $region9: #{tpu_custom_call.1} parent=5 // pred_check
        _
      $region10: #{tpu_custom_call.1} parent=5 // pred_check_branch
        %129 = sbr.rel (%p126) target = $region12
      $region11: #{tpu_custom_call.1} parent=5 // pred_region
        %s130 = ssub.s32 %s12, 1
      $region12: #{tpu_custom_call.1} parent=5 // pred_fallthru
        _
      %p131 = scmp.lt.s32.totalorder %s12, 4
      // Predicated region
      $region13: #{tpu_custom_call.1} parent=5 // pred_check
        %p132 = pneg %p131
      $region14: #{tpu_custom_call.1} parent=5 // pred_check_branch
        %134 = sbr.rel (%p132) target = $region16
      $region15: #{tpu_custom_call.1} parent=5 // pred_region
        // Predicated region
        $region17: #{tpu_custom_call.1} parent=15 // pred_check
          %p135 = pneg %p32
        $region18: #{tpu_custom_call.1} parent=15 // pred_check_branch
          %137 = sbr.rel (%p135) target = $region20
        $region19: #{tpu_custom_call.1} parent=15 // pred_region
          %p138 = scmp.lt.s32.totalorder %s12, 3
          %s139 = scalar_select %p138, %s12, 3
          %s140 = smul.addr %s139, 108
          %s141 = smul.addr %s140, 8
          %s142 = scalar_lea.vmem %s0, %s141
        $region20: #{tpu_custom_call.1} parent=15 // pred_fallthru
          _
        // Predicated region
        $region21: #{tpu_custom_call.1} parent=15 // pred_check
          %p143 = pneg %p58
        $region22: #{tpu_custom_call.1} parent=15 // pred_check_branch
          %145 = sbr.rel (%p143) target = $region24
        $region23: #{tpu_custom_call.1} parent=15 // pred_region
          %p146 = scmp.lt.s32.totalorder %s12, 3
          %s147 = scalar_select %p146, %s12, 3
          %s148 = smul.addr %s147, 6
          %s149 = smul.addr %s148, 8
          %s150 = scalar_lea.vmem %s1, %s149
        $region24: #{tpu_custom_call.1} parent=15 // pred_fallthru
          _
        // Predicated region
        $region25: #{tpu_custom_call.1} parent=15 // pred_check
          %p151 = pneg %p84
        $region26: #{tpu_custom_call.1} parent=15 // pred_check_branch
          %153 = sbr.rel (%p151) target = $region28
        $region27: #{tpu_custom_call.1} parent=15 // pred_region
          %p154 = scmp.lt.s32.totalorder %s12, 3
          %s155 = scalar_select %p154, %s12, 3
          %s156 = smul.addr %s155, 2
          %s157 = smul.addr %s156, 8
          %s158 = scalar_lea.vmem %s2, %s157
        $region28: #{tpu_custom_call.1} parent=15 // pred_fallthru
          _
      $region16: #{tpu_custom_call.1} parent=5 // pred_fallthru
        _
      %p159 = scmp.le.s32.totalorder 1, %s12
      %p160 = scmp.lt.s32.totalorder %s12, 5
      %p161 = pnand %p159, %p160
      %p162 = pneg %p161
      // Predicated region
      $region29: #{tpu_custom_call.1} parent=5 // pred_check
        _
      $region30: #{tpu_custom_call.1} parent=5 // pred_check_branch
        %164 = sbr.rel (%p161) target = $region32
      $region31: #{tpu_custom_call.1} parent=5 // pred_region
        %s165 = ssub.s32 %s12, 1
        %p166 = scmp.lt.s32.totalorder %s17, 3
        %s167 = scalar_select %p166, %s17, 3
        %s168 = smul.addr %s167, 108
        %s169 = smul.addr %s168, 8
        %s170 = scalar_lea.vmem %s0, %s169
        %p171 = pneg %p38
        %p172 = pneg %p35
        %p173 = scmp.lt.s32.totalorder %s17, 3
        %s174 = scalar_select %p173, %s17, 3
        %s175 = smul.addr %s174, 6
        %s176 = smul.addr %s175, 8
        %s177 = scalar_lea.vmem %s1, %s176
        %p178 = pneg %p64
        %p179 = pneg %p61
        %p180 = scmp.lt.s32.totalorder %s17, 3
        %s181 = scalar_select %p180, %s17, 3
        %s182 = smul.addr %s181, 2
        %s183 = smul.addr %s182, 8
        %s184 = scalar_lea.vmem %s2, %s183
        %p185 = pneg %p90
        %p186 = pneg %p87
        %p187 = pneg %p116
        %p188 = pneg %p113
        %s189 = sand.u32 %s103, 1
        %s190 = scalar_lea.sflag [#allocation4], %s189
        %s191 = sand.u32 %s103, 1
        %s192 = smul.addr %s191, 64
        %s193 = scalar_lea.vmem [#allocation3], %s192
        %p194 = scmp.lt.s32.totalorder %s17, 3
        %s195 = scalar_select %p194, %s17, 3
        %s196 = smul.addr %s195, 108
        %s197 = smul.addr %s196, 8
        %s198 = scalar_lea.vmem %s0, %s197
        %p199 = scmp.lt.s32.totalorder %s17, 3
        %s200 = scalar_select %p199, %s17, 3
        %s201 = smul.addr %s200, 6
        %s202 = smul.addr %s201, 8
        %s203 = scalar_lea.vmem %s1, %s202
        %p204 = scmp.lt.s32.totalorder %s17, 3
        %s205 = scalar_select %p204, %s17, 3
        %s206 = smul.addr %s205, 2
        %s207 = smul.addr %s206, 8
        %s208 = scalar_lea.vmem %s2, %s207
        %v209 = vld [vmem:[%s198] sm:$0xff]
        %v210 = vld [vmem:[%s198 + $0x8] sm:$0xff]
        %v211 = vld [vmem:[%s198 + $0x18] sm:$0xff]
        %v212 = vld [vmem:[%s198 + $0x20] sm:$0xff]
        %v213 = vld [vmem:[%s198 + $0x30] sm:$0xff]
        %v214 = vld [vmem:[%s198 + $0x38] sm:$0xff]
        %v215 = vld [vmem:[%s198 + $0x48] sm:$0xff]
        %v216 = vld [vmem:[%s198 + $0x50] sm:$0xff]
        %v217 = vld [vmem:[%s198 + $0x60] sm:$0xff]
        %v218 = vld [vmem:[%s198 + $0x68] sm:$0xff]
        %v219 = vld [vmem:[%s198 + $0x78] sm:$0xff]
        %v220 = vld [vmem:[%s198 + $0x80] sm:$0xff]
        %v221 = vld [vmem:[%s198 + $0x90] sm:$0xff]
        %v222 = vld [vmem:[%s198 + $0x98] sm:$0xff]
        %v223 = vld [vmem:[%s198 + $0xa8] sm:$0xff]
        %v224 = vld [vmem:[%s198 + $0xb0] sm:$0xff]
        %v225 = vld [vmem:[%s198 + $0xc0] sm:$0xff]
        %v226 = vld [vmem:[%s198 + $0xc8] sm:$0xff]
        %v227 = vld [vmem:[%s198 + $0xd8] sm:$0xff]
        %v228 = vld [vmem:[%s198 + $0xe0] sm:$0xff]
        %v229 = vld [vmem:[%s198 + $0xf0] sm:$0xff]
        %v230 = vld [vmem:[%s198 + $0xf8] sm:$0xff]
        %v231 = vld [vmem:[%s198 + $0x108] sm:$0xff]
        %v232 = vld [vmem:[%s198 + $0x110] sm:$0xff]
        %v233 = vld [vmem:[%s198 + $0x120] sm:$0xff]
        %v234 = vld [vmem:[%s198 + $0x128] sm:$0xff]
        %v235 = vld [vmem:[%s198 + $0x138] sm:$0xff]
        %v236 = vld [vmem:[%s198 + $0x140] sm:$0xff]
        %v237 = vld [vmem:[%s198 + $0x150] sm:$0xff]
        %v238 = vld [vmem:[%s198 + $0x158] sm:$0xff]
        %v239 = vld [vmem:[%s198 + $0x168] sm:$0xff]
        %v240 = vld [vmem:[%s198 + $0x170] sm:$0xff]
        %vm241 = vcmask 261120
        %242 = vst.msk [vmem:[#allocation2] sm:$0xff] %vm241, %v209
        %243 = vst.msk [vmem:[#allocation2 + $0x18] sm:$0xff] %vm241, %v210
        %244 = vst.msk [vmem:[#allocation2 + $0x30] sm:$0xff] %vm241, %v211
        %245 = vst.msk [vmem:[#allocation2 + $0x48] sm:$0xff] %vm241, %v212
        %246 = vst.msk [vmem:[#allocation2 + $0x60] sm:$0xff] %vm241, %v213
        %247 = vst.msk [vmem:[#allocation2 + $0x78] sm:$0xff] %vm241, %v214
        %248 = vst.msk [vmem:[#allocation2 + $0x90] sm:$0xff] %vm241, %v215
        %249 = vst.msk [vmem:[#allocation2 + $0xa8] sm:$0xff] %vm241, %v216
        %250 = vst.msk [vmem:[#allocation2 + $0xc0] sm:$0xff] %vm241, %v217
        %251 = vst.msk [vmem:[#allocation2 + $0xd8] sm:$0xff] %vm241, %v218
        %252 = vst.msk [vmem:[#allocation2 + $0xf0] sm:$0xff] %vm241, %v219
        %253 = vst.msk [vmem:[#allocation2 + $0x108] sm:$0xff] %vm241, %v220
        %254 = vst.msk [vmem:[#allocation2 + $0x120] sm:$0xff] %vm241, %v221
        %255 = vst.msk [vmem:[#allocation2 + $0x138] sm:$0xff] %vm241, %v222
        %256 = vst.msk [vmem:[#allocation2 + $0x150] sm:$0xff] %vm241, %v223
        %257 = vst.msk [vmem:[#allocation2 + $0x168] sm:$0xff] %vm241, %v224
        %258 = vst.msk [vmem:[#allocation2 + $0x180] sm:$0xff] %vm241, %v225
        %259 = vst.msk [vmem:[#allocation2 + $0x198] sm:$0xff] %vm241, %v226
        %260 = vst.msk [vmem:[#allocation2 + $0x1b0] sm:$0xff] %vm241, %v227
        %261 = vst.msk [vmem:[#allocation2 + $0x1c8] sm:$0xff] %vm241, %v228
        %262 = vst.msk [vmem:[#allocation2 + $0x1e0] sm:$0xff] %vm241, %v229
        %263 = vst.msk [vmem:[#allocation2 + $0x1f8] sm:$0xff] %vm241, %v230
        %264 = vst.msk [vmem:[#allocation2 + $0x210] sm:$0xff] %vm241, %v231
        %265 = vst.msk [vmem:[#allocation2 + $0x228] sm:$0xff] %vm241, %v232
        %266 = vst.msk [vmem:[#allocation2 + $0x240] sm:$0xff] %vm241, %v233
        %267 = vst.msk [vmem:[#allocation2 + $0x258] sm:$0xff] %vm241, %v234
        %268 = vst.msk [vmem:[#allocation2 + $0x270] sm:$0xff] %vm241, %v235
        %269 = vst.msk [vmem:[#allocation2 + $0x288] sm:$0xff] %vm241, %v236
        %270 = vst.msk [vmem:[#allocation2 + $0x2a0] sm:$0xff] %vm241, %v237
        %271 = vst.msk [vmem:[#allocation2 + $0x2b8] sm:$0xff] %vm241, %v238
        %272 = vst.msk [vmem:[#allocation2 + $0x2d0] sm:$0xff] %vm241, %v239
        %273 = vst.msk [vmem:[#allocation2 + $0x2e8] sm:$0xff] %vm241, %v240
        %v274 = vld [vmem:[%s198 + $0x1] sm:$0xff]
        %v275 = vld [vmem:[%s198 + $0x9] sm:$0xff]
        %v276 = vld [vmem:[%s198 + $0x19] sm:$0xff]
        %v277 = vld [vmem:[%s198 + $0x21] sm:$0xff]
        %v278 = vld [vmem:[%s198 + $0x31] sm:$0xff]
        %v279 = vld [vmem:[%s198 + $0x39] sm:$0xff]
        %v280 = vld [vmem:[%s198 + $0x49] sm:$0xff]
        %v281 = vld [vmem:[%s198 + $0x51] sm:$0xff]
        %v282 = vld [vmem:[%s198 + $0x61] sm:$0xff]
        %v283 = vld [vmem:[%s198 + $0x69] sm:$0xff]
        %v284 = vld [vmem:[%s198 + $0x79] sm:$0xff]
        %v285 = vld [vmem:[%s198 + $0x81] sm:$0xff]
        %v286 = vld [vmem:[%s198 + $0x91] sm:$0xff]
        %v287 = vld [vmem:[%s198 + $0x99] sm:$0xff]
        %v288 = vld [vmem:[%s198 + $0xa9] sm:$0xff]
        %v289 = vld [vmem:[%s198 + $0xb1] sm:$0xff]
        %v290 = vld [vmem:[%s198 + $0xc1] sm:$0xff]
        %v291 = vld [vmem:[%s198 + $0xc9] sm:$0xff]
        %v292 = vld [vmem:[%s198 + $0xd9] sm:$0xff]
        %v293 = vld [vmem:[%s198 + $0xe1] sm:$0xff]
        %v294 = vld [vmem:[%s198 + $0xf1] sm:$0xff]
        %v295 = vld [vmem:[%s198 + $0xf9] sm:$0xff]
        %v296 = vld [vmem:[%s198 + $0x109] sm:$0xff]
        %v297 = vld [vmem:[%s198 + $0x111] sm:$0xff]
        %v298 = vld [vmem:[%s198 + $0x121] sm:$0xff]
        %v299 = vld [vmem:[%s198 + $0x129] sm:$0xff]
        %v300 = vld [vmem:[%s198 + $0x139] sm:$0xff]
        %v301 = vld [vmem:[%s198 + $0x141] sm:$0xff]
        %v302 = vld [vmem:[%s198 + $0x151] sm:$0xff]
        %v303 = vld [vmem:[%s198 + $0x159] sm:$0xff]
        %v304 = vld [vmem:[%s198 + $0x169] sm:$0xff]
        %v305 = vld [vmem:[%s198 + $0x171] sm:$0xff]
        %338 = vrot.lane.b32.xlu0 %v274, 32
        %v339 = vpop.permute.xlu0 %338
        %340 = vrot.lane.b32.xlu0 %v275, 32
        %v341 = vpop.permute.xlu0 %340
        %342 = vrot.lane.b32.xlu0 %v276, 32
        %v343 = vpop.permute.xlu0 %342
        %344 = vrot.lane.b32.xlu0 %v277, 32
        %v345 = vpop.permute.xlu0 %344
        %346 = vrot.lane.b32.xlu0 %v278, 32
        %v347 = vpop.permute.xlu0 %346
        %348 = vrot.lane.b32.xlu0 %v279, 32
        %v349 = vpop.permute.xlu0 %348
        %350 = vrot.lane.b32.xlu0 %v280, 32
        %v351 = vpop.permute.xlu0 %350
        %352 = vrot.lane.b32.xlu0 %v281, 32
        %v353 = vpop.permute.xlu0 %352
        %354 = vrot.lane.b32.xlu0 %v282, 32
        %v355 = vpop.permute.xlu0 %354
        %356 = vrot.lane.b32.xlu0 %v283, 32
        %v357 = vpop.permute.xlu0 %356
        %358 = vrot.lane.b32.xlu0 %v284, 32
        %v359 = vpop.permute.xlu0 %358
        %360 = vrot.lane.b32.xlu0 %v285, 32
        %v361 = vpop.permute.xlu0 %360
        %362 = vrot.lane.b32.xlu0 %v286, 32
        %v363 = vpop.permute.xlu0 %362
        %364 = vrot.lane.b32.xlu0 %v287, 32
        %v365 = vpop.permute.xlu0 %364
        %366 = vrot.lane.b32.xlu0 %v288, 32
        %v367 = vpop.permute.xlu0 %366
        %368 = vrot.lane.b32.xlu0 %v289, 32
        %v369 = vpop.permute.xlu0 %368
        %370 = vrot.lane.b32.xlu0 %v290, 32
        %v371 = vpop.permute.xlu0 %370
        %372 = vrot.lane.b32.xlu0 %v291, 32
        %v373 = vpop.permute.xlu0 %372
        %374 = vrot.lane.b32.xlu0 %v292, 32
        %v375 = vpop.permute.xlu0 %374
        %376 = vrot.lane.b32.xlu0 %v293, 32
        %v377 = vpop.permute.xlu0 %376
        %378 = vrot.lane.b32.xlu0 %v294, 32
        %v379 = vpop.permute.xlu0 %378
        %380 = vrot.lane.b32.xlu0 %v295, 32
        %v381 = vpop.permute.xlu0 %380
        %382 = vrot.lane.b32.xlu0 %v296, 32
        %v383 = vpop.permute.xlu0 %382
        %384 = vrot.lane.b32.xlu0 %v297, 32
        %v385 = vpop.permute.xlu0 %384
        %386 = vrot.lane.b32.xlu0 %v298, 32
        %v387 = vpop.permute.xlu0 %386
        %388 = vrot.lane.b32.xlu0 %v299, 32
        %v389 = vpop.permute.xlu0 %388
        %390 = vrot.lane.b32.xlu0 %v300, 32
        %v391 = vpop.permute.xlu0 %390
        %392 = vrot.lane.b32.xlu0 %v301, 32
        %v393 = vpop.permute.xlu0 %392
        %394 = vrot.lane.b32.xlu0 %v302, 32
        %v395 = vpop.permute.xlu0 %394
        %396 = vrot.lane.b32.xlu0 %v303, 32
        %v397 = vpop.permute.xlu0 %396
        %398 = vrot.lane.b32.xlu0 %v304, 32
        %v399 = vpop.permute.xlu0 %398
        %400 = vrot.lane.b32.xlu0 %v305, 32
        %v401 = vpop.permute.xlu0 %400
        %vm434 = vcmask 523520
        %435 = vst.msk [vmem:[#allocation2] sm:$0xff] %vm434, %v339
        %436 = vst.msk [vmem:[#allocation2 + $0x18] sm:$0xff] %vm434, %v341
        %437 = vst.msk [vmem:[#allocation2 + $0x30] sm:$0xff] %vm434, %v343
        %438 = vst.msk [vmem:[#allocation2 + $0x48] sm:$0xff] %vm434, %v345
        %439 = vst.msk [vmem:[#allocation2 + $0x60] sm:$0xff] %vm434, %v347
        %440 = vst.msk [vmem:[#allocation2 + $0x78] sm:$0xff] %vm434, %v349
        %441 = vst.msk [vmem:[#allocation2 + $0x90] sm:$0xff] %vm434, %v351
        %442 = vst.msk [vmem:[#allocation2 + $0xa8] sm:$0xff] %vm434, %v353
        %443 = vst.msk [vmem:[#allocation2 + $0xc0] sm:$0xff] %vm434, %v355
        %444 = vst.msk [vmem:[#allocation2 + $0xd8] sm:$0xff] %vm434, %v357
        %445 = vst.msk [vmem:[#allocation2 + $0xf0] sm:$0xff] %vm434, %v359
        %446 = vst.msk [vmem:[#allocation2 + $0x108] sm:$0xff] %vm434, %v361
        %447 = vst.msk [vmem:[#allocation2 + $0x120] sm:$0xff] %vm434, %v363
        %448 = vst.msk [vmem:[#allocation2 + $0x138] sm:$0xff] %vm434, %v365
        %449 = vst.msk [vmem:[#allocation2 + $0x150] sm:$0xff] %vm434, %v367
        %450 = vst.msk [vmem:[#allocation2 + $0x168] sm:$0xff] %vm434, %v369
        %451 = vst.msk [vmem:[#allocation2 + $0x180] sm:$0xff] %vm434, %v371
        %452 = vst.msk [vmem:[#allocation2 + $0x198] sm:$0xff] %vm434, %v373
        %453 = vst.msk [vmem:[#allocation2 + $0x1b0] sm:$0xff] %vm434, %v375
        %454 = vst.msk [vmem:[#allocation2 + $0x1c8] sm:$0xff] %vm434, %v377
        %455 = vst.msk [vmem:[#allocation2 + $0x1e0] sm:$0xff] %vm434, %v379
        %456 = vst.msk [vmem:[#allocation2 + $0x1f8] sm:$0xff] %vm434, %v381
        %457 = vst.msk [vmem:[#allocation2 + $0x210] sm:$0xff] %vm434, %v383
        %458 = vst.msk [vmem:[#allocation2 + $0x228] sm:$0xff] %vm434, %v385
        %459 = vst.msk [vmem:[#allocation2 + $0x240] sm:$0xff] %vm434, %v387
        %460 = vst.msk [vmem:[#allocation2 + $0x258] sm:$0xff] %vm434, %v389
        %461 = vst.msk [vmem:[#allocation2 + $0x270] sm:$0xff] %vm434, %v391
        %462 = vst.msk [vmem:[#allocation2 + $0x288] sm:$0xff] %vm434, %v393
        %463 = vst.msk [vmem:[#allocation2 + $0x2a0] sm:$0xff] %vm434, %v395
        %464 = vst.msk [vmem:[#allocation2 + $0x2b8] sm:$0xff] %vm434, %v397
        %465 = vst.msk [vmem:[#allocation2 + $0x2d0] sm:$0xff] %vm434, %v399
        %466 = vst.msk [vmem:[#allocation2 + $0x2e8] sm:$0xff] %vm434, %v401
        %v467 = vld [vmem:[%s198 + $0x2] sm:$0xff]
        %v468 = vld [vmem:[%s198 + $0xa] sm:$0xff]
        %v469 = vld [vmem:[%s198 + $0x1a] sm:$0xff]
        %v470 = vld [vmem:[%s198 + $0x22] sm:$0xff]
        %v471 = vld [vmem:[%s198 + $0x32] sm:$0xff]
        %v472 = vld [vmem:[%s198 + $0x3a] sm:$0xff]
        %v473 = vld [vmem:[%s198 + $0x4a] sm:$0xff]
        %v474 = vld [vmem:[%s198 + $0x52] sm:$0xff]
        %v475 = vld [vmem:[%s198 + $0x62] sm:$0xff]
        %v476 = vld [vmem:[%s198 + $0x6a] sm:$0xff]
        %v477 = vld [vmem:[%s198 + $0x7a] sm:$0xff]
        %v478 = vld [vmem:[%s198 + $0x82] sm:$0xff]
        %v479 = vld [vmem:[%s198 + $0x92] sm:$0xff]
        %v480 = vld [vmem:[%s198 + $0x9a] sm:$0xff]
        %v481 = vld [vmem:[%s198 + $0xaa] sm:$0xff]
        %v482 = vld [vmem:[%s198 + $0xb2] sm:$0xff]
        %v483 = vld [vmem:[%s198 + $0xc2] sm:$0xff]
        %v484 = vld [vmem:[%s198 + $0xca] sm:$0xff]
        %v485 = vld [vmem:[%s198 + $0xda] sm:$0xff]
        %v486 = vld [vmem:[%s198 + $0xe2] sm:$0xff]
        %v487 = vld [vmem:[%s198 + $0xf2] sm:$0xff]
        %v488 = vld [vmem:[%s198 + $0xfa] sm:$0xff]
        %v489 = vld [vmem:[%s198 + $0x10a] sm:$0xff]
        %v490 = vld [vmem:[%s198 + $0x112] sm:$0xff]
        %v491 = vld [vmem:[%s198 + $0x122] sm:$0xff]
        %v492 = vld [vmem:[%s198 + $0x12a] sm:$0xff]
        %v493 = vld [vmem:[%s198 + $0x13a] sm:$0xff]
        %v494 = vld [vmem:[%s198 + $0x142] sm:$0xff]
        %v495 = vld [vmem:[%s198 + $0x152] sm:$0xff]
        %v496 = vld [vmem:[%s198 + $0x15a] sm:$0xff]
        %v497 = vld [vmem:[%s198 + $0x16a] sm:$0xff]
        %v498 = vld [vmem:[%s198 + $0x172] sm:$0xff]
        %531 = vrot.lane.b32.xlu0 %v467, 64
        %v532 = vpop.permute.xlu0 %531
        %533 = vrot.lane.b32.xlu0 %v468, 64
        %v534 = vpop.permute.xlu0 %533
        %535 = vrot.lane.b32.xlu0 %v469, 64
        %v536 = vpop.permute.xlu0 %535
        %537 = vrot.lane.b32.xlu0 %v470, 64
        %v538 = vpop.permute.xlu0 %537
        %539 = vrot.lane.b32.xlu0 %v471, 64
        %v540 = vpop.permute.xlu0 %539
        %541 = vrot.lane.b32.xlu0 %v472, 64
        %v542 = vpop.permute.xlu0 %541
        %543 = vrot.lane.b32.xlu0 %v473, 64
        %v544 = vpop.permute.xlu0 %543
        %545 = vrot.lane.b32.xlu0 %v474, 64
        %v546 = vpop.permute.xlu0 %545
        %547 = vrot.lane.b32.xlu0 %v475, 64
        %v548 = vpop.permute.xlu0 %547
        %549 = vrot.lane.b32.xlu0 %v476, 64
        %v550 = vpop.permute.xlu0 %549
        %551 = vrot.lane.b32.xlu0 %v477, 64
        %v552 = vpop.permute.xlu0 %551
        %553 = vrot.lane.b32.xlu0 %v478, 64
        %v554 = vpop.permute.xlu0 %553
        %555 = vrot.lane.b32.xlu0 %v479, 64
        %v556 = vpop.permute.xlu0 %555
        %557 = vrot.lane.b32.xlu0 %v480, 64
        %v558 = vpop.permute.xlu0 %557
        %559 = vrot.lane.b32.xlu0 %v481, 64
        %v560 = vpop.permute.xlu0 %559
        %561 = vrot.lane.b32.xlu0 %v482, 64
        %v562 = vpop.permute.xlu0 %561
        %563 = vrot.lane.b32.xlu0 %v483, 64
        %v564 = vpop.permute.xlu0 %563
        %565 = vrot.lane.b32.xlu0 %v484, 64
        %v566 = vpop.permute.xlu0 %565
        %567 = vrot.lane.b32.xlu0 %v485, 64
        %v568 = vpop.permute.xlu0 %567
        %569 = vrot.lane.b32.xlu0 %v486, 64
        %v570 = vpop.permute.xlu0 %569
        %571 = vrot.lane.b32.xlu0 %v487, 64
        %v572 = vpop.permute.xlu0 %571
        %573 = vrot.lane.b32.xlu0 %v488, 64
        %v574 = vpop.permute.xlu0 %573
        %575 = vrot.lane.b32.xlu0 %v489, 64
        %v576 = vpop.permute.xlu0 %575
        %577 = vrot.lane.b32.xlu0 %v490, 64
        %v578 = vpop.permute.xlu0 %577
        %579 = vrot.lane.b32.xlu0 %v491, 64
        %v580 = vpop.permute.xlu0 %579
        %581 = vrot.lane.b32.xlu0 %v492, 64
        %v582 = vpop.permute.xlu0 %581
        %583 = vrot.lane.b32.xlu0 %v493, 64
        %v584 = vpop.permute.xlu0 %583
        %585 = vrot.lane.b32.xlu0 %v494, 64
        %v586 = vpop.permute.xlu0 %585
        %587 = vrot.lane.b32.xlu0 %v495, 64
        %v588 = vpop.permute.xlu0 %587
        %589 = vrot.lane.b32.xlu0 %v496, 64
        %v590 = vpop.permute.xlu0 %589
        %591 = vrot.lane.b32.xlu0 %v497, 64
        %v592 = vpop.permute.xlu0 %591
        %593 = vrot.lane.b32.xlu0 %v498, 64
        %v594 = vpop.permute.xlu0 %593
        %vm627 = vcmask 785920
        %628 = vst.msk [vmem:[#allocation2] sm:$0xff] %vm627, %v532
        %629 = vst.msk [vmem:[#allocation2 + $0x18] sm:$0xff] %vm627, %v534
        %630 = vst.msk [vmem:[#allocation2 + $0x30] sm:$0xff] %vm627, %v536
        %631 = vst.msk [vmem:[#allocation2 + $0x48] sm:$0xff] %vm627, %v538
        %632 = vst.msk [vmem:[#allocation2 + $0x60] sm:$0xff] %vm627, %v540
        %633 = vst.msk [vmem:[#allocation2 + $0x78] sm:$0xff] %vm627, %v542
        %634 = vst.msk [vmem:[#allocation2 + $0x90] sm:$0xff] %vm627, %v544
        %635 = vst.msk [vmem:[#allocation2 + $0xa8] sm:$0xff] %vm627, %v546
        %636 = vst.msk [vmem:[#allocation2 + $0xc0] sm:$0xff] %vm627, %v548
        %637 = vst.msk [vmem:[#allocation2 + $0xd8] sm:$0xff] %vm627, %v550
        %638 = vst.msk [vmem:[#allocation2 + $0xf0] sm:$0xff] %vm627, %v552
        %639 = vst.msk [vmem:[#allocation2 + $0x108] sm:$0xff] %vm627, %v554
        %640 = vst.msk [vmem:[#allocation2 + $0x120] sm:$0xff] %vm627, %v556
        %641 = vst.msk [vmem:[#allocation2 + $0x138] sm:$0xff] %vm627, %v558
        %642 = vst.msk [vmem:[#allocation2 + $0x150] sm:$0xff] %vm627, %v560
        %643 = vst.msk [vmem:[#allocation2 + $0x168] sm:$0xff] %vm627, %v562
        %644 = vst.msk [vmem:[#allocation2 + $0x180] sm:$0xff] %vm627, %v564
        %645 = vst.msk [vmem:[#allocation2 + $0x198] sm:$0xff] %vm627, %v566
        %646 = vst.msk [vmem:[#allocation2 + $0x1b0] sm:$0xff] %vm627, %v568
        %647 = vst.msk [vmem:[#allocation2 + $0x1c8] sm:$0xff] %vm627, %v570
        %648 = vst.msk [vmem:[#allocation2 + $0x1e0] sm:$0xff] %vm627, %v572
        %649 = vst.msk [vmem:[#allocation2 + $0x1f8] sm:$0xff] %vm627, %v574
        %650 = vst.msk [vmem:[#allocation2 + $0x210] sm:$0xff] %vm627, %v576
        %651 = vst.msk [vmem:[#allocation2 + $0x228] sm:$0xff] %vm627, %v578
        %652 = vst.msk [vmem:[#allocation2 + $0x240] sm:$0xff] %vm627, %v580
        %653 = vst.msk [vmem:[#allocation2 + $0x258] sm:$0xff] %vm627, %v582
        %654 = vst.msk [vmem:[#allocation2 + $0x270] sm:$0xff] %vm627, %v584
        %655 = vst.msk [vmem:[#allocation2 + $0x288] sm:$0xff] %vm627, %v586
        %656 = vst.msk [vmem:[#allocation2 + $0x2a0] sm:$0xff] %vm627, %v588
        %657 = vst.msk [vmem:[#allocation2 + $0x2b8] sm:$0xff] %vm627, %v590
        %658 = vst.msk [vmem:[#allocation2 + $0x2d0] sm:$0xff] %vm627, %v592
        %659 = vst.msk [vmem:[#allocation2 + $0x2e8] sm:$0xff] %vm627, %v594
        %s660 = scalar_lea.vmem %s198, 24
        %v661 = vld [vmem:[%s660] sm:$0xff]
        %v662 = vld [vmem:[%s660 + $0x8] sm:$0xff]
        %v663 = vld [vmem:[%s660 + $0x18] sm:$0xff]
        %v664 = vld [vmem:[%s660 + $0x20] sm:$0xff]
        %v665 = vld [vmem:[%s660 + $0x30] sm:$0xff]
        %v666 = vld [vmem:[%s660 + $0x38] sm:$0xff]
        %v667 = vld [vmem:[%s660 + $0x48] sm:$0xff]
        %v668 = vld [vmem:[%s660 + $0x50] sm:$0xff]
        %v669 = vld [vmem:[%s660 + $0x60] sm:$0xff]
        %v670 = vld [vmem:[%s660 + $0x68] sm:$0xff]
        %v671 = vld [vmem:[%s660 + $0x78] sm:$0xff]
        %v672 = vld [vmem:[%s660 + $0x80] sm:$0xff]
        %v673 = vld [vmem:[%s660 + $0x90] sm:$0xff]
        %v674 = vld [vmem:[%s660 + $0x98] sm:$0xff]
        %v675 = vld [vmem:[%s660 + $0xa8] sm:$0xff]
        %v676 = vld [vmem:[%s660 + $0xb0] sm:$0xff]
        %v677 = vld [vmem:[%s660 + $0xc0] sm:$0xff]
        %v678 = vld [vmem:[%s660 + $0xc8] sm:$0xff]
        %v679 = vld [vmem:[%s660 + $0xd8] sm:$0xff]
        %v680 = vld [vmem:[%s660 + $0xe0] sm:$0xff]
        %v681 = vld [vmem:[%s660 + $0xf0] sm:$0xff]
        %v682 = vld [vmem:[%s660 + $0xf8] sm:$0xff]
        %v683 = vld [vmem:[%s660 + $0x108] sm:$0xff]
        %v684 = vld [vmem:[%s660 + $0x110] sm:$0xff]
        %v685 = vld [vmem:[%s660 + $0x120] sm:$0xff]
        %v686 = vld [vmem:[%s660 + $0x128] sm:$0xff]
        %v687 = vld [vmem:[%s660 + $0x138] sm:$0xff]
        %v688 = vld [vmem:[%s660 + $0x140] sm:$0xff]
        %v689 = vld [vmem:[%s660 + $0x150] sm:$0xff]
        %v690 = vld [vmem:[%s660 + $0x158] sm:$0xff]
        %v691 = vld [vmem:[%s660 + $0x168] sm:$0xff]
        %v692 = vld [vmem:[%s660 + $0x170] sm:$0xff]
        %725 = vrot.lane.b32.xlu0 %v661, 96
        %v726 = vpop.permute.xlu0 %725
        %727 = vrot.lane.b32.xlu0 %v662, 96
        %v728 = vpop.permute.xlu0 %727
        %729 = vrot.lane.b32.xlu0 %v663, 96
        %v730 = vpop.permute.xlu0 %729
        %731 = vrot.lane.b32.xlu0 %v664, 96
        %v732 = vpop.permute.xlu0 %731
        %733 = vrot.lane.b32.xlu0 %v665, 96
        %v734 = vpop.permute.xlu0 %733
        %735 = vrot.lane.b32.xlu0 %v666, 96
        %v736 = vpop.permute.xlu0 %735
        %737 = vrot.lane.b32.xlu0 %v667, 96
        %v738 = vpop.permute.xlu0 %737
        %739 = vrot.lane.b32.xlu0 %v668, 96
        %v740 = vpop.permute.xlu0 %739
        %741 = vrot.lane.b32.xlu0 %v669, 96
        %v742 = vpop.permute.xlu0 %741
        %743 = vrot.lane.b32.xlu0 %v670, 96
        %v744 = vpop.permute.xlu0 %743
        %745 = vrot.lane.b32.xlu0 %v671, 96
        %v746 = vpop.permute.xlu0 %745
        %747 = vrot.lane.b32.xlu0 %v672, 96
        %v748 = vpop.permute.xlu0 %747
        %749 = vrot.lane.b32.xlu0 %v673, 96
        %v750 = vpop.permute.xlu0 %749
        %751 = vrot.lane.b32.xlu0 %v674, 96
        %v752 = vpop.permute.xlu0 %751
        %753 = vrot.lane.b32.xlu0 %v675, 96
        %v754 = vpop.permute.xlu0 %753
        %755 = vrot.lane.b32.xlu0 %v676, 96
        %v756 = vpop.permute.xlu0 %755
        %757 = vrot.lane.b32.xlu0 %v677, 96
        %v758 = vpop.permute.xlu0 %757
        %759 = vrot.lane.b32.xlu0 %v678, 96
        %v760 = vpop.permute.xlu0 %759
        %761 = vrot.lane.b32.xlu0 %v679, 96
        %v762 = vpop.permute.xlu0 %761
        %763 = vrot.lane.b32.xlu0 %v680, 96
        %v764 = vpop.permute.xlu0 %763
        %765 = vrot.lane.b32.xlu0 %v681, 96
        %v766 = vpop.permute.xlu0 %765
        %767 = vrot.lane.b32.xlu0 %v682, 96
        %v768 = vpop.permute.xlu0 %767
        %769 = vrot.lane.b32.xlu0 %v683, 96
        %v770 = vpop.permute.xlu0 %769
        %771 = vrot.lane.b32.xlu0 %v684, 96
        %v772 = vpop.permute.xlu0 %771
        %773 = vrot.lane.b32.xlu0 %v685, 96
        %v774 = vpop.permute.xlu0 %773
        %775 = vrot.lane.b32.xlu0 %v686, 96
        %v776 = vpop.permute.xlu0 %775
        %777 = vrot.lane.b32.xlu0 %v687, 96
        %v778 = vpop.permute.xlu0 %777
        %779 = vrot.lane.b32.xlu0 %v688, 96
        %v780 = vpop.permute.xlu0 %779
        %781 = vrot.lane.b32.xlu0 %v689, 96
        %v782 = vpop.permute.xlu0 %781
        %783 = vrot.lane.b32.xlu0 %v690, 96
        %v784 = vpop.permute.xlu0 %783
        %785 = vrot.lane.b32.xlu0 %v691, 96
        %v786 = vpop.permute.xlu0 %785
        %787 = vrot.lane.b32.xlu0 %v692, 96
        %v788 = vpop.permute.xlu0 %787
        %vm821 = vcmask 1048320
        %822 = vst.msk [vmem:[#allocation2] sm:$0xff] %vm821, %v726
        %823 = vst.msk [vmem:[#allocation2 + $0x18] sm:$0xff] %vm821, %v728
        %824 = vst.msk [vmem:[#allocation2 + $0x30] sm:$0xff] %vm821, %v730
        %825 = vst.msk [vmem:[#allocation2 + $0x48] sm:$0xff] %vm821, %v732
        %826 = vst.msk [vmem:[#allocation2 + $0x60] sm:$0xff] %vm821, %v734
        %827 = vst.msk [vmem:[#allocation2 + $0x78] sm:$0xff] %vm821, %v736
        %828 = vst.msk [vmem:[#allocation2 + $0x90] sm:$0xff] %vm821, %v738
        %829 = vst.msk [vmem:[#allocation2 + $0xa8] sm:$0xff] %vm821, %v740
        %830 = vst.msk [vmem:[#allocation2 + $0xc0] sm:$0xff] %vm821, %v742
        %831 = vst.msk [vmem:[#allocation2 + $0xd8] sm:$0xff] %vm821, %v744
        %832 = vst.msk [vmem:[#allocation2 + $0xf0] sm:$0xff] %vm821, %v746
        %833 = vst.msk [vmem:[#allocation2 + $0x108] sm:$0xff] %vm821, %v748
        %834 = vst.msk [vmem:[#allocation2 + $0x120] sm:$0xff] %vm821, %v750
        %835 = vst.msk [vmem:[#allocation2 + $0x138] sm:$0xff] %vm821, %v752
        %836 = vst.msk [vmem:[#allocation2 + $0x150] sm:$0xff] %vm821, %v754
        %837 = vst.msk [vmem:[#allocation2 + $0x168] sm:$0xff] %vm821, %v756
        %838 = vst.msk [vmem:[#allocation2 + $0x180] sm:$0xff] %vm821, %v758
        %839 = vst.msk [vmem:[#allocation2 + $0x198] sm:$0xff] %vm821, %v760
        %840 = vst.msk [vmem:[#allocation2 + $0x1b0] sm:$0xff] %vm821, %v762
        %841 = vst.msk [vmem:[#allocation2 + $0x1c8] sm:$0xff] %vm821, %v764
        %842 = vst.msk [vmem:[#allocation2 + $0x1e0] sm:$0xff] %vm821, %v766
        %843 = vst.msk [vmem:[#allocation2 + $0x1f8] sm:$0xff] %vm821, %v768
        %844 = vst.msk [vmem:[#allocation2 + $0x210] sm:$0xff] %vm821, %v770
        %845 = vst.msk [vmem:[#allocation2 + $0x228] sm:$0xff] %vm821, %v772
        %846 = vst.msk [vmem:[#allocation2 + $0x240] sm:$0xff] %vm821, %v774
        %847 = vst.msk [vmem:[#allocation2 + $0x258] sm:$0xff] %vm821, %v776
        %848 = vst.msk [vmem:[#allocation2 + $0x270] sm:$0xff] %vm821, %v778
        %849 = vst.msk [vmem:[#allocation2 + $0x288] sm:$0xff] %vm821, %v780
        %850 = vst.msk [vmem:[#allocation2 + $0x2a0] sm:$0xff] %vm821, %v782
        %851 = vst.msk [vmem:[#allocation2 + $0x2b8] sm:$0xff] %vm821, %v784
        %852 = vst.msk [vmem:[#allocation2 + $0x2d0] sm:$0xff] %vm821, %v786
        %853 = vst.msk [vmem:[#allocation2 + $0x2e8] sm:$0xff] %vm821, %v788
        %v854 = vld [vmem:[%s660 + $0x1] sm:$0xff]
        %v855 = vld [vmem:[%s660 + $0x9] sm:$0xff]
        %v856 = vld [vmem:[%s660 + $0x19] sm:$0xff]
        %v857 = vld [vmem:[%s660 + $0x21] sm:$0xff]
        %v858 = vld [vmem:[%s660 + $0x31] sm:$0xff]
        %v859 = vld [vmem:[%s660 + $0x39] sm:$0xff]
        %v860 = vld [vmem:[%s660 + $0x49] sm:$0xff]
        %v861 = vld [vmem:[%s660 + $0x51] sm:$0xff]
        %v862 = vld [vmem:[%s660 + $0x61] sm:$0xff]
        %v863 = vld [vmem:[%s660 + $0x69] sm:$0xff]
        %v864 = vld [vmem:[%s660 + $0x79] sm:$0xff]
        %v865 = vld [vmem:[%s660 + $0x81] sm:$0xff]
        %v866 = vld [vmem:[%s660 + $0x91] sm:$0xff]
        %v867 = vld [vmem:[%s660 + $0x99] sm:$0xff]
        %v868 = vld [vmem:[%s660 + $0xa9] sm:$0xff]
        %v869 = vld [vmem:[%s660 + $0xb1] sm:$0xff]
        %v870 = vld [vmem:[%s660 + $0xc1] sm:$0xff]
        %v871 = vld [vmem:[%s660 + $0xc9] sm:$0xff]
        %v872 = vld [vmem:[%s660 + $0xd9] sm:$0xff]
        %v873 = vld [vmem:[%s660 + $0xe1] sm:$0xff]
        %v874 = vld [vmem:[%s660 + $0xf1] sm:$0xff]
        %v875 = vld [vmem:[%s660 + $0xf9] sm:$0xff]
        %v876 = vld [vmem:[%s660 + $0x109] sm:$0xff]
        %v877 = vld [vmem:[%s660 + $0x111] sm:$0xff]
        %v878 = vld [vmem:[%s660 + $0x121] sm:$0xff]
        %v879 = vld [vmem:[%s660 + $0x129] sm:$0xff]
        %v880 = vld [vmem:[%s660 + $0x139] sm:$0xff]
        %v881 = vld [vmem:[%s660 + $0x141] sm:$0xff]
        %v882 = vld [vmem:[%s660 + $0x151] sm:$0xff]
        %v883 = vld [vmem:[%s660 + $0x159] sm:$0xff]
        %v884 = vld [vmem:[%s660 + $0x169] sm:$0xff]
        %v885 = vld [vmem:[%s660 + $0x171] sm:$0xff]
        %886 = vst.msk [vmem:[#allocation2 + $0x8] sm:$0xff] %vm241, %v854
        %887 = vst.msk [vmem:[#allocation2 + $0x20] sm:$0xff] %vm241, %v855
        %888 = vst.msk [vmem:[#allocation2 + $0x38] sm:$0xff] %vm241, %v856
        %889 = vst.msk [vmem:[#allocation2 + $0x50] sm:$0xff] %vm241, %v857
        %890 = vst.msk [vmem:[#allocation2 + $0x68] sm:$0xff] %vm241, %v858
        %891 = vst.msk [vmem:[#allocation2 + $0x80] sm:$0xff] %vm241, %v859
        %892 = vst.msk [vmem:[#allocation2 + $0x98] sm:$0xff] %vm241, %v860
        %893 = vst.msk [vmem:[#allocation2 + $0xb0] sm:$0xff] %vm241, %v861
        %894 = vst.msk [vmem:[#allocation2 + $0xc8] sm:$0xff] %vm241, %v862
        %895 = vst.msk [vmem:[#allocation2 + $0xe0] sm:$0xff] %vm241, %v863
        %896 = vst.msk [vmem:[#allocation2 + $0xf8] sm:$0xff] %vm241, %v864
        %897 = vst.msk [vmem:[#allocation2 + $0x110] sm:$0xff] %vm241, %v865
        %898 = vst.msk [vmem:[#allocation2 + $0x128] sm:$0xff] %vm241, %v866
        %899 = vst.msk [vmem:[#allocation2 + $0x140] sm:$0xff] %vm241, %v867
        %900 = vst.msk [vmem:[#allocation2 + $0x158] sm:$0xff] %vm241, %v868
        %901 = vst.msk [vmem:[#allocation2 + $0x170] sm:$0xff] %vm241, %v869
        %902 = vst.msk [vmem:[#allocation2 + $0x188] sm:$0xff] %vm241, %v870
        %903 = vst.msk [vmem:[#allocation2 + $0x1a0] sm:$0xff] %vm241, %v871
        %904 = vst.msk [vmem:[#allocation2 + $0x1b8] sm:$0xff] %vm241, %v872
        %905 = vst.msk [vmem:[#allocation2 + $0x1d0] sm:$0xff] %vm241, %v873
        %906 = vst.msk [vmem:[#allocation2 + $0x1e8] sm:$0xff] %vm241, %v874
        %907 = vst.msk [vmem:[#allocation2 + $0x200] sm:$0xff] %vm241, %v875
        %908 = vst.msk [vmem:[#allocation2 + $0x218] sm:$0xff] %vm241, %v876
        %909 = vst.msk [vmem:[#allocation2 + $0x230] sm:$0xff] %vm241, %v877
        %910 = vst.msk [vmem:[#allocation2 + $0x248] sm:$0xff] %vm241, %v878
        %911 = vst.msk [vmem:[#allocation2 + $0x260] sm:$0xff] %vm241, %v879
        %912 = vst.msk [vmem:[#allocation2 + $0x278] sm:$0xff] %vm241, %v880
        %913 = vst.msk [vmem:[#allocation2 + $0x290] sm:$0xff] %vm241, %v881
        %914 = vst.msk [vmem:[#allocation2 + $0x2a8] sm:$0xff] %vm241, %v882
        %915 = vst.msk [vmem:[#allocation2 + $0x2c0] sm:$0xff] %vm241, %v883
        %916 = vst.msk [vmem:[#allocation2 + $0x2d8] sm:$0xff] %vm241, %v884
        %917 = vst.msk [vmem:[#allocation2 + $0x2f0] sm:$0xff] %vm241, %v885
        %v918 = vld [vmem:[%s660 + $0x2] sm:$0xff]
        %v919 = vld [vmem:[%s660 + $0xa] sm:$0xff]
        %v920 = vld [vmem:[%s660 + $0x1a] sm:$0xff]
        %v921 = vld [vmem:[%s660 + $0x22] sm:$0xff]
        %v922 = vld [vmem:[%s660 + $0x32] sm:$0xff]
        %v923 = vld [vmem:[%s660 + $0x3a] sm:$0xff]
        %v924 = vld [vmem:[%s660 + $0x4a] sm:$0xff]
        %v925 = vld [vmem:[%s660 + $0x52] sm:$0xff]
        %v926 = vld [vmem:[%s660 + $0x62] sm:$0xff]
        %v927 = vld [vmem:[%s660 + $0x6a] sm:$0xff]
        %v928 = vld [vmem:[%s660 + $0x7a] sm:$0xff]
        %v929 = vld [vmem:[%s660 + $0x82] sm:$0xff]
        %v930 = vld [vmem:[%s660 + $0x92] sm:$0xff]
        %v931 = vld [vmem:[%s660 + $0x9a] sm:$0xff]
        %v932 = vld [vmem:[%s660 + $0xaa] sm:$0xff]
        %v933 = vld [vmem:[%s660 + $0xb2] sm:$0xff]
        %v934 = vld [vmem:[%s660 + $0xc2] sm:$0xff]
        %v935 = vld [vmem:[%s660 + $0xca] sm:$0xff]
        %v936 = vld [vmem:[%s660 + $0xda] sm:$0xff]
        %v937 = vld [vmem:[%s660 + $0xe2] sm:$0xff]
        %v938 = vld [vmem:[%s660 + $0xf2] sm:$0xff]
        %v939 = vld [vmem:[%s660 + $0xfa] sm:$0xff]
        %v940 = vld [vmem:[%s660 + $0x10a] sm:$0xff]
        %v941 = vld [vmem:[%s660 + $0x112] sm:$0xff]
        %v942 = vld [vmem:[%s660 + $0x122] sm:$0xff]
        %v943 = vld [vmem:[%s660 + $0x12a] sm:$0xff]
        %v944 = vld [vmem:[%s660 + $0x13a] sm:$0xff]
        %v945 = vld [vmem:[%s660 + $0x142] sm:$0xff]
        %v946 = vld [vmem:[%s660 + $0x152] sm:$0xff]
        %v947 = vld [vmem:[%s660 + $0x15a] sm:$0xff]
        %v948 = vld [vmem:[%s660 + $0x16a] sm:$0xff]
        %v949 = vld [vmem:[%s660 + $0x172] sm:$0xff]
        %982 = vrot.lane.b32.xlu0 %v918, 32
        %v983 = vpop.permute.xlu0 %982
        %984 = vrot.lane.b32.xlu0 %v919, 32
        %v985 = vpop.permute.xlu0 %984
        %986 = vrot.lane.b32.xlu0 %v920, 32
        %v987 = vpop.permute.xlu0 %986
        %988 = vrot.lane.b32.xlu0 %v921, 32
        %v989 = vpop.permute.xlu0 %988
        %990 = vrot.lane.b32.xlu0 %v922, 32
        %v991 = vpop.permute.xlu0 %990
        %992 = vrot.lane.b32.xlu0 %v923, 32
        %v993 = vpop.permute.xlu0 %992
        %994 = vrot.lane.b32.xlu0 %v924, 32
        %v995 = vpop.permute.xlu0 %994
        %996 = vrot.lane.b32.xlu0 %v925, 32
        %v997 = vpop.permute.xlu0 %996
        %998 = vrot.lane.b32.xlu0 %v926, 32
        %v999 = vpop.permute.xlu0 %998
        %1000 = vrot.lane.b32.xlu0 %v927, 32
        %v1001 = vpop.permute.xlu0 %1000
        %1002 = vrot.lane.b32.xlu0 %v928, 32
        %v1003 = vpop.permute.xlu0 %1002
        %1004 = vrot.lane.b32.xlu0 %v929, 32
        %v1005 = vpop.permute.xlu0 %1004
        %1006 = vrot.lane.b32.xlu0 %v930, 32
        %v1007 = vpop.permute.xlu0 %1006
        %1008 = vrot.lane.b32.xlu0 %v931, 32
        %v1009 = vpop.permute.xlu0 %1008
        %1010 = vrot.lane.b32.xlu0 %v932, 32
        %v1011 = vpop.permute.xlu0 %1010
        %1012 = vrot.lane.b32.xlu0 %v933, 32
        %v1013 = vpop.permute.xlu0 %1012
        %1014 = vrot.lane.b32.xlu0 %v934, 32
        %v1015 = vpop.permute.xlu0 %1014
        %1016 = vrot.lane.b32.xlu0 %v935, 32
        %v1017 = vpop.permute.xlu0 %1016
        %1018 = vrot.lane.b32.xlu0 %v936, 32
        %v1019 = vpop.permute.xlu0 %1018
        %1020 = vrot.lane.b32.xlu0 %v937, 32
        %v1021 = vpop.permute.xlu0 %1020
        %1022 = vrot.lane.b32.xlu0 %v938, 32
        %v1023 = vpop.permute.xlu0 %1022
        %1024 = vrot.lane.b32.xlu0 %v939, 32
        %v1025 = vpop.permute.xlu0 %1024
        %1026 = vrot.lane.b32.xlu0 %v940, 32
        %v1027 = vpop.permute.xlu0 %1026
        %1028 = vrot.lane.b32.xlu0 %v941, 32
        %v1029 = vpop.permute.xlu0 %1028
        %1030 = vrot.lane.b32.xlu0 %v942, 32
        %v1031 = vpop.permute.xlu0 %1030
        %1032 = vrot.lane.b32.xlu0 %v943, 32
        %v1033 = vpop.permute.xlu0 %1032
        %1034 = vrot.lane.b32.xlu0 %v944, 32
        %v1035 = vpop.permute.xlu0 %1034
        %1036 = vrot.lane.b32.xlu0 %v945, 32
        %v1037 = vpop.permute.xlu0 %1036
        %1038 = vrot.lane.b32.xlu0 %v946, 32
        %v1039 = vpop.permute.xlu0 %1038
        %1040 = vrot.lane.b32.xlu0 %v947, 32
        %v1041 = vpop.permute.xlu0 %1040
        %1042 = vrot.lane.b32.xlu0 %v948, 32
        %v1043 = vpop.permute.xlu0 %1042
        %1044 = vrot.lane.b32.xlu0 %v949, 32
        %v1045 = vpop.permute.xlu0 %1044
        %1078 = vst.msk [vmem:[#allocation2 + $0x8] sm:$0xff] %vm434, %v983
        %1079 = vst.msk [vmem:[#allocation2 + $0x20] sm:$0xff] %vm434, %v985
        %1080 = vst.msk [vmem:[#allocation2 + $0x38] sm:$0xff] %vm434, %v987
        %1081 = vst.msk [vmem:[#allocation2 + $0x50] sm:$0xff] %vm434, %v989
        %1082 = vst.msk [vmem:[#allocation2 + $0x68] sm:$0xff] %vm434, %v991
        %1083 = vst.msk [vmem:[#allocation2 + $0x80] sm:$0xff] %vm434, %v993
        %1084 = vst.msk [vmem:[#allocation2 + $0x98] sm:$0xff] %vm434, %v995
        %1085 = vst.msk [vmem:[#allocation2 + $0xb0] sm:$0xff] %vm434, %v997
        %1086 = vst.msk [vmem:[#allocation2 + $0xc8] sm:$0xff] %vm434, %v999
        %1087 = vst.msk [vmem:[#allocation2 + $0xe0] sm:$0xff] %vm434, %v1001
        %1088 = vst.msk [vmem:[#allocation2 + $0xf8] sm:$0xff] %vm434, %v1003
        %1089 = vst.msk [vmem:[#allocation2 + $0x110] sm:$0xff] %vm434, %v1005
        %1090 = vst.msk [vmem:[#allocation2 + $0x128] sm:$0xff] %vm434, %v1007
        %1091 = vst.msk [vmem:[#allocation2 + $0x140] sm:$0xff] %vm434, %v1009
        %1092 = vst.msk [vmem:[#allocation2 + $0x158] sm:$0xff] %vm434, %v1011
        %1093 = vst.msk [vmem:[#allocation2 + $0x170] sm:$0xff] %vm434, %v1013
        %1094 = vst.msk [vmem:[#allocation2 + $0x188] sm:$0xff] %vm434, %v1015
        %1095 = vst.msk [vmem:[#allocation2 + $0x1a0] sm:$0xff] %vm434, %v1017
        %1096 = vst.msk [vmem:[#allocation2 + $0x1b8] sm:$0xff] %vm434, %v1019
        %1097 = vst.msk [vmem:[#allocation2 + $0x1d0] sm:$0xff] %vm434, %v1021
        %1098 = vst.msk [vmem:[#allocation2 + $0x1e8] sm:$0xff] %vm434, %v1023
        %1099 = vst.msk [vmem:[#allocation2 + $0x200] sm:$0xff] %vm434, %v1025
        %1100 = vst.msk [vmem:[#allocation2 + $0x218] sm:$0xff] %vm434, %v1027
        %1101 = vst.msk [vmem:[#allocation2 + $0x230] sm:$0xff] %vm434, %v1029
        %1102 = vst.msk [vmem:[#allocation2 + $0x248] sm:$0xff] %vm434, %v1031
        %1103 = vst.msk [vmem:[#allocation2 + $0x260] sm:$0xff] %vm434, %v1033
        %1104 = vst.msk [vmem:[#allocation2 + $0x278] sm:$0xff] %vm434, %v1035
        %1105 = vst.msk [vmem:[#allocation2 + $0x290] sm:$0xff] %vm434, %v1037
        %1106 = vst.msk [vmem:[#allocation2 + $0x2a8] sm:$0xff] %vm434, %v1039
        %1107 = vst.msk [vmem:[#allocation2 + $0x2c0] sm:$0xff] %vm434, %v1041
        %1108 = vst.msk [vmem:[#allocation2 + $0x2d8] sm:$0xff] %vm434, %v1043
        %1109 = vst.msk [vmem:[#allocation2 + $0x2f0] sm:$0xff] %vm434, %v1045
        %s1110 = scalar_lea.vmem %s198, 48
        %v1111 = vld [vmem:[%s1110] sm:$0xff]
        %v1112 = vld [vmem:[%s1110 + $0x8] sm:$0xff]
        %v1113 = vld [vmem:[%s1110 + $0x18] sm:$0xff]
        %v1114 = vld [vmem:[%s1110 + $0x20] sm:$0xff]
        %v1115 = vld [vmem:[%s1110 + $0x30] sm:$0xff]
        %v1116 = vld [vmem:[%s1110 + $0x38] sm:$0xff]
        %v1117 = vld [vmem:[%s1110 + $0x48] sm:$0xff]
        %v1118 = vld [vmem:[%s1110 + $0x50] sm:$0xff]
        %v1119 = vld [vmem:[%s1110 + $0x60] sm:$0xff]
        %v1120 = vld [vmem:[%s1110 + $0x68] sm:$0xff]
        %v1121 = vld [vmem:[%s1110 + $0x78] sm:$0xff]
        %v1122 = vld [vmem:[%s1110 + $0x80] sm:$0xff]
        %v1123 = vld [vmem:[%s1110 + $0x90] sm:$0xff]
        %v1124 = vld [vmem:[%s1110 + $0x98] sm:$0xff]
        %v1125 = vld [vmem:[%s1110 + $0xa8] sm:$0xff]
        %v1126 = vld [vmem:[%s1110 + $0xb0] sm:$0xff]
        %v1127 = vld [vmem:[%s1110 + $0xc0] sm:$0xff]
        %v1128 = vld [vmem:[%s1110 + $0xc8] sm:$0xff]
        %v1129 = vld [vmem:[%s1110 + $0xd8] sm:$0xff]
        %v1130 = vld [vmem:[%s1110 + $0xe0] sm:$0xff]
        %v1131 = vld [vmem:[%s1110 + $0xf0] sm:$0xff]
        %v1132 = vld [vmem:[%s1110 + $0xf8] sm:$0xff]
        %v1133 = vld [vmem:[%s1110 + $0x108] sm:$0xff]
        %v1134 = vld [vmem:[%s1110 + $0x110] sm:$0xff]
        %v1135 = vld [vmem:[%s1110 + $0x120] sm:$0xff]
        %v1136 = vld [vmem:[%s1110 + $0x128] sm:$0xff]
        %v1137 = vld [vmem:[%s1110 + $0x138] sm:$0xff]
        %v1138 = vld [vmem:[%s1110 + $0x140] sm:$0xff]
        %v1139 = vld [vmem:[%s1110 + $0x150] sm:$0xff]
        %v1140 = vld [vmem:[%s1110 + $0x158] sm:$0xff]
        %v1141 = vld [vmem:[%s1110 + $0x168] sm:$0xff]
        %v1142 = vld [vmem:[%s1110 + $0x170] sm:$0xff]
        %1175 = vrot.lane.b32.xlu0 %v1111, 64
        %v1176 = vpop.permute.xlu0 %1175
        %1177 = vrot.lane.b32.xlu0 %v1112, 64
        %v1178 = vpop.permute.xlu0 %1177
        %1179 = vrot.lane.b32.xlu0 %v1113, 64
        %v1180 = vpop.permute.xlu0 %1179
        %1181 = vrot.lane.b32.xlu0 %v1114, 64
        %v1182 = vpop.permute.xlu0 %1181
        %1183 = vrot.lane.b32.xlu0 %v1115, 64
        %v1184 = vpop.permute.xlu0 %1183
        %1185 = vrot.lane.b32.xlu0 %v1116, 64
        %v1186 = vpop.permute.xlu0 %1185
        %1187 = vrot.lane.b32.xlu0 %v1117, 64
        %v1188 = vpop.permute.xlu0 %1187
        %1189 = vrot.lane.b32.xlu0 %v1118, 64
        %v1190 = vpop.permute.xlu0 %1189
        %1191 = vrot.lane.b32.xlu0 %v1119, 64
        %v1192 = vpop.permute.xlu0 %1191
        %1193 = vrot.lane.b32.xlu0 %v1120, 64
        %v1194 = vpop.permute.xlu0 %1193
        %1195 = vrot.lane.b32.xlu0 %v1121, 64
        %v1196 = vpop.permute.xlu0 %1195
        %1197 = vrot.lane.b32.xlu0 %v1122, 64
        %v1198 = vpop.permute.xlu0 %1197
        %1199 = vrot.lane.b32.xlu0 %v1123, 64
        %v1200 = vpop.permute.xlu0 %1199
        %1201 = vrot.lane.b32.xlu0 %v1124, 64
        %v1202 = vpop.permute.xlu0 %1201
        %1203 = vrot.lane.b32.xlu0 %v1125, 64
        %v1204 = vpop.permute.xlu0 %1203
        %1205 = vrot.lane.b32.xlu0 %v1126, 64
        %v1206 = vpop.permute.xlu0 %1205
        %1207 = vrot.lane.b32.xlu0 %v1127, 64
        %v1208 = vpop.permute.xlu0 %1207
        %1209 = vrot.lane.b32.xlu0 %v1128, 64
        %v1210 = vpop.permute.xlu0 %1209
        %1211 = vrot.lane.b32.xlu0 %v1129, 64
        %v1212 = vpop.permute.xlu0 %1211
        %1213 = vrot.lane.b32.xlu0 %v1130, 64
        %v1214 = vpop.permute.xlu0 %1213
        %1215 = vrot.lane.b32.xlu0 %v1131, 64
        %v1216 = vpop.permute.xlu0 %1215
        %1217 = vrot.lane.b32.xlu0 %v1132, 64
        %v1218 = vpop.permute.xlu0 %1217
        %1219 = vrot.lane.b32.xlu0 %v1133, 64
        %v1220 = vpop.permute.xlu0 %1219
        %1221 = vrot.lane.b32.xlu0 %v1134, 64
        %v1222 = vpop.permute.xlu0 %1221
        %1223 = vrot.lane.b32.xlu0 %v1135, 64
        %v1224 = vpop.permute.xlu0 %1223
        %1225 = vrot.lane.b32.xlu0 %v1136, 64
        %v1226 = vpop.permute.xlu0 %1225
        %1227 = vrot.lane.b32.xlu0 %v1137, 64
        %v1228 = vpop.permute.xlu0 %1227
        %1229 = vrot.lane.b32.xlu0 %v1138, 64
        %v1230 = vpop.permute.xlu0 %1229
        %1231 = vrot.lane.b32.xlu0 %v1139, 64
        %v1232 = vpop.permute.xlu0 %1231
        %1233 = vrot.lane.b32.xlu0 %v1140, 64
        %v1234 = vpop.permute.xlu0 %1233
        %1235 = vrot.lane.b32.xlu0 %v1141, 64
        %v1236 = vpop.permute.xlu0 %1235
        %1237 = vrot.lane.b32.xlu0 %v1142, 64
        %v1238 = vpop.permute.xlu0 %1237
        %1271 = vst.msk [vmem:[#allocation2 + $0x8] sm:$0xff] %vm627, %v1176
        %1272 = vst.msk [vmem:[#allocation2 + $0x20] sm:$0xff] %vm627, %v1178
        %1273 = vst.msk [vmem:[#allocation2 + $0x38] sm:$0xff] %vm627, %v1180
        %1274 = vst.msk [vmem:[#allocation2 + $0x50] sm:$0xff] %vm627, %v1182
        %1275 = vst.msk [vmem:[#allocation2 + $0x68] sm:$0xff] %vm627, %v1184
        %1276 = vst.msk [vmem:[#allocation2 + $0x80] sm:$0xff] %vm627, %v1186
        %1277 = vst.msk [vmem:[#allocation2 + $0x98] sm:$0xff] %vm627, %v1188
        %1278 = vst.msk [vmem:[#allocation2 + $0xb0] sm:$0xff] %vm627, %v1190
        %1279 = vst.msk [vmem:[#allocation2 + $0xc8] sm:$0xff] %vm627, %v1192
        %1280 = vst.msk [vmem:[#allocation2 + $0xe0] sm:$0xff] %vm627, %v1194
        %1281 = vst.msk [vmem:[#allocation2 + $0xf8] sm:$0xff] %vm627, %v1196
        %1282 = vst.msk [vmem:[#allocation2 + $0x110] sm:$0xff] %vm627, %v1198
        %1283 = vst.msk [vmem:[#allocation2 + $0x128] sm:$0xff] %vm627, %v1200
        %1284 = vst.msk [vmem:[#allocation2 + $0x140] sm:$0xff] %vm627, %v1202
        %1285 = vst.msk [vmem:[#allocation2 + $0x158] sm:$0xff] %vm627, %v1204
        %1286 = vst.msk [vmem:[#allocation2 + $0x170] sm:$0xff] %vm627, %v1206
        %1287 = vst.msk [vmem:[#allocation2 + $0x188] sm:$0xff] %vm627, %v1208
        %1288 = vst.msk [vmem:[#allocation2 + $0x1a0] sm:$0xff] %vm627, %v1210
        %1289 = vst.msk [vmem:[#allocation2 + $0x1b8] sm:$0xff] %vm627, %v1212
        %1290 = vst.msk [vmem:[#allocation2 + $0x1d0] sm:$0xff] %vm627, %v1214
        %1291 = vst.msk [vmem:[#allocation2 + $0x1e8] sm:$0xff] %vm627, %v1216
        %1292 = vst.msk [vmem:[#allocation2 + $0x200] sm:$0xff] %vm627, %v1218
        %1293 = vst.msk [vmem:[#allocation2 + $0x218] sm:$0xff] %vm627, %v1220
        %1294 = vst.msk [vmem:[#allocation2 + $0x230] sm:$0xff] %vm627, %v1222
        %1295 = vst.msk [vmem:[#allocation2 + $0x248] sm:$0xff] %vm627, %v1224
        %1296 = vst.msk [vmem:[#allocation2 + $0x260] sm:$0xff] %vm627, %v1226
        %1297 = vst.msk [vmem:[#allocation2 + $0x278] sm:$0xff] %vm627, %v1228
        %1298 = vst.msk [vmem:[#allocation2 + $0x290] sm:$0xff] %vm627, %v1230
        %1299 = vst.msk [vmem:[#allocation2 + $0x2a8] sm:$0xff] %vm627, %v1232
        %1300 = vst.msk [vmem:[#allocation2 + $0x2c0] sm:$0xff] %vm627, %v1234
        %1301 = vst.msk [vmem:[#allocation2 + $0x2d8] sm:$0xff] %vm627, %v1236
        %1302 = vst.msk [vmem:[#allocation2 + $0x2f0] sm:$0xff] %vm627, %v1238
        %v1303 = vld [vmem:[%s1110 + $0x1] sm:$0xff]
        %v1304 = vld [vmem:[%s1110 + $0x9] sm:$0xff]
        %v1305 = vld [vmem:[%s1110 + $0x19] sm:$0xff]
        %v1306 = vld [vmem:[%s1110 + $0x21] sm:$0xff]
        %v1307 = vld [vmem:[%s1110 + $0x31] sm:$0xff]
        %v1308 = vld [vmem:[%s1110 + $0x39] sm:$0xff]
        %v1309 = vld [vmem:[%s1110 + $0x49] sm:$0xff]
        %v1310 = vld [vmem:[%s1110 + $0x51] sm:$0xff]
        %v1311 = vld [vmem:[%s1110 + $0x61] sm:$0xff]
        %v1312 = vld [vmem:[%s1110 + $0x69] sm:$0xff]
        %v1313 = vld [vmem:[%s1110 + $0x79] sm:$0xff]
        %v1314 = vld [vmem:[%s1110 + $0x81] sm:$0xff]
        %v1315 = vld [vmem:[%s1110 + $0x91] sm:$0xff]
        %v1316 = vld [vmem:[%s1110 + $0x99] sm:$0xff]
        %v1317 = vld [vmem:[%s1110 + $0xa9] sm:$0xff]
        %v1318 = vld [vmem:[%s1110 + $0xb1] sm:$0xff]
        %v1319 = vld [vmem:[%s1110 + $0xc1] sm:$0xff]
        %v1320 = vld [vmem:[%s1110 + $0xc9] sm:$0xff]
        %v1321 = vld [vmem:[%s1110 + $0xd9] sm:$0xff]
        %v1322 = vld [vmem:[%s1110 + $0xe1] sm:$0xff]
        %v1323 = vld [vmem:[%s1110 + $0xf1] sm:$0xff]
        %v1324 = vld [vmem:[%s1110 + $0xf9] sm:$0xff]
        %v1325 = vld [vmem:[%s1110 + $0x109] sm:$0xff]
        %v1326 = vld [vmem:[%s1110 + $0x111] sm:$0xff]
        %v1327 = vld [vmem:[%s1110 + $0x121] sm:$0xff]
        %v1328 = vld [vmem:[%s1110 + $0x129] sm:$0xff]
        %v1329 = vld [vmem:[%s1110 + $0x139] sm:$0xff]
        %v1330 = vld [vmem:[%s1110 + $0x141] sm:$0xff]
        %v1331 = vld [vmem:[%s1110 + $0x151] sm:$0xff]
        %v1332 = vld [vmem:[%s1110 + $0x159] sm:$0xff]
        %v1333 = vld [vmem:[%s1110 + $0x169] sm:$0xff]
        %v1334 = vld [vmem:[%s1110 + $0x171] sm:$0xff]
        %1367 = vrot.lane.b32.xlu0 %v1303, 96
        %v1368 = vpop.permute.xlu0 %1367
        %1369 = vrot.lane.b32.xlu0 %v1304, 96
        %v1370 = vpop.permute.xlu0 %1369
        %1371 = vrot.lane.b32.xlu0 %v1305, 96
        %v1372 = vpop.permute.xlu0 %1371
        %1373 = vrot.lane.b32.xlu0 %v1306, 96
        %v1374 = vpop.permute.xlu0 %1373
        %1375 = vrot.lane.b32.xlu0 %v1307, 96
        %v1376 = vpop.permute.xlu0 %1375
        %1377 = vrot.lane.b32.xlu0 %v1308, 96
        %v1378 = vpop.permute.xlu0 %1377
        %1379 = vrot.lane.b32.xlu0 %v1309, 96
        %v1380 = vpop.permute.xlu0 %1379
        %1381 = vrot.lane.b32.xlu0 %v1310, 96
        %v1382 = vpop.permute.xlu0 %1381
        %1383 = vrot.lane.b32.xlu0 %v1311, 96
        %v1384 = vpop.permute.xlu0 %1383
        %1385 = vrot.lane.b32.xlu0 %v1312, 96
        %v1386 = vpop.permute.xlu0 %1385
        %1387 = vrot.lane.b32.xlu0 %v1313, 96
        %v1388 = vpop.permute.xlu0 %1387
        %1389 = vrot.lane.b32.xlu0 %v1314, 96
        %v1390 = vpop.permute.xlu0 %1389
        %1391 = vrot.lane.b32.xlu0 %v1315, 96
        %v1392 = vpop.permute.xlu0 %1391
        %1393 = vrot.lane.b32.xlu0 %v1316, 96
        %v1394 = vpop.permute.xlu0 %1393
        %1395 = vrot.lane.b32.xlu0 %v1317, 96
        %v1396 = vpop.permute.xlu0 %1395
        %1397 = vrot.lane.b32.xlu0 %v1318, 96
        %v1398 = vpop.permute.xlu0 %1397
        %1399 = vrot.lane.b32.xlu0 %v1319, 96
        %v1400 = vpop.permute.xlu0 %1399
        %1401 = vrot.lane.b32.xlu0 %v1320, 96
        %v1402 = vpop.permute.xlu0 %1401
        %1403 = vrot.lane.b32.xlu0 %v1321, 96
        %v1404 = vpop.permute.xlu0 %1403
        %1405 = vrot.lane.b32.xlu0 %v1322, 96
        %v1406 = vpop.permute.xlu0 %1405
        %1407 = vrot.lane.b32.xlu0 %v1323, 96
        %v1408 = vpop.permute.xlu0 %1407
        %1409 = vrot.lane.b32.xlu0 %v1324, 96
        %v1410 = vpop.permute.xlu0 %1409
        %1411 = vrot.lane.b32.xlu0 %v1325, 96
        %v1412 = vpop.permute.xlu0 %1411
        %1413 = vrot.lane.b32.xlu0 %v1326, 96
        %v1414 = vpop.permute.xlu0 %1413
        %1415 = vrot.lane.b32.xlu0 %v1327, 96
        %v1416 = vpop.permute.xlu0 %1415
        %1417 = vrot.lane.b32.xlu0 %v1328, 96
        %v1418 = vpop.permute.xlu0 %1417
        %1419 = vrot.lane.b32.xlu0 %v1329, 96
        %v1420 = vpop.permute.xlu0 %1419
        %1421 = vrot.lane.b32.xlu0 %v1330, 96
        %v1422 = vpop.permute.xlu0 %1421
        %1423 = vrot.lane.b32.xlu0 %v1331, 96
        %v1424 = vpop.permute.xlu0 %1423
        %1425 = vrot.lane.b32.xlu0 %v1332, 96
        %v1426 = vpop.permute.xlu0 %1425
        %1427 = vrot.lane.b32.xlu0 %v1333, 96
        %v1428 = vpop.permute.xlu0 %1427
        %1429 = vrot.lane.b32.xlu0 %v1334, 96
        %v1430 = vpop.permute.xlu0 %1429
        %1463 = vst.msk [vmem:[#allocation2 + $0x8] sm:$0xff] %vm821, %v1368
        %1464 = vst.msk [vmem:[#allocation2 + $0x20] sm:$0xff] %vm821, %v1370
        %1465 = vst.msk [vmem:[#allocation2 + $0x38] sm:$0xff] %vm821, %v1372
        %1466 = vst.msk [vmem:[#allocation2 + $0x50] sm:$0xff] %vm821, %v1374
        %1467 = vst.msk [vmem:[#allocation2 + $0x68] sm:$0xff] %vm821, %v1376
        %1468 = vst.msk [vmem:[#allocation2 + $0x80] sm:$0xff] %vm821, %v1378
        %1469 = vst.msk [vmem:[#allocation2 + $0x98] sm:$0xff] %vm821, %v1380
        %1470 = vst.msk [vmem:[#allocation2 + $0xb0] sm:$0xff] %vm821, %v1382
        %1471 = vst.msk [vmem:[#allocation2 + $0xc8] sm:$0xff] %vm821, %v1384
        %1472 = vst.msk [vmem:[#allocation2 + $0xe0] sm:$0xff] %vm821, %v1386
        %1473 = vst.msk [vmem:[#allocation2 + $0xf8] sm:$0xff] %vm821, %v1388
        %1474 = vst.msk [vmem:[#allocation2 + $0x110] sm:$0xff] %vm821, %v1390
        %1475 = vst.msk [vmem:[#allocation2 + $0x128] sm:$0xff] %vm821, %v1392
        %1476 = vst.msk [vmem:[#allocation2 + $0x140] sm:$0xff] %vm821, %v1394
        %1477 = vst.msk [vmem:[#allocation2 + $0x158] sm:$0xff] %vm821, %v1396
        %1478 = vst.msk [vmem:[#allocation2 + $0x170] sm:$0xff] %vm821, %v1398
        %1479 = vst.msk [vmem:[#allocation2 + $0x188] sm:$0xff] %vm821, %v1400
        %1480 = vst.msk [vmem:[#allocation2 + $0x1a0] sm:$0xff] %vm821, %v1402
        %1481 = vst.msk [vmem:[#allocation2 + $0x1b8] sm:$0xff] %vm821, %v1404
        %1482 = vst.msk [vmem:[#allocation2 + $0x1d0] sm:$0xff] %vm821, %v1406
        %1483 = vst.msk [vmem:[#allocation2 + $0x1e8] sm:$0xff] %vm821, %v1408
        %1484 = vst.msk [vmem:[#allocation2 + $0x200] sm:$0xff] %vm821, %v1410
        %1485 = vst.msk [vmem:[#allocation2 + $0x218] sm:$0xff] %vm821, %v1412
        %1486 = vst.msk [vmem:[#allocation2 + $0x230] sm:$0xff] %vm821, %v1414
        %1487 = vst.msk [vmem:[#allocation2 + $0x248] sm:$0xff] %vm821, %v1416
        %1488 = vst.msk [vmem:[#allocation2 + $0x260] sm:$0xff] %vm821, %v1418
        %1489 = vst.msk [vmem:[#allocation2 + $0x278] sm:$0xff] %vm821, %v1420
        %1490 = vst.msk [vmem:[#allocation2 + $0x290] sm:$0xff] %vm821, %v1422
        %1491 = vst.msk [vmem:[#allocation2 + $0x2a8] sm:$0xff] %vm821, %v1424
        %1492 = vst.msk [vmem:[#allocation2 + $0x2c0] sm:$0xff] %vm821, %v1426
        %1493 = vst.msk [vmem:[#allocation2 + $0x2d8] sm:$0xff] %vm821, %v1428
        %1494 = vst.msk [vmem:[#allocation2 + $0x2f0] sm:$0xff] %vm821, %v1430
        %v1495 = vld [vmem:[%s1110 + $0x2] sm:$0xff]
        %v1496 = vld [vmem:[%s1110 + $0xa] sm:$0xff]
        %v1497 = vld [vmem:[%s1110 + $0x1a] sm:$0xff]
        %v1498 = vld [vmem:[%s1110 + $0x22] sm:$0xff]
        %v1499 = vld [vmem:[%s1110 + $0x32] sm:$0xff]
        %v1500 = vld [vmem:[%s1110 + $0x3a] sm:$0xff]
        %v1501 = vld [vmem:[%s1110 + $0x4a] sm:$0xff]
        %v1502 = vld [vmem:[%s1110 + $0x52] sm:$0xff]
        %v1503 = vld [vmem:[%s1110 + $0x62] sm:$0xff]
        %v1504 = vld [vmem:[%s1110 + $0x6a] sm:$0xff]
        %v1505 = vld [vmem:[%s1110 + $0x7a] sm:$0xff]
        %v1506 = vld [vmem:[%s1110 + $0x82] sm:$0xff]
        %v1507 = vld [vmem:[%s1110 + $0x92] sm:$0xff]
        %v1508 = vld [vmem:[%s1110 + $0x9a] sm:$0xff]
        %v1509 = vld [vmem:[%s1110 + $0xaa] sm:$0xff]
        %v1510 = vld [vmem:[%s1110 + $0xb2] sm:$0xff]
        %v1511 = vld [vmem:[%s1110 + $0xc2] sm:$0xff]
        %v1512 = vld [vmem:[%s1110 + $0xca] sm:$0xff]
        %v1513 = vld [vmem:[%s1110 + $0xda] sm:$0xff]
        %v1514 = vld [vmem:[%s1110 + $0xe2] sm:$0xff]
        %v1515 = vld [vmem:[%s1110 + $0xf2] sm:$0xff]
        %v1516 = vld [vmem:[%s1110 + $0xfa] sm:$0xff]
        %v1517 = vld [vmem:[%s1110 + $0x10a] sm:$0xff]
        %v1518 = vld [vmem:[%s1110 + $0x112] sm:$0xff]
        %v1519 = vld [vmem:[%s1110 + $0x122] sm:$0xff]
        %v1520 = vld [vmem:[%s1110 + $0x12a] sm:$0xff]
        %v1521 = vld [vmem:[%s1110 + $0x13a] sm:$0xff]
        %v1522 = vld [vmem:[%s1110 + $0x142] sm:$0xff]
        %v1523 = vld [vmem:[%s1110 + $0x152] sm:$0xff]
        %v1524 = vld [vmem:[%s1110 + $0x15a] sm:$0xff]
        %v1525 = vld [vmem:[%s1110 + $0x16a] sm:$0xff]
        %v1526 = vld [vmem:[%s1110 + $0x172] sm:$0xff]
        %1527 = vst.msk [vmem:[#allocation2 + $0x10] sm:$0xff] %vm241, %v1495
        %1528 = vst.msk [vmem:[#allocation2 + $0x28] sm:$0xff] %vm241, %v1496
        %1529 = vst.msk [vmem:[#allocation2 + $0x40] sm:$0xff] %vm241, %v1497
        %1530 = vst.msk [vmem:[#allocation2 + $0x58] sm:$0xff] %vm241, %v1498
        %1531 = vst.msk [vmem:[#allocation2 + $0x70] sm:$0xff] %vm241, %v1499
        %1532 = vst.msk [vmem:[#allocation2 + $0x88] sm:$0xff] %vm241, %v1500
        %1533 = vst.msk [vmem:[#allocation2 + $0xa0] sm:$0xff] %vm241, %v1501
        %1534 = vst.msk [vmem:[#allocation2 + $0xb8] sm:$0xff] %vm241, %v1502
        %1535 = vst.msk [vmem:[#allocation2 + $0xd0] sm:$0xff] %vm241, %v1503
        %1536 = vst.msk [vmem:[#allocation2 + $0xe8] sm:$0xff] %vm241, %v1504
        %1537 = vst.msk [vmem:[#allocation2 + $0x100] sm:$0xff] %vm241, %v1505
        %1538 = vst.msk [vmem:[#allocation2 + $0x118] sm:$0xff] %vm241, %v1506
        %1539 = vst.msk [vmem:[#allocation2 + $0x130] sm:$0xff] %vm241, %v1507
        %1540 = vst.msk [vmem:[#allocation2 + $0x148] sm:$0xff] %vm241, %v1508
        %1541 = vst.msk [vmem:[#allocation2 + $0x160] sm:$0xff] %vm241, %v1509
        %1542 = vst.msk [vmem:[#allocation2 + $0x178] sm:$0xff] %vm241, %v1510
        %1543 = vst.msk [vmem:[#allocation2 + $0x190] sm:$0xff] %vm241, %v1511
        %1544 = vst.msk [vmem:[#allocation2 + $0x1a8] sm:$0xff] %vm241, %v1512
        %1545 = vst.msk [vmem:[#allocation2 + $0x1c0] sm:$0xff] %vm241, %v1513
        %1546 = vst.msk [vmem:[#allocation2 + $0x1d8] sm:$0xff] %vm241, %v1514
        %1547 = vst.msk [vmem:[#allocation2 + $0x1f0] sm:$0xff] %vm241, %v1515
        %1548 = vst.msk [vmem:[#allocation2 + $0x208] sm:$0xff] %vm241, %v1516
        %1549 = vst.msk [vmem:[#allocation2 + $0x220] sm:$0xff] %vm241, %v1517
        %1550 = vst.msk [vmem:[#allocation2 + $0x238] sm:$0xff] %vm241, %v1518
        %1551 = vst.msk [vmem:[#allocation2 + $0x250] sm:$0xff] %vm241, %v1519
        %1552 = vst.msk [vmem:[#allocation2 + $0x268] sm:$0xff] %vm241, %v1520
        %1553 = vst.msk [vmem:[#allocation2 + $0x280] sm:$0xff] %vm241, %v1521
        %1554 = vst.msk [vmem:[#allocation2 + $0x298] sm:$0xff] %vm241, %v1522
        %1555 = vst.msk [vmem:[#allocation2 + $0x2b0] sm:$0xff] %vm241, %v1523
        %1556 = vst.msk [vmem:[#allocation2 + $0x2c8] sm:$0xff] %vm241, %v1524
        %1557 = vst.msk [vmem:[#allocation2 + $0x2e0] sm:$0xff] %vm241, %v1525
        %1558 = vst.msk [vmem:[#allocation2 + $0x2f8] sm:$0xff] %vm241, %v1526
        %s1559 = scalar_lea.vmem %s198, 432
        %v1560 = vld [vmem:[%s1559] sm:$0xff]
        %v1561 = vld [vmem:[%s1559 + $0x8] sm:$0xff]
        %v1562 = vld [vmem:[%s1559 + $0x18] sm:$0xff]
        %v1563 = vld [vmem:[%s1559 + $0x20] sm:$0xff]
        %v1564 = vld [vmem:[%s1559 + $0x30] sm:$0xff]
        %v1565 = vld [vmem:[%s1559 + $0x38] sm:$0xff]
        %v1566 = vld [vmem:[%s1559 + $0x48] sm:$0xff]
        %v1567 = vld [vmem:[%s1559 + $0x50] sm:$0xff]
        %v1568 = vld [vmem:[%s1559 + $0x60] sm:$0xff]
        %v1569 = vld [vmem:[%s1559 + $0x68] sm:$0xff]
        %v1570 = vld [vmem:[%s1559 + $0x78] sm:$0xff]
        %v1571 = vld [vmem:[%s1559 + $0x80] sm:$0xff]
        %v1572 = vld [vmem:[%s1559 + $0x90] sm:$0xff]
        %v1573 = vld [vmem:[%s1559 + $0x98] sm:$0xff]
        %v1574 = vld [vmem:[%s1559 + $0xa8] sm:$0xff]
        %v1575 = vld [vmem:[%s1559 + $0xb0] sm:$0xff]
        %v1576 = vld [vmem:[%s1559 + $0xc0] sm:$0xff]
        %v1577 = vld [vmem:[%s1559 + $0xc8] sm:$0xff]
        %v1578 = vld [vmem:[%s1559 + $0xd8] sm:$0xff]
        %v1579 = vld [vmem:[%s1559 + $0xe0] sm:$0xff]
        %v1580 = vld [vmem:[%s1559 + $0xf0] sm:$0xff]
        %v1581 = vld [vmem:[%s1559 + $0xf8] sm:$0xff]
        %v1582 = vld [vmem:[%s1559 + $0x108] sm:$0xff]
        %v1583 = vld [vmem:[%s1559 + $0x110] sm:$0xff]
        %v1584 = vld [vmem:[%s1559 + $0x120] sm:$0xff]
        %v1585 = vld [vmem:[%s1559 + $0x128] sm:$0xff]
        %v1586 = vld [vmem:[%s1559 + $0x138] sm:$0xff]
        %v1587 = vld [vmem:[%s1559 + $0x140] sm:$0xff]
        %v1588 = vld [vmem:[%s1559 + $0x150] sm:$0xff]
        %v1589 = vld [vmem:[%s1559 + $0x158] sm:$0xff]
        %v1590 = vld [vmem:[%s1559 + $0x168] sm:$0xff]
        %v1591 = vld [vmem:[%s1559 + $0x170] sm:$0xff]
        %1592 = vst.msk [vmem:[#allocation2 + $0x300] sm:$0xff] %vm241, %v1560
        %1593 = vst.msk [vmem:[#allocation2 + $0x318] sm:$0xff] %vm241, %v1561
        %1594 = vst.msk [vmem:[#allocation2 + $0x330] sm:$0xff] %vm241, %v1562
        %1595 = vst.msk [vmem:[#allocation2 + $0x348] sm:$0xff] %vm241, %v1563
        %1596 = vst.msk [vmem:[#allocation2 + $0x360] sm:$0xff] %vm241, %v1564
        %1597 = vst.msk [vmem:[#allocation2 + $0x378] sm:$0xff] %vm241, %v1565
        %1598 = vst.msk [vmem:[#allocation2 + $0x390] sm:$0xff] %vm241, %v1566
        %1599 = vst.msk [vmem:[#allocation2 + $0x3a8] sm:$0xff] %vm241, %v1567
        %1600 = vst.msk [vmem:[#allocation2 + $0x3c0] sm:$0xff] %vm241, %v1568
        %1601 = vst.msk [vmem:[#allocation2 + $0x3d8] sm:$0xff] %vm241, %v1569
        %1602 = vst.msk [vmem:[#allocation2 + $0x3f0] sm:$0xff] %vm241, %v1570
        %1603 = vst.msk [vmem:[#allocation2 + $0x408] sm:$0xff] %vm241, %v1571
        %1604 = vst.msk [vmem:[#allocation2 + $0x420] sm:$0xff] %vm241, %v1572
        %1605 = vst.msk [vmem:[#allocation2 + $0x438] sm:$0xff] %vm241, %v1573
        %1606 = vst.msk [vmem:[#allocation2 + $0x450] sm:$0xff] %vm241, %v1574
        %1607 = vst.msk [vmem:[#allocation2 + $0x468] sm:$0xff] %vm241, %v1575
        %1608 = vst.msk [vmem:[#allocation2 + $0x480] sm:$0xff] %vm241, %v1576
        %1609 = vst.msk [vmem:[#allocation2 + $0x498] sm:$0xff] %vm241, %v1577
        %1610 = vst.msk [vmem:[#allocation2 + $0x4b0] sm:$0xff] %vm241, %v1578
        %1611 = vst.msk [vmem:[#allocation2 + $0x4c8] sm:$0xff] %vm241, %v1579
        %1612 = vst.msk [vmem:[#allocation2 + $0x4e0] sm:$0xff] %vm241, %v1580
        %1613 = vst.msk [vmem:[#allocation2 + $0x4f8] sm:$0xff] %vm241, %v1581
        %1614 = vst.msk [vmem:[#allocation2 + $0x510] sm:$0xff] %vm241, %v1582
        %1615 = vst.msk [vmem:[#allocation2 + $0x528] sm:$0xff] %vm241, %v1583
        %1616 = vst.msk [vmem:[#allocation2 + $0x540] sm:$0xff] %vm241, %v1584
        %1617 = vst.msk [vmem:[#allocation2 + $0x558] sm:$0xff] %vm241, %v1585
        %1618 = vst.msk [vmem:[#allocation2 + $0x570] sm:$0xff] %vm241, %v1586
        %1619 = vst.msk [vmem:[#allocation2 + $0x588] sm:$0xff] %vm241, %v1587
        %1620 = vst.msk [vmem:[#allocation2 + $0x5a0] sm:$0xff] %vm241, %v1588
        %1621 = vst.msk [vmem:[#allocation2 + $0x5b8] sm:$0xff] %vm241, %v1589
        %1622 = vst.msk [vmem:[#allocation2 + $0x5d0] sm:$0xff] %vm241, %v1590
        %1623 = vst.msk [vmem:[#allocation2 + $0x5e8] sm:$0xff] %vm241, %v1591
        %v1624 = vld [vmem:[%s1559 + $0x1] sm:$0xff]
        %v1625 = vld [vmem:[%s1559 + $0x9] sm:$0xff]
        %v1626 = vld [vmem:[%s1559 + $0x19] sm:$0xff]
        %v1627 = vld [vmem:[%s1559 + $0x21] sm:$0xff]
        %v1628 = vld [vmem:[%s1559 + $0x31] sm:$0xff]
        %v1629 = vld [vmem:[%s1559 + $0x39] sm:$0xff]
        %v1630 = vld [vmem:[%s1559 + $0x49] sm:$0xff]
        %v1631 = vld [vmem:[%s1559 + $0x51] sm:$0xff]
        %v1632 = vld [vmem:[%s1559 + $0x61] sm:$0xff]
        %v1633 = vld [vmem:[%s1559 + $0x69] sm:$0xff]
        %v1634 = vld [vmem:[%s1559 + $0x79] sm:$0xff]
        %v1635 = vld [vmem:[%s1559 + $0x81] sm:$0xff]
        %v1636 = vld [vmem:[%s1559 + $0x91] sm:$0xff]
        %v1637 = vld [vmem:[%s1559 + $0x99] sm:$0xff]
        %v1638 = vld [vmem:[%s1559 + $0xa9] sm:$0xff]
        %v1639 = vld [vmem:[%s1559 + $0xb1] sm:$0xff]
        %v1640 = vld [vmem:[%s1559 + $0xc1] sm:$0xff]
        %v1641 = vld [vmem:[%s1559 + $0xc9] sm:$0xff]
        %v1642 = vld [vmem:[%s1559 + $0xd9] sm:$0xff]
        %v1643 = vld [vmem:[%s1559 + $0xe1] sm:$0xff]
        %v1644 = vld [vmem:[%s1559 + $0xf1] sm:$0xff]
        %v1645 = vld [vmem:[%s1559 + $0xf9] sm:$0xff]
        %v1646 = vld [vmem:[%s1559 + $0x109] sm:$0xff]
        %v1647 = vld [vmem:[%s1559 + $0x111] sm:$0xff]
        %v1648 = vld [vmem:[%s1559 + $0x121] sm:$0xff]
        %v1649 = vld [vmem:[%s1559 + $0x129] sm:$0xff]
        %v1650 = vld [vmem:[%s1559 + $0x139] sm:$0xff]
        %v1651 = vld [vmem:[%s1559 + $0x141] sm:$0xff]
        %v1652 = vld [vmem:[%s1559 + $0x151] sm:$0xff]
        %v1653 = vld [vmem:[%s1559 + $0x159] sm:$0xff]
        %v1654 = vld [vmem:[%s1559 + $0x169] sm:$0xff]
        %v1655 = vld [vmem:[%s1559 + $0x171] sm:$0xff]
        %1688 = vrot.lane.b32.xlu0 %v1624, 32
        %v1689 = vpop.permute.xlu0 %1688
        %1690 = vrot.lane.b32.xlu0 %v1625, 32
        %v1691 = vpop.permute.xlu0 %1690
        %1692 = vrot.lane.b32.xlu0 %v1626, 32
        %v1693 = vpop.permute.xlu0 %1692
        %1694 = vrot.lane.b32.xlu0 %v1627, 32
        %v1695 = vpop.permute.xlu0 %1694
        %1696 = vrot.lane.b32.xlu0 %v1628, 32
        %v1697 = vpop.permute.xlu0 %1696
        %1698 = vrot.lane.b32.xlu0 %v1629, 32
        %v1699 = vpop.permute.xlu0 %1698
        %1700 = vrot.lane.b32.xlu0 %v1630, 32
        %v1701 = vpop.permute.xlu0 %1700
        %1702 = vrot.lane.b32.xlu0 %v1631, 32
        %v1703 = vpop.permute.xlu0 %1702
        %1704 = vrot.lane.b32.xlu0 %v1632, 32
        %v1705 = vpop.permute.xlu0 %1704
        %1706 = vrot.lane.b32.xlu0 %v1633, 32
        %v1707 = vpop.permute.xlu0 %1706
        %1708 = vrot.lane.b32.xlu0 %v1634, 32
        %v1709 = vpop.permute.xlu0 %1708
        %1710 = vrot.lane.b32.xlu0 %v1635, 32
        %v1711 = vpop.permute.xlu0 %1710
        %1712 = vrot.lane.b32.xlu0 %v1636, 32
        %v1713 = vpop.permute.xlu0 %1712
        %1714 = vrot.lane.b32.xlu0 %v1637, 32
        %v1715 = vpop.permute.xlu0 %1714
        %1716 = vrot.lane.b32.xlu0 %v1638, 32
        %v1717 = vpop.permute.xlu0 %1716
        %1718 = vrot.lane.b32.xlu0 %v1639, 32
        %v1719 = vpop.permute.xlu0 %1718
        %1720 = vrot.lane.b32.xlu0 %v1640, 32
        %v1721 = vpop.permute.xlu0 %1720
        %1722 = vrot.lane.b32.xlu0 %v1641, 32
        %v1723 = vpop.permute.xlu0 %1722
        %1724 = vrot.lane.b32.xlu0 %v1642, 32
        %v1725 = vpop.permute.xlu0 %1724
        %1726 = vrot.lane.b32.xlu0 %v1643, 32
        %v1727 = vpop.permute.xlu0 %1726
        %1728 = vrot.lane.b32.xlu0 %v1644, 32
        %v1729 = vpop.permute.xlu0 %1728
        %1730 = vrot.lane.b32.xlu0 %v1645, 32
        %v1731 = vpop.permute.xlu0 %1730
        %1732 = vrot.lane.b32.xlu0 %v1646, 32
        %v1733 = vpop.permute.xlu0 %1732
        %1734 = vrot.lane.b32.xlu0 %v1647, 32
        %v1735 = vpop.permute.xlu0 %1734
        %1736 = vrot.lane.b32.xlu0 %v1648, 32
        %v1737 = vpop.permute.xlu0 %1736
        %1738 = vrot.lane.b32.xlu0 %v1649, 32
        %v1739 = vpop.permute.xlu0 %1738
        %1740 = vrot.lane.b32.xlu0 %v1650, 32
        %v1741 = vpop.permute.xlu0 %1740
        %1742 = vrot.lane.b32.xlu0 %v1651, 32
        %v1743 = vpop.permute.xlu0 %1742
        %1744 = vrot.lane.b32.xlu0 %v1652, 32
        %v1745 = vpop.permute.xlu0 %1744
        %1746 = vrot.lane.b32.xlu0 %v1653, 32
        %v1747 = vpop.permute.xlu0 %1746
        %1748 = vrot.lane.b32.xlu0 %v1654, 32
        %v1749 = vpop.permute.xlu0 %1748
        %1750 = vrot.lane.b32.xlu0 %v1655, 32
        %v1751 = vpop.permute.xlu0 %1750
        %1784 = vst.msk [vmem:[#allocation2 + $0x300] sm:$0xff] %vm434, %v1689
        %1785 = vst.msk [vmem:[#allocation2 + $0x318] sm:$0xff] %vm434, %v1691
        %1786 = vst.msk [vmem:[#allocation2 + $0x330] sm:$0xff] %vm434, %v1693
        %1787 = vst.msk [vmem:[#allocation2 + $0x348] sm:$0xff] %vm434, %v1695
        %1788 = vst.msk [vmem:[#allocation2 + $0x360] sm:$0xff] %vm434, %v1697
        %1789 = vst.msk [vmem:[#allocation2 + $0x378] sm:$0xff] %vm434, %v1699
        %1790 = vst.msk [vmem:[#allocation2 + $0x390] sm:$0xff] %vm434, %v1701
        %1791 = vst.msk [vmem:[#allocation2 + $0x3a8] sm:$0xff] %vm434, %v1703
        %1792 = vst.msk [vmem:[#allocation2 + $0x3c0] sm:$0xff] %vm434, %v1705
        %1793 = vst.msk [vmem:[#allocation2 + $0x3d8] sm:$0xff] %vm434, %v1707
        %1794 = vst.msk [vmem:[#allocation2 + $0x3f0] sm:$0xff] %vm434, %v1709
        %1795 = vst.msk [vmem:[#allocation2 + $0x408] sm:$0xff] %vm434, %v1711
        %1796 = vst.msk [vmem:[#allocation2 + $0x420] sm:$0xff] %vm434, %v1713
        %1797 = vst.msk [vmem:[#allocation2 + $0x438] sm:$0xff] %vm434, %v1715
        %1798 = vst.msk [vmem:[#allocation2 + $0x450] sm:$0xff] %vm434, %v1717
        %1799 = vst.msk [vmem:[#allocation2 + $0x468] sm:$0xff] %vm434, %v1719
        %1800 = vst.msk [vmem:[#allocation2 + $0x480] sm:$0xff] %vm434, %v1721
        %1801 = vst.msk [vmem:[#allocation2 + $0x498] sm:$0xff] %vm434, %v1723
        %1802 = vst.msk [vmem:[#allocation2 + $0x4b0] sm:$0xff] %vm434, %v1725
        %1803 = vst.msk [vmem:[#allocation2 + $0x4c8] sm:$0xff] %vm434, %v1727
        %1804 = vst.msk [vmem:[#allocation2 + $0x4e0] sm:$0xff] %vm434, %v1729
        %1805 = vst.msk [vmem:[#allocation2 + $0x4f8] sm:$0xff] %vm434, %v1731
        %1806 = vst.msk [vmem:[#allocation2 + $0x510] sm:$0xff] %vm434, %v1733
        %1807 = vst.msk [vmem:[#allocation2 + $0x528] sm:$0xff] %vm434, %v1735
        %1808 = vst.msk [vmem:[#allocation2 + $0x540] sm:$0xff] %vm434, %v1737
        %1809 = vst.msk [vmem:[#allocation2 + $0x558] sm:$0xff] %vm434, %v1739
        %1810 = vst.msk [vmem:[#allocation2 + $0x570] sm:$0xff] %vm434, %v1741
        %1811 = vst.msk [vmem:[#allocation2 + $0x588] sm:$0xff] %vm434, %v1743
        %1812 = vst.msk [vmem:[#allocation2 + $0x5a0] sm:$0xff] %vm434, %v1745
        %1813 = vst.msk [vmem:[#allocation2 + $0x5b8] sm:$0xff] %vm434, %v1747
        %1814 = vst.msk [vmem:[#allocation2 + $0x5d0] sm:$0xff] %vm434, %v1749
        %1815 = vst.msk [vmem:[#allocation2 + $0x5e8] sm:$0xff] %vm434, %v1751
        %v1816 = vld [vmem:[%s1559 + $0x2] sm:$0xff]
        %v1817 = vld [vmem:[%s1559 + $0xa] sm:$0xff]
        %v1818 = vld [vmem:[%s1559 + $0x1a] sm:$0xff]
        %v1819 = vld [vmem:[%s1559 + $0x22] sm:$0xff]
        %v1820 = vld [vmem:[%s1559 + $0x32] sm:$0xff]
        %v1821 = vld [vmem:[%s1559 + $0x3a] sm:$0xff]
        %v1822 = vld [vmem:[%s1559 + $0x4a] sm:$0xff]
        %v1823 = vld [vmem:[%s1559 + $0x52] sm:$0xff]
        %v1824 = vld [vmem:[%s1559 + $0x62] sm:$0xff]
        %v1825 = vld [vmem:[%s1559 + $0x6a] sm:$0xff]
        %v1826 = vld [vmem:[%s1559 + $0x7a] sm:$0xff]
        %v1827 = vld [vmem:[%s1559 + $0x82] sm:$0xff]
        %v1828 = vld [vmem:[%s1559 + $0x92] sm:$0xff]
        %v1829 = vld [vmem:[%s1559 + $0x9a] sm:$0xff]
        %v1830 = vld [vmem:[%s1559 + $0xaa] sm:$0xff]
        %v1831 = vld [vmem:[%s1559 + $0xb2] sm:$0xff]
        %v1832 = vld [vmem:[%s1559 + $0xc2] sm:$0xff]
        %v1833 = vld [vmem:[%s1559 + $0xca] sm:$0xff]
        %v1834 = vld [vmem:[%s1559 + $0xda] sm:$0xff]
        %v1835 = vld [vmem:[%s1559 + $0xe2] sm:$0xff]
        %v1836 = vld [vmem:[%s1559 + $0xf2] sm:$0xff]
        %v1837 = vld [vmem:[%s1559 + $0xfa] sm:$0xff]
        %v1838 = vld [vmem:[%s1559 + $0x10a] sm:$0xff]
        %v1839 = vld [vmem:[%s1559 + $0x112] sm:$0xff]
        %v1840 = vld [vmem:[%s1559 + $0x122] sm:$0xff]
        %v1841 = vld [vmem:[%s1559 + $0x12a] sm:$0xff]
        %v1842 = vld [vmem:[%s1559 + $0x13a] sm:$0xff]
        %v1843 = vld [vmem:[%s1559 + $0x142] sm:$0xff]
        %v1844 = vld [vmem:[%s1559 + $0x152] sm:$0xff]
        %v1845 = vld [vmem:[%s1559 + $0x15a] sm:$0xff]
        %v1846 = vld [vmem:[%s1559 + $0x16a] sm:$0xff]
        %v1847 = vld [vmem:[%s1559 + $0x172] sm:$0xff]
        %1880 = vrot.lane.b32.xlu0 %v1816, 64
        %v1881 = vpop.permute.xlu0 %1880
        %1882 = vrot.lane.b32.xlu0 %v1817, 64
        %v1883 = vpop.permute.xlu0 %1882
        %1884 = vrot.lane.b32.xlu0 %v1818, 64
        %v1885 = vpop.permute.xlu0 %1884
        %1886 = vrot.lane.b32.xlu0 %v1819, 64
        %v1887 = vpop.permute.xlu0 %1886
        %1888 = vrot.lane.b32.xlu0 %v1820, 64
        %v1889 = vpop.permute.xlu0 %1888
        %1890 = vrot.lane.b32.xlu0 %v1821, 64
        %v1891 = vpop.permute.xlu0 %1890
        %1892 = vrot.lane.b32.xlu0 %v1822, 64
        %v1893 = vpop.permute.xlu0 %1892
        %1894 = vrot.lane.b32.xlu0 %v1823, 64
        %v1895 = vpop.permute.xlu0 %1894
        %1896 = vrot.lane.b32.xlu0 %v1824, 64
        %v1897 = vpop.permute.xlu0 %1896
        %1898 = vrot.lane.b32.xlu0 %v1825, 64
        %v1899 = vpop.permute.xlu0 %1898
        %1900 = vrot.lane.b32.xlu0 %v1826, 64
        %v1901 = vpop.permute.xlu0 %1900
        %1902 = vrot.lane.b32.xlu0 %v1827, 64
        %v1903 = vpop.permute.xlu0 %1902
        %1904 = vrot.lane.b32.xlu0 %v1828, 64
        %v1905 = vpop.permute.xlu0 %1904
        %1906 = vrot.lane.b32.xlu0 %v1829, 64
        %v1907 = vpop.permute.xlu0 %1906
        %1908 = vrot.lane.b32.xlu0 %v1830, 64
        %v1909 = vpop.permute.xlu0 %1908
        %1910 = vrot.lane.b32.xlu0 %v1831, 64
        %v1911 = vpop.permute.xlu0 %1910
        %1912 = vrot.lane.b32.xlu0 %v1832, 64
        %v1913 = vpop.permute.xlu0 %1912
        %1914 = vrot.lane.b32.xlu0 %v1833, 64
        %v1915 = vpop.permute.xlu0 %1914
        %1916 = vrot.lane.b32.xlu0 %v1834, 64
        %v1917 = vpop.permute.xlu0 %1916
        %1918 = vrot.lane.b32.xlu0 %v1835, 64
        %v1919 = vpop.permute.xlu0 %1918
        %1920 = vrot.lane.b32.xlu0 %v1836, 64
        %v1921 = vpop.permute.xlu0 %1920
        %1922 = vrot.lane.b32.xlu0 %v1837, 64
        %v1923 = vpop.permute.xlu0 %1922
        %1924 = vrot.lane.b32.xlu0 %v1838, 64
        %v1925 = vpop.permute.xlu0 %1924
        %1926 = vrot.lane.b32.xlu0 %v1839, 64
        %v1927 = vpop.permute.xlu0 %1926
        %1928 = vrot.lane.b32.xlu0 %v1840, 64
        %v1929 = vpop.permute.xlu0 %1928
        %1930 = vrot.lane.b32.xlu0 %v1841, 64
        %v1931 = vpop.permute.xlu0 %1930
        %1932 = vrot.lane.b32.xlu0 %v1842, 64
        %v1933 = vpop.permute.xlu0 %1932
        %1934 = vrot.lane.b32.xlu0 %v1843, 64
        %v1935 = vpop.permute.xlu0 %1934
        %1936 = vrot.lane.b32.xlu0 %v1844, 64
        %v1937 = vpop.permute.xlu0 %1936
        %1938 = vrot.lane.b32.xlu0 %v1845, 64
        %v1939 = vpop.permute.xlu0 %1938
        %1940 = vrot.lane.b32.xlu0 %v1846, 64
        %v1941 = vpop.permute.xlu0 %1940
        %1942 = vrot.lane.b32.xlu0 %v1847, 64
        %v1943 = vpop.permute.xlu0 %1942
        %1976 = vst.msk [vmem:[#allocation2 + $0x300] sm:$0xff] %vm627, %v1881
        %1977 = vst.msk [vmem:[#allocation2 + $0x318] sm:$0xff] %vm627, %v1883
        %1978 = vst.msk [vmem:[#allocation2 + $0x330] sm:$0xff] %vm627, %v1885
        %1979 = vst.msk [vmem:[#allocation2 + $0x348] sm:$0xff] %vm627, %v1887
        %1980 = vst.msk [vmem:[#allocation2 + $0x360] sm:$0xff] %vm627, %v1889
        %1981 = vst.msk [vmem:[#allocation2 + $0x378] sm:$0xff] %vm627, %v1891
        %1982 = vst.msk [vmem:[#allocation2 + $0x390] sm:$0xff] %vm627, %v1893
        %1983 = vst.msk [vmem:[#allocation2 + $0x3a8] sm:$0xff] %vm627, %v1895
        %1984 = vst.msk [vmem:[#allocation2 + $0x3c0] sm:$0xff] %vm627, %v1897
        %1985 = vst.msk [vmem:[#allocation2 + $0x3d8] sm:$0xff] %vm627, %v1899
        %1986 = vst.msk [vmem:[#allocation2 + $0x3f0] sm:$0xff] %vm627, %v1901
        %1987 = vst.msk [vmem:[#allocation2 + $0x408] sm:$0xff] %vm627, %v1903
        %1988 = vst.msk [vmem:[#allocation2 + $0x420] sm:$0xff] %vm627, %v1905
        %1989 = vst.msk [vmem:[#allocation2 + $0x438] sm:$0xff] %vm627, %v1907
        %1990 = vst.msk [vmem:[#allocation2 + $0x450] sm:$0xff] %vm627, %v1909
        %1991 = vst.msk [vmem:[#allocation2 + $0x468] sm:$0xff] %vm627, %v1911
        %1992 = vst.msk [vmem:[#allocation2 + $0x480] sm:$0xff] %vm627, %v1913
        %1993 = vst.msk [vmem:[#allocation2 + $0x498] sm:$0xff] %vm627, %v1915
        %1994 = vst.msk [vmem:[#allocation2 + $0x4b0] sm:$0xff] %vm627, %v1917
        %1995 = vst.msk [vmem:[#allocation2 + $0x4c8] sm:$0xff] %vm627, %v1919
        %1996 = vst.msk [vmem:[#allocation2 + $0x4e0] sm:$0xff] %vm627, %v1921
        %1997 = vst.msk [vmem:[#allocation2 + $0x4f8] sm:$0xff] %vm627, %v1923
        %1998 = vst.msk [vmem:[#allocation2 + $0x510] sm:$0xff] %vm627, %v1925
        %1999 = vst.msk [vmem:[#allocation2 + $0x528] sm:$0xff] %vm627, %v1927
        %2000 = vst.msk [vmem:[#allocation2 + $0x540] sm:$0xff] %vm627, %v1929
        %2001 = vst.msk [vmem:[#allocation2 + $0x558] sm:$0xff] %vm627, %v1931
        %2002 = vst.msk [vmem:[#allocation2 + $0x570] sm:$0xff] %vm627, %v1933
        %2003 = vst.msk [vmem:[#allocation2 + $0x588] sm:$0xff] %vm627, %v1935
        %2004 = vst.msk [vmem:[#allocation2 + $0x5a0] sm:$0xff] %vm627, %v1937
        %2005 = vst.msk [vmem:[#allocation2 + $0x5b8] sm:$0xff] %vm627, %v1939
        %2006 = vst.msk [vmem:[#allocation2 + $0x5d0] sm:$0xff] %vm627, %v1941
        %2007 = vst.msk [vmem:[#allocation2 + $0x5e8] sm:$0xff] %vm627, %v1943
        %s2008 = scalar_lea.vmem %s198, 456
        %v2009 = vld [vmem:[%s2008] sm:$0xff]
        %v2010 = vld [vmem:[%s2008 + $0x8] sm:$0xff]
        %v2011 = vld [vmem:[%s2008 + $0x18] sm:$0xff]
        %v2012 = vld [vmem:[%s2008 + $0x20] sm:$0xff]
        %v2013 = vld [vmem:[%s2008 + $0x30] sm:$0xff]
        %v2014 = vld [vmem:[%s2008 + $0x38] sm:$0xff]
        %v2015 = vld [vmem:[%s2008 + $0x48] sm:$0xff]
        %v2016 = vld [vmem:[%s2008 + $0x50] sm:$0xff]
        %v2017 = vld [vmem:[%s2008 + $0x60] sm:$0xff]
        %v2018 = vld [vmem:[%s2008 + $0x68] sm:$0xff]
        %v2019 = vld [vmem:[%s2008 + $0x78] sm:$0xff]
        %v2020 = vld [vmem:[%s2008 + $0x80] sm:$0xff]
        %v2021 = vld [vmem:[%s2008 + $0x90] sm:$0xff]
        %v2022 = vld [vmem:[%s2008 + $0x98] sm:$0xff]
        %v2023 = vld [vmem:[%s2008 + $0xa8] sm:$0xff]
        %v2024 = vld [vmem:[%s2008 + $0xb0] sm:$0xff]
        %v2025 = vld [vmem:[%s2008 + $0xc0] sm:$0xff]
        %v2026 = vld [vmem:[%s2008 + $0xc8] sm:$0xff]
        %v2027 = vld [vmem:[%s2008 + $0xd8] sm:$0xff]
        %v2028 = vld [vmem:[%s2008 + $0xe0] sm:$0xff]
        %v2029 = vld [vmem:[%s2008 + $0xf0] sm:$0xff]
        %v2030 = vld [vmem:[%s2008 + $0xf8] sm:$0xff]
        %v2031 = vld [vmem:[%s2008 + $0x108] sm:$0xff]
        %v2032 = vld [vmem:[%s2008 + $0x110] sm:$0xff]
        %v2033 = vld [vmem:[%s2008 + $0x120] sm:$0xff]
        %v2034 = vld [vmem:[%s2008 + $0x128] sm:$0xff]
        %v2035 = vld [vmem:[%s2008 + $0x138] sm:$0xff]
        %v2036 = vld [vmem:[%s2008 + $0x140] sm:$0xff]
        %v2037 = vld [vmem:[%s2008 + $0x150] sm:$0xff]
        %v2038 = vld [vmem:[%s2008 + $0x158] sm:$0xff]
        %v2039 = vld [vmem:[%s2008 + $0x168] sm:$0xff]
        %v2040 = vld [vmem:[%s2008 + $0x170] sm:$0xff]
        %2073 = vrot.lane.b32.xlu0 %v2009, 96
        %v2074 = vpop.permute.xlu0 %2073
        %2075 = vrot.lane.b32.xlu0 %v2010, 96
        %v2076 = vpop.permute.xlu0 %2075
        %2077 = vrot.lane.b32.xlu0 %v2011, 96
        %v2078 = vpop.permute.xlu0 %2077
        %2079 = vrot.lane.b32.xlu0 %v2012, 96
        %v2080 = vpop.permute.xlu0 %2079
        %2081 = vrot.lane.b32.xlu0 %v2013, 96
        %v2082 = vpop.permute.xlu0 %2081
        %2083 = vrot.lane.b32.xlu0 %v2014, 96
        %v2084 = vpop.permute.xlu0 %2083
        %2085 = vrot.lane.b32.xlu0 %v2015, 96
        %v2086 = vpop.permute.xlu0 %2085
        %2087 = vrot.lane.b32.xlu0 %v2016, 96
        %v2088 = vpop.permute.xlu0 %2087
        %2089 = vrot.lane.b32.xlu0 %v2017, 96
        %v2090 = vpop.permute.xlu0 %2089
        %2091 = vrot.lane.b32.xlu0 %v2018, 96
        %v2092 = vpop.permute.xlu0 %2091
        %2093 = vrot.lane.b32.xlu0 %v2019, 96
        %v2094 = vpop.permute.xlu0 %2093
        %2095 = vrot.lane.b32.xlu0 %v2020, 96
        %v2096 = vpop.permute.xlu0 %2095
        %2097 = vrot.lane.b32.xlu0 %v2021, 96
        %v2098 = vpop.permute.xlu0 %2097
        %2099 = vrot.lane.b32.xlu0 %v2022, 96
        %v2100 = vpop.permute.xlu0 %2099
        %2101 = vrot.lane.b32.xlu0 %v2023, 96
        %v2102 = vpop.permute.xlu0 %2101
        %2103 = vrot.lane.b32.xlu0 %v2024, 96
        %v2104 = vpop.permute.xlu0 %2103
        %2105 = vrot.lane.b32.xlu0 %v2025, 96
        %v2106 = vpop.permute.xlu0 %2105
        %2107 = vrot.lane.b32.xlu0 %v2026, 96
        %v2108 = vpop.permute.xlu0 %2107
        %2109 = vrot.lane.b32.xlu0 %v2027, 96
        %v2110 = vpop.permute.xlu0 %2109
        %2111 = vrot.lane.b32.xlu0 %v2028, 96
        %v2112 = vpop.permute.xlu0 %2111
        %2113 = vrot.lane.b32.xlu0 %v2029, 96
        %v2114 = vpop.permute.xlu0 %2113
        %2115 = vrot.lane.b32.xlu0 %v2030, 96
        %v2116 = vpop.permute.xlu0 %2115
        %2117 = vrot.lane.b32.xlu0 %v2031, 96
        %v2118 = vpop.permute.xlu0 %2117
        %2119 = vrot.lane.b32.xlu0 %v2032, 96
        %v2120 = vpop.permute.xlu0 %2119
        %2121 = vrot.lane.b32.xlu0 %v2033, 96
        %v2122 = vpop.permute.xlu0 %2121
        %2123 = vrot.lane.b32.xlu0 %v2034, 96
        %v2124 = vpop.permute.xlu0 %2123
        %2125 = vrot.lane.b32.xlu0 %v2035, 96
        %v2126 = vpop.permute.xlu0 %2125
        %2127 = vrot.lane.b32.xlu0 %v2036, 96
        %v2128 = vpop.permute.xlu0 %2127
        %2129 = vrot.lane.b32.xlu0 %v2037, 96
        %v2130 = vpop.permute.xlu0 %2129
        %2131 = vrot.lane.b32.xlu0 %v2038, 96
        %v2132 = vpop.permute.xlu0 %2131
        %2133 = vrot.lane.b32.xlu0 %v2039, 96
        %v2134 = vpop.permute.xlu0 %2133
        %2135 = vrot.lane.b32.xlu0 %v2040, 96
        %v2136 = vpop.permute.xlu0 %2135
        %2169 = vst.msk [vmem:[#allocation2 + $0x300] sm:$0xff] %vm821, %v2074
        %2170 = vst.msk [vmem:[#allocation2 + $0x318] sm:$0xff] %vm821, %v2076
        %2171 = vst.msk [vmem:[#allocation2 + $0x330] sm:$0xff] %vm821, %v2078
        %2172 = vst.msk [vmem:[#allocation2 + $0x348] sm:$0xff] %vm821, %v2080
        %2173 = vst.msk [vmem:[#allocation2 + $0x360] sm:$0xff] %vm821, %v2082
        %2174 = vst.msk [vmem:[#allocation2 + $0x378] sm:$0xff] %vm821, %v2084
        %2175 = vst.msk [vmem:[#allocation2 + $0x390] sm:$0xff] %vm821, %v2086
        %2176 = vst.msk [vmem:[#allocation2 + $0x3a8] sm:$0xff] %vm821, %v2088
        %2177 = vst.msk [vmem:[#allocation2 + $0x3c0] sm:$0xff] %vm821, %v2090
        %2178 = vst.msk [vmem:[#allocation2 + $0x3d8] sm:$0xff] %vm821, %v2092
        %2179 = vst.msk [vmem:[#allocation2 + $0x3f0] sm:$0xff] %vm821, %v2094
        %2180 = vst.msk [vmem:[#allocation2 + $0x408] sm:$0xff] %vm821, %v2096
        %2181 = vst.msk [vmem:[#allocation2 + $0x420] sm:$0xff] %vm821, %v2098
        %2182 = vst.msk [vmem:[#allocation2 + $0x438] sm:$0xff] %vm821, %v2100
        %2183 = vst.msk [vmem:[#allocation2 + $0x450] sm:$0xff] %vm821, %v2102
        %2184 = vst.msk [vmem:[#allocation2 + $0x468] sm:$0xff] %vm821, %v2104
        %2185 = vst.msk [vmem:[#allocation2 + $0x480] sm:$0xff] %vm821, %v2106
        %2186 = vst.msk [vmem:[#allocation2 + $0x498] sm:$0xff] %vm821, %v2108
        %2187 = vst.msk [vmem:[#allocation2 + $0x4b0] sm:$0xff] %vm821, %v2110
        %2188 = vst.msk [vmem:[#allocation2 + $0x4c8] sm:$0xff] %vm821, %v2112
        %2189 = vst.msk [vmem:[#allocation2 + $0x4e0] sm:$0xff] %vm821, %v2114
        %2190 = vst.msk [vmem:[#allocation2 + $0x4f8] sm:$0xff] %vm821, %v2116
        %2191 = vst.msk [vmem:[#allocation2 + $0x510] sm:$0xff] %vm821, %v2118
        %2192 = vst.msk [vmem:[#allocation2 + $0x528] sm:$0xff] %vm821, %v2120
        %2193 = vst.msk [vmem:[#allocation2 + $0x540] sm:$0xff] %vm821, %v2122
        %2194 = vst.msk [vmem:[#allocation2 + $0x558] sm:$0xff] %vm821, %v2124
        %2195 = vst.msk [vmem:[#allocation2 + $0x570] sm:$0xff] %vm821, %v2126
        %2196 = vst.msk [vmem:[#allocation2 + $0x588] sm:$0xff] %vm821, %v2128
        %2197 = vst.msk [vmem:[#allocation2 + $0x5a0] sm:$0xff] %vm821, %v2130
        %2198 = vst.msk [vmem:[#allocation2 + $0x5b8] sm:$0xff] %vm821, %v2132
        %2199 = vst.msk [vmem:[#allocation2 + $0x5d0] sm:$0xff] %vm821, %v2134
        %2200 = vst.msk [vmem:[#allocation2 + $0x5e8] sm:$0xff] %vm821, %v2136
        %v2201 = vld [vmem:[%s2008 + $0x1] sm:$0xff]
        %v2202 = vld [vmem:[%s2008 + $0x9] sm:$0xff]
        %v2203 = vld [vmem:[%s2008 + $0x19] sm:$0xff]
        %v2204 = vld [vmem:[%s2008 + $0x21] sm:$0xff]
        %v2205 = vld [vmem:[%s2008 + $0x31] sm:$0xff]
        %v2206 = vld [vmem:[%s2008 + $0x39] sm:$0xff]
        %v2207 = vld [vmem:[%s2008 + $0x49] sm:$0xff]
        %v2208 = vld [vmem:[%s2008 + $0x51] sm:$0xff]
        %v2209 = vld [vmem:[%s2008 + $0x61] sm:$0xff]
        %v2210 = vld [vmem:[%s2008 + $0x69] sm:$0xff]
        %v2211 = vld [vmem:[%s2008 + $0x79] sm:$0xff]
        %v2212 = vld [vmem:[%s2008 + $0x81] sm:$0xff]
        %v2213 = vld [vmem:[%s2008 + $0x91] sm:$0xff]
        %v2214 = vld [vmem:[%s2008 + $0x99] sm:$0xff]
        %v2215 = vld [vmem:[%s2008 + $0xa9] sm:$0xff]
        %v2216 = vld [vmem:[%s2008 + $0xb1] sm:$0xff]
        %v2217 = vld [vmem:[%s2008 + $0xc1] sm:$0xff]
        %v2218 = vld [vmem:[%s2008 + $0xc9] sm:$0xff]
        %v2219 = vld [vmem:[%s2008 + $0xd9] sm:$0xff]
        %v2220 = vld [vmem:[%s2008 + $0xe1] sm:$0xff]
        %v2221 = vld [vmem:[%s2008 + $0xf1] sm:$0xff]
        %v2222 = vld [vmem:[%s2008 + $0xf9] sm:$0xff]
        %v2223 = vld [vmem:[%s2008 + $0x109] sm:$0xff]
        %v2224 = vld [vmem:[%s2008 + $0x111] sm:$0xff]
        %v2225 = vld [vmem:[%s2008 + $0x121] sm:$0xff]
        %v2226 = vld [vmem:[%s2008 + $0x129] sm:$0xff]
        %v2227 = vld [vmem:[%s2008 + $0x139] sm:$0xff]
        %v2228 = vld [vmem:[%s2008 + $0x141] sm:$0xff]
        %v2229 = vld [vmem:[%s2008 + $0x151] sm:$0xff]
        %v2230 = vld [vmem:[%s2008 + $0x159] sm:$0xff]
        %v2231 = vld [vmem:[%s2008 + $0x169] sm:$0xff]
        %v2232 = vld [vmem:[%s2008 + $0x171] sm:$0xff]
        %2233 = vst.msk [vmem:[#allocation2 + $0x308] sm:$0xff] %vm241, %v2201
        %2234 = vst.msk [vmem:[#allocation2 + $0x320] sm:$0xff] %vm241, %v2202
        %2235 = vst.msk [vmem:[#allocation2 + $0x338] sm:$0xff] %vm241, %v2203
        %2236 = vst.msk [vmem:[#allocation2 + $0x350] sm:$0xff] %vm241, %v2204
        %2237 = vst.msk [vmem:[#allocation2 + $0x368] sm:$0xff] %vm241, %v2205
        %2238 = vst.msk [vmem:[#allocation2 + $0x380] sm:$0xff] %vm241, %v2206
        %2239 = vst.msk [vmem:[#allocation2 + $0x398] sm:$0xff] %vm241, %v2207
        %2240 = vst.msk [vmem:[#allocation2 + $0x3b0] sm:$0xff] %vm241, %v2208
        %2241 = vst.msk [vmem:[#allocation2 + $0x3c8] sm:$0xff] %vm241, %v2209
        %2242 = vst.msk [vmem:[#allocation2 + $0x3e0] sm:$0xff] %vm241, %v2210
        %2243 = vst.msk [vmem:[#allocation2 + $0x3f8] sm:$0xff] %vm241, %v2211
        %2244 = vst.msk [vmem:[#allocation2 + $0x410] sm:$0xff] %vm241, %v2212
        %2245 = vst.msk [vmem:[#allocation2 + $0x428] sm:$0xff] %vm241, %v2213
        %2246 = vst.msk [vmem:[#allocation2 + $0x440] sm:$0xff] %vm241, %v2214
        %2247 = vst.msk [vmem:[#allocation2 + $0x458] sm:$0xff] %vm241, %v2215
        %2248 = vst.msk [vmem:[#allocation2 + $0x470] sm:$0xff] %vm241, %v2216
        %2249 = vst.msk [vmem:[#allocation2 + $0x488] sm:$0xff] %vm241, %v2217
        %2250 = vst.msk [vmem:[#allocation2 + $0x4a0] sm:$0xff] %vm241, %v2218
        %2251 = vst.msk [vmem:[#allocation2 + $0x4b8] sm:$0xff] %vm241, %v2219
        %2252 = vst.msk [vmem:[#allocation2 + $0x4d0] sm:$0xff] %vm241, %v2220
        %2253 = vst.msk [vmem:[#allocation2 + $0x4e8] sm:$0xff] %vm241, %v2221
        %2254 = vst.msk [vmem:[#allocation2 + $0x500] sm:$0xff] %vm241, %v2222
        %2255 = vst.msk [vmem:[#allocation2 + $0x518] sm:$0xff] %vm241, %v2223
        %2256 = vst.msk [vmem:[#allocation2 + $0x530] sm:$0xff] %vm241, %v2224
        %2257 = vst.msk [vmem:[#allocation2 + $0x548] sm:$0xff] %vm241, %v2225
        %2258 = vst.msk [vmem:[#allocation2 + $0x560] sm:$0xff] %vm241, %v2226
        %2259 = vst.msk [vmem:[#allocation2 + $0x578] sm:$0xff] %vm241, %v2227
        %2260 = vst.msk [vmem:[#allocation2 + $0x590] sm:$0xff] %vm241, %v2228
        %2261 = vst.msk [vmem:[#allocation2 + $0x5a8] sm:$0xff] %vm241, %v2229
        %2262 = vst.msk [vmem:[#allocation2 + $0x5c0] sm:$0xff] %vm241, %v2230
        %2263 = vst.msk [vmem:[#allocation2 + $0x5d8] sm:$0xff] %vm241, %v2231
        %2264 = vst.msk [vmem:[#allocation2 + $0x5f0] sm:$0xff] %vm241, %v2232
        %v2265 = vld [vmem:[%s2008 + $0x2] sm:$0xff]
        %v2266 = vld [vmem:[%s2008 + $0xa] sm:$0xff]
        %v2267 = vld [vmem:[%s2008 + $0x1a] sm:$0xff]
        %v2268 = vld [vmem:[%s2008 + $0x22] sm:$0xff]
        %v2269 = vld [vmem:[%s2008 + $0x32] sm:$0xff]
        %v2270 = vld [vmem:[%s2008 + $0x3a] sm:$0xff]
        %v2271 = vld [vmem:[%s2008 + $0x4a] sm:$0xff]
        %v2272 = vld [vmem:[%s2008 + $0x52] sm:$0xff]
        %v2273 = vld [vmem:[%s2008 + $0x62] sm:$0xff]
        %v2274 = vld [vmem:[%s2008 + $0x6a] sm:$0xff]
        %v2275 = vld [vmem:[%s2008 + $0x7a] sm:$0xff]
        %v2276 = vld [vmem:[%s2008 + $0x82] sm:$0xff]
        %v2277 = vld [vmem:[%s2008 + $0x92] sm:$0xff]
        %v2278 = vld [vmem:[%s2008 + $0x9a] sm:$0xff]
        %v2279 = vld [vmem:[%s2008 + $0xaa] sm:$0xff]
        %v2280 = vld [vmem:[%s2008 + $0xb2] sm:$0xff]
        %v2281 = vld [vmem:[%s2008 + $0xc2] sm:$0xff]
        %v2282 = vld [vmem:[%s2008 + $0xca] sm:$0xff]
        %v2283 = vld [vmem:[%s2008 + $0xda] sm:$0xff]
        %v2284 = vld [vmem:[%s2008 + $0xe2] sm:$0xff]
        %v2285 = vld [vmem:[%s2008 + $0xf2] sm:$0xff]
        %v2286 = vld [vmem:[%s2008 + $0xfa] sm:$0xff]
        %v2287 = vld [vmem:[%s2008 + $0x10a] sm:$0xff]
        %v2288 = vld [vmem:[%s2008 + $0x112] sm:$0xff]
        %v2289 = vld [vmem:[%s2008 + $0x122] sm:$0xff]
        %v2290 = vld [vmem:[%s2008 + $0x12a] sm:$0xff]
        %v2291 = vld [vmem:[%s2008 + $0x13a] sm:$0xff]
        %v2292 = vld [vmem:[%s2008 + $0x142] sm:$0xff]
        %v2293 = vld [vmem:[%s2008 + $0x152] sm:$0xff]
        %v2294 = vld [vmem:[%s2008 + $0x15a] sm:$0xff]
        %v2295 = vld [vmem:[%s2008 + $0x16a] sm:$0xff]
        %v2296 = vld [vmem:[%s2008 + $0x172] sm:$0xff]
        %2329 = vrot.lane.b32.xlu0 %v2265, 32
        %v2330 = vpop.permute.xlu0 %2329
        %2331 = vrot.lane.b32.xlu0 %v2266, 32
        %v2332 = vpop.permute.xlu0 %2331
        %2333 = vrot.lane.b32.xlu0 %v2267, 32
        %v2334 = vpop.permute.xlu0 %2333
        %2335 = vrot.lane.b32.xlu0 %v2268, 32
        %v2336 = vpop.permute.xlu0 %2335
        %2337 = vrot.lane.b32.xlu0 %v2269, 32
        %v2338 = vpop.permute.xlu0 %2337
        %2339 = vrot.lane.b32.xlu0 %v2270, 32
        %v2340 = vpop.permute.xlu0 %2339
        %2341 = vrot.lane.b32.xlu0 %v2271, 32
        %v2342 = vpop.permute.xlu0 %2341
        %2343 = vrot.lane.b32.xlu0 %v2272, 32
        %v2344 = vpop.permute.xlu0 %2343
        %2345 = vrot.lane.b32.xlu0 %v2273, 32
        %v2346 = vpop.permute.xlu0 %2345
        %2347 = vrot.lane.b32.xlu0 %v2274, 32
        %v2348 = vpop.permute.xlu0 %2347
        %2349 = vrot.lane.b32.xlu0 %v2275, 32
        %v2350 = vpop.permute.xlu0 %2349
        %2351 = vrot.lane.b32.xlu0 %v2276, 32
        %v2352 = vpop.permute.xlu0 %2351
        %2353 = vrot.lane.b32.xlu0 %v2277, 32
        %v2354 = vpop.permute.xlu0 %2353
        %2355 = vrot.lane.b32.xlu0 %v2278, 32
        %v2356 = vpop.permute.xlu0 %2355
        %2357 = vrot.lane.b32.xlu0 %v2279, 32
        %v2358 = vpop.permute.xlu0 %2357
        %2359 = vrot.lane.b32.xlu0 %v2280, 32
        %v2360 = vpop.permute.xlu0 %2359
        %2361 = vrot.lane.b32.xlu0 %v2281, 32
        %v2362 = vpop.permute.xlu0 %2361
        %2363 = vrot.lane.b32.xlu0 %v2282, 32
        %v2364 = vpop.permute.xlu0 %2363
        %2365 = vrot.lane.b32.xlu0 %v2283, 32
        %v2366 = vpop.permute.xlu0 %2365
        %2367 = vrot.lane.b32.xlu0 %v2284, 32
        %v2368 = vpop.permute.xlu0 %2367
        %2369 = vrot.lane.b32.xlu0 %v2285, 32
        %v2370 = vpop.permute.xlu0 %2369
        %2371 = vrot.lane.b32.xlu0 %v2286, 32
        %v2372 = vpop.permute.xlu0 %2371
        %2373 = vrot.lane.b32.xlu0 %v2287, 32
        %v2374 = vpop.permute.xlu0 %2373
        %2375 = vrot.lane.b32.xlu0 %v2288, 32
        %v2376 = vpop.permute.xlu0 %2375
        %2377 = vrot.lane.b32.xlu0 %v2289, 32
        %v2378 = vpop.permute.xlu0 %2377
        %2379 = vrot.lane.b32.xlu0 %v2290, 32
        %v2380 = vpop.permute.xlu0 %2379
        %2381 = vrot.lane.b32.xlu0 %v2291, 32
        %v2382 = vpop.permute.xlu0 %2381
        %2383 = vrot.lane.b32.xlu0 %v2292, 32
        %v2384 = vpop.permute.xlu0 %2383
        %2385 = vrot.lane.b32.xlu0 %v2293, 32
        %v2386 = vpop.permute.xlu0 %2385
        %2387 = vrot.lane.b32.xlu0 %v2294, 32
        %v2388 = vpop.permute.xlu0 %2387
        %2389 = vrot.lane.b32.xlu0 %v2295, 32
        %v2390 = vpop.permute.xlu0 %2389
        %2391 = vrot.lane.b32.xlu0 %v2296, 32
        %v2392 = vpop.permute.xlu0 %2391
        %2425 = vst.msk [vmem:[#allocation2 + $0x308] sm:$0xff] %vm434, %v2330
        %2426 = vst.msk [vmem:[#allocation2 + $0x320] sm:$0xff] %vm434, %v2332
        %2427 = vst.msk [vmem:[#allocation2 + $0x338] sm:$0xff] %vm434, %v2334
        %2428 = vst.msk [vmem:[#allocation2 + $0x350] sm:$0xff] %vm434, %v2336
        %2429 = vst.msk [vmem:[#allocation2 + $0x368] sm:$0xff] %vm434, %v2338
        %2430 = vst.msk [vmem:[#allocation2 + $0x380] sm:$0xff] %vm434, %v2340
        %2431 = vst.msk [vmem:[#allocation2 + $0x398] sm:$0xff] %vm434, %v2342
        %2432 = vst.msk [vmem:[#allocation2 + $0x3b0] sm:$0xff] %vm434, %v2344
        %2433 = vst.msk [vmem:[#allocation2 + $0x3c8] sm:$0xff] %vm434, %v2346
        %2434 = vst.msk [vmem:[#allocation2 + $0x3e0] sm:$0xff] %vm434, %v2348
        %2435 = vst.msk [vmem:[#allocation2 + $0x3f8] sm:$0xff] %vm434, %v2350
        %2436 = vst.msk [vmem:[#allocation2 + $0x410] sm:$0xff] %vm434, %v2352
        %2437 = vst.msk [vmem:[#allocation2 + $0x428] sm:$0xff] %vm434, %v2354
        %2438 = vst.msk [vmem:[#allocation2 + $0x440] sm:$0xff] %vm434, %v2356
        %2439 = vst.msk [vmem:[#allocation2 + $0x458] sm:$0xff] %vm434, %v2358
        %2440 = vst.msk [vmem:[#allocation2 + $0x470] sm:$0xff] %vm434, %v2360
        %2441 = vst.msk [vmem:[#allocation2 + $0x488] sm:$0xff] %vm434, %v2362
        %2442 = vst.msk [vmem:[#allocation2 + $0x4a0] sm:$0xff] %vm434, %v2364
        %2443 = vst.msk [vmem:[#allocation2 + $0x4b8] sm:$0xff] %vm434, %v2366
        %2444 = vst.msk [vmem:[#allocation2 + $0x4d0] sm:$0xff] %vm434, %v2368
        %2445 = vst.msk [vmem:[#allocation2 + $0x4e8] sm:$0xff] %vm434, %v2370
        %2446 = vst.msk [vmem:[#allocation2 + $0x500] sm:$0xff] %vm434, %v2372
        %2447 = vst.msk [vmem:[#allocation2 + $0x518] sm:$0xff] %vm434, %v2374
        %2448 = vst.msk [vmem:[#allocation2 + $0x530] sm:$0xff] %vm434, %v2376
        %2449 = vst.msk [vmem:[#allocation2 + $0x548] sm:$0xff] %vm434, %v2378
        %2450 = vst.msk [vmem:[#allocation2 + $0x560] sm:$0xff] %vm434, %v2380
        %2451 = vst.msk [vmem:[#allocation2 + $0x578] sm:$0xff] %vm434, %v2382
        %2452 = vst.msk [vmem:[#allocation2 + $0x590] sm:$0xff] %vm434, %v2384
        %2453 = vst.msk [vmem:[#allocation2 + $0x5a8] sm:$0xff] %vm434, %v2386
        %2454 = vst.msk [vmem:[#allocation2 + $0x5c0] sm:$0xff] %vm434, %v2388
        %2455 = vst.msk [vmem:[#allocation2 + $0x5d8] sm:$0xff] %vm434, %v2390
        %2456 = vst.msk [vmem:[#allocation2 + $0x5f0] sm:$0xff] %vm434, %v2392
        %s2457 = scalar_lea.vmem %s198, 480
        %v2458 = vld [vmem:[%s2457] sm:$0xff]
        %v2459 = vld [vmem:[%s2457 + $0x8] sm:$0xff]
        %v2460 = vld [vmem:[%s2457 + $0x18] sm:$0xff]
        %v2461 = vld [vmem:[%s2457 + $0x20] sm:$0xff]
        %v2462 = vld [vmem:[%s2457 + $0x30] sm:$0xff]
        %v2463 = vld [vmem:[%s2457 + $0x38] sm:$0xff]
        %v2464 = vld [vmem:[%s2457 + $0x48] sm:$0xff]
        %v2465 = vld [vmem:[%s2457 + $0x50] sm:$0xff]
        %v2466 = vld [vmem:[%s2457 + $0x60] sm:$0xff]
        %v2467 = vld [vmem:[%s2457 + $0x68] sm:$0xff]
        %v2468 = vld [vmem:[%s2457 + $0x78] sm:$0xff]
        %v2469 = vld [vmem:[%s2457 + $0x80] sm:$0xff]
        %v2470 = vld [vmem:[%s2457 + $0x90] sm:$0xff]
        %v2471 = vld [vmem:[%s2457 + $0x98] sm:$0xff]
        %v2472 = vld [vmem:[%s2457 + $0xa8] sm:$0xff]
        %v2473 = vld [vmem:[%s2457 + $0xb0] sm:$0xff]
        %v2474 = vld [vmem:[%s2457 + $0xc0] sm:$0xff]
        %v2475 = vld [vmem:[%s2457 + $0xc8] sm:$0xff]
        %v2476 = vld [vmem:[%s2457 + $0xd8] sm:$0xff]
        %v2477 = vld [vmem:[%s2457 + $0xe0] sm:$0xff]
        %v2478 = vld [vmem:[%s2457 + $0xf0] sm:$0xff]
        %v2479 = vld [vmem:[%s2457 + $0xf8] sm:$0xff]
        %v2480 = vld [vmem:[%s2457 + $0x108] sm:$0xff]
        %v2481 = vld [vmem:[%s2457 + $0x110] sm:$0xff]
        %v2482 = vld [vmem:[%s2457 + $0x120] sm:$0xff]
        %v2483 = vld [vmem:[%s2457 + $0x128] sm:$0xff]
        %v2484 = vld [vmem:[%s2457 + $0x138] sm:$0xff]
        %v2485 = vld [vmem:[%s2457 + $0x140] sm:$0xff]
        %v2486 = vld [vmem:[%s2457 + $0x150] sm:$0xff]
        %v2487 = vld [vmem:[%s2457 + $0x158] sm:$0xff]
        %v2488 = vld [vmem:[%s2457 + $0x168] sm:$0xff]
        %v2489 = vld [vmem:[%s2457 + $0x170] sm:$0xff]
        %2522 = vrot.lane.b32.xlu0 %v2458, 64
        %v2523 = vpop.permute.xlu0 %2522
        %2524 = vrot.lane.b32.xlu0 %v2459, 64
        %v2525 = vpop.permute.xlu0 %2524
        %2526 = vrot.lane.b32.xlu0 %v2460, 64
        %v2527 = vpop.permute.xlu0 %2526
        %2528 = vrot.lane.b32.xlu0 %v2461, 64
        %v2529 = vpop.permute.xlu0 %2528
        %2530 = vrot.lane.b32.xlu0 %v2462, 64
        %v2531 = vpop.permute.xlu0 %2530
        %2532 = vrot.lane.b32.xlu0 %v2463, 64
        %v2533 = vpop.permute.xlu0 %2532
        %2534 = vrot.lane.b32.xlu0 %v2464, 64
        %v2535 = vpop.permute.xlu0 %2534
        %2536 = vrot.lane.b32.xlu0 %v2465, 64
        %v2537 = vpop.permute.xlu0 %2536
        %2538 = vrot.lane.b32.xlu0 %v2466, 64
        %v2539 = vpop.permute.xlu0 %2538
        %2540 = vrot.lane.b32.xlu0 %v2467, 64
        %v2541 = vpop.permute.xlu0 %2540
        %2542 = vrot.lane.b32.xlu0 %v2468, 64
        %v2543 = vpop.permute.xlu0 %2542
        %2544 = vrot.lane.b32.xlu0 %v2469, 64
        %v2545 = vpop.permute.xlu0 %2544
        %2546 = vrot.lane.b32.xlu0 %v2470, 64
        %v2547 = vpop.permute.xlu0 %2546
        %2548 = vrot.lane.b32.xlu0 %v2471, 64
        %v2549 = vpop.permute.xlu0 %2548
        %2550 = vrot.lane.b32.xlu0 %v2472, 64
        %v2551 = vpop.permute.xlu0 %2550
        %2552 = vrot.lane.b32.xlu0 %v2473, 64
        %v2553 = vpop.permute.xlu0 %2552
        %2554 = vrot.lane.b32.xlu0 %v2474, 64
        %v2555 = vpop.permute.xlu0 %2554
        %2556 = vrot.lane.b32.xlu0 %v2475, 64
        %v2557 = vpop.permute.xlu0 %2556
        %2558 = vrot.lane.b32.xlu0 %v2476, 64
        %v2559 = vpop.permute.xlu0 %2558
        %2560 = vrot.lane.b32.xlu0 %v2477, 64
        %v2561 = vpop.permute.xlu0 %2560
        %2562 = vrot.lane.b32.xlu0 %v2478, 64
        %v2563 = vpop.permute.xlu0 %2562
        %2564 = vrot.lane.b32.xlu0 %v2479, 64
        %v2565 = vpop.permute.xlu0 %2564
        %2566 = vrot.lane.b32.xlu0 %v2480, 64
        %v2567 = vpop.permute.xlu0 %2566
        %2568 = vrot.lane.b32.xlu0 %v2481, 64
        %v2569 = vpop.permute.xlu0 %2568
        %2570 = vrot.lane.b32.xlu0 %v2482, 64
        %v2571 = vpop.permute.xlu0 %2570
        %2572 = vrot.lane.b32.xlu0 %v2483, 64
        %v2573 = vpop.permute.xlu0 %2572
        %2574 = vrot.lane.b32.xlu0 %v2484, 64
        %v2575 = vpop.permute.xlu0 %2574
        %2576 = vrot.lane.b32.xlu0 %v2485, 64
        %v2577 = vpop.permute.xlu0 %2576
        %2578 = vrot.lane.b32.xlu0 %v2486, 64
        %v2579 = vpop.permute.xlu0 %2578
        %2580 = vrot.lane.b32.xlu0 %v2487, 64
        %v2581 = vpop.permute.xlu0 %2580
        %2582 = vrot.lane.b32.xlu0 %v2488, 64
        %v2583 = vpop.permute.xlu0 %2582
        %2584 = vrot.lane.b32.xlu0 %v2489, 64
        %v2585 = vpop.permute.xlu0 %2584
        %2618 = vst.msk [vmem:[#allocation2 + $0x308] sm:$0xff] %vm627, %v2523
        %2619 = vst.msk [vmem:[#allocation2 + $0x320] sm:$0xff] %vm627, %v2525
        %2620 = vst.msk [vmem:[#allocation2 + $0x338] sm:$0xff] %vm627, %v2527
        %2621 = vst.msk [vmem:[#allocation2 + $0x350] sm:$0xff] %vm627, %v2529
        %2622 = vst.msk [vmem:[#allocation2 + $0x368] sm:$0xff] %vm627, %v2531
        %2623 = vst.msk [vmem:[#allocation2 + $0x380] sm:$0xff] %vm627, %v2533
        %2624 = vst.msk [vmem:[#allocation2 + $0x398] sm:$0xff] %vm627, %v2535
        %2625 = vst.msk [vmem:[#allocation2 + $0x3b0] sm:$0xff] %vm627, %v2537
        %2626 = vst.msk [vmem:[#allocation2 + $0x3c8] sm:$0xff] %vm627, %v2539
        %2627 = vst.msk [vmem:[#allocation2 + $0x3e0] sm:$0xff] %vm627, %v2541
        %2628 = vst.msk [vmem:[#allocation2 + $0x3f8] sm:$0xff] %vm627, %v2543
        %2629 = vst.msk [vmem:[#allocation2 + $0x410] sm:$0xff] %vm627, %v2545
        %2630 = vst.msk [vmem:[#allocation2 + $0x428] sm:$0xff] %vm627, %v2547
        %2631 = vst.msk [vmem:[#allocation2 + $0x440] sm:$0xff] %vm627, %v2549
        %2632 = vst.msk [vmem:[#allocation2 + $0x458] sm:$0xff] %vm627, %v2551
        %2633 = vst.msk [vmem:[#allocation2 + $0x470] sm:$0xff] %vm627, %v2553
        %2634 = vst.msk [vmem:[#allocation2 + $0x488] sm:$0xff] %vm627, %v2555
        %2635 = vst.msk [vmem:[#allocation2 + $0x4a0] sm:$0xff] %vm627, %v2557
        %2636 = vst.msk [vmem:[#allocation2 + $0x4b8] sm:$0xff] %vm627, %v2559
        %2637 = vst.msk [vmem:[#allocation2 + $0x4d0] sm:$0xff] %vm627, %v2561
        %2638 = vst.msk [vmem:[#allocation2 + $0x4e8] sm:$0xff] %vm627, %v2563
        %2639 = vst.msk [vmem:[#allocation2 + $0x500] sm:$0xff] %vm627, %v2565
        %2640 = vst.msk [vmem:[#allocation2 + $0x518] sm:$0xff] %vm627, %v2567
        %2641 = vst.msk [vmem:[#allocation2 + $0x530] sm:$0xff] %vm627, %v2569
        %2642 = vst.msk [vmem:[#allocation2 + $0x548] sm:$0xff] %vm627, %v2571
        %2643 = vst.msk [vmem:[#allocation2 + $0x560] sm:$0xff] %vm627, %v2573
        %2644 = vst.msk [vmem:[#allocation2 + $0x578] sm:$0xff] %vm627, %v2575
        %2645 = vst.msk [vmem:[#allocation2 + $0x590] sm:$0xff] %vm627, %v2577
        %2646 = vst.msk [vmem:[#allocation2 + $0x5a8] sm:$0xff] %vm627, %v2579
        %2647 = vst.msk [vmem:[#allocation2 + $0x5c0] sm:$0xff] %vm627, %v2581
        %2648 = vst.msk [vmem:[#allocation2 + $0x5d8] sm:$0xff] %vm627, %v2583
        %2649 = vst.msk [vmem:[#allocation2 + $0x5f0] sm:$0xff] %vm627, %v2585
        %v2650 = vld [vmem:[%s2457 + $0x1] sm:$0xff]
        %v2651 = vld [vmem:[%s2457 + $0x9] sm:$0xff]
        %v2652 = vld [vmem:[%s2457 + $0x19] sm:$0xff]
        %v2653 = vld [vmem:[%s2457 + $0x21] sm:$0xff]
        %v2654 = vld [vmem:[%s2457 + $0x31] sm:$0xff]
        %v2655 = vld [vmem:[%s2457 + $0x39] sm:$0xff]
        %v2656 = vld [vmem:[%s2457 + $0x49] sm:$0xff]
        %v2657 = vld [vmem:[%s2457 + $0x51] sm:$0xff]
        %v2658 = vld [vmem:[%s2457 + $0x61] sm:$0xff]
        %v2659 = vld [vmem:[%s2457 + $0x69] sm:$0xff]
        %v2660 = vld [vmem:[%s2457 + $0x79] sm:$0xff]
        %v2661 = vld [vmem:[%s2457 + $0x81] sm:$0xff]
        %v2662 = vld [vmem:[%s2457 + $0x91] sm:$0xff]
        %v2663 = vld [vmem:[%s2457 + $0x99] sm:$0xff]
        %v2664 = vld [vmem:[%s2457 + $0xa9] sm:$0xff]
        %v2665 = vld [vmem:[%s2457 + $0xb1] sm:$0xff]
        %v2666 = vld [vmem:[%s2457 + $0xc1] sm:$0xff]
        %v2667 = vld [vmem:[%s2457 + $0xc9] sm:$0xff]
        %v2668 = vld [vmem:[%s2457 + $0xd9] sm:$0xff]
        %v2669 = vld [vmem:[%s2457 + $0xe1] sm:$0xff]
        %v2670 = vld [vmem:[%s2457 + $0xf1] sm:$0xff]
        %v2671 = vld [vmem:[%s2457 + $0xf9] sm:$0xff]
        %v2672 = vld [vmem:[%s2457 + $0x109] sm:$0xff]
        %v2673 = vld [vmem:[%s2457 + $0x111] sm:$0xff]
        %v2674 = vld [vmem:[%s2457 + $0x121] sm:$0xff]
        %v2675 = vld [vmem:[%s2457 + $0x129] sm:$0xff]
        %v2676 = vld [vmem:[%s2457 + $0x139] sm:$0xff]
        %v2677 = vld [vmem:[%s2457 + $0x141] sm:$0xff]
        %v2678 = vld [vmem:[%s2457 + $0x151] sm:$0xff]
        %v2679 = vld [vmem:[%s2457 + $0x159] sm:$0xff]
        %v2680 = vld [vmem:[%s2457 + $0x169] sm:$0xff]
        %v2681 = vld [vmem:[%s2457 + $0x171] sm:$0xff]
        %2714 = vrot.lane.b32.xlu0 %v2650, 96
        %v2715 = vpop.permute.xlu0 %2714
        %2716 = vrot.lane.b32.xlu0 %v2651, 96
        %v2717 = vpop.permute.xlu0 %2716
        %2718 = vrot.lane.b32.xlu0 %v2652, 96
        %v2719 = vpop.permute.xlu0 %2718
        %2720 = vrot.lane.b32.xlu0 %v2653, 96
        %v2721 = vpop.permute.xlu0 %2720
        %2722 = vrot.lane.b32.xlu0 %v2654, 96
        %v2723 = vpop.permute.xlu0 %2722
        %2724 = vrot.lane.b32.xlu0 %v2655, 96
        %v2725 = vpop.permute.xlu0 %2724
        %2726 = vrot.lane.b32.xlu0 %v2656, 96
        %v2727 = vpop.permute.xlu0 %2726
        %2728 = vrot.lane.b32.xlu0 %v2657, 96
        %v2729 = vpop.permute.xlu0 %2728
        %2730 = vrot.lane.b32.xlu0 %v2658, 96
        %v2731 = vpop.permute.xlu0 %2730
        %2732 = vrot.lane.b32.xlu0 %v2659, 96
        %v2733 = vpop.permute.xlu0 %2732
        %2734 = vrot.lane.b32.xlu0 %v2660, 96
        %v2735 = vpop.permute.xlu0 %2734
        %2736 = vrot.lane.b32.xlu0 %v2661, 96
        %v2737 = vpop.permute.xlu0 %2736
        %2738 = vrot.lane.b32.xlu0 %v2662, 96
        %v2739 = vpop.permute.xlu0 %2738
        %2740 = vrot.lane.b32.xlu0 %v2663, 96
        %v2741 = vpop.permute.xlu0 %2740
        %2742 = vrot.lane.b32.xlu0 %v2664, 96
        %v2743 = vpop.permute.xlu0 %2742
        %2744 = vrot.lane.b32.xlu0 %v2665, 96
        %v2745 = vpop.permute.xlu0 %2744
        %2746 = vrot.lane.b32.xlu0 %v2666, 96
        %v2747 = vpop.permute.xlu0 %2746
        %2748 = vrot.lane.b32.xlu0 %v2667, 96
        %v2749 = vpop.permute.xlu0 %2748
        %2750 = vrot.lane.b32.xlu0 %v2668, 96
        %v2751 = vpop.permute.xlu0 %2750
        %2752 = vrot.lane.b32.xlu0 %v2669, 96
        %v2753 = vpop.permute.xlu0 %2752
        %2754 = vrot.lane.b32.xlu0 %v2670, 96
        %v2755 = vpop.permute.xlu0 %2754
        %2756 = vrot.lane.b32.xlu0 %v2671, 96
        %v2757 = vpop.permute.xlu0 %2756
        %2758 = vrot.lane.b32.xlu0 %v2672, 96
        %v2759 = vpop.permute.xlu0 %2758
        %2760 = vrot.lane.b32.xlu0 %v2673, 96
        %v2761 = vpop.permute.xlu0 %2760
        %2762 = vrot.lane.b32.xlu0 %v2674, 96
        %v2763 = vpop.permute.xlu0 %2762
        %2764 = vrot.lane.b32.xlu0 %v2675, 96
        %v2765 = vpop.permute.xlu0 %2764
        %2766 = vrot.lane.b32.xlu0 %v2676, 96
        %v2767 = vpop.permute.xlu0 %2766
        %2768 = vrot.lane.b32.xlu0 %v2677, 96
        %v2769 = vpop.permute.xlu0 %2768
        %2770 = vrot.lane.b32.xlu0 %v2678, 96
        %v2771 = vpop.permute.xlu0 %2770
        %2772 = vrot.lane.b32.xlu0 %v2679, 96
        %v2773 = vpop.permute.xlu0 %2772
        %2774 = vrot.lane.b32.xlu0 %v2680, 96
        %v2775 = vpop.permute.xlu0 %2774
        %2776 = vrot.lane.b32.xlu0 %v2681, 96
        %v2777 = vpop.permute.xlu0 %2776
        %2810 = vst.msk [vmem:[#allocation2 + $0x308] sm:$0xff] %vm821, %v2715
        %2811 = vst.msk [vmem:[#allocation2 + $0x320] sm:$0xff] %vm821, %v2717
        %2812 = vst.msk [vmem:[#allocation2 + $0x338] sm:$0xff] %vm821, %v2719
        %2813 = vst.msk [vmem:[#allocation2 + $0x350] sm:$0xff] %vm821, %v2721
        %2814 = vst.msk [vmem:[#allocation2 + $0x368] sm:$0xff] %vm821, %v2723
        %2815 = vst.msk [vmem:[#allocation2 + $0x380] sm:$0xff] %vm821, %v2725
        %2816 = vst.msk [vmem:[#allocation2 + $0x398] sm:$0xff] %vm821, %v2727
        %2817 = vst.msk [vmem:[#allocation2 + $0x3b0] sm:$0xff] %vm821, %v2729
        %2818 = vst.msk [vmem:[#allocation2 + $0x3c8] sm:$0xff] %vm821, %v2731
        %2819 = vst.msk [vmem:[#allocation2 + $0x3e0] sm:$0xff] %vm821, %v2733
        %2820 = vst.msk [vmem:[#allocation2 + $0x3f8] sm:$0xff] %vm821, %v2735
        %2821 = vst.msk [vmem:[#allocation2 + $0x410] sm:$0xff] %vm821, %v2737
        %2822 = vst.msk [vmem:[#allocation2 + $0x428] sm:$0xff] %vm821, %v2739
        %2823 = vst.msk [vmem:[#allocation2 + $0x440] sm:$0xff] %vm821, %v2741
        %2824 = vst.msk [vmem:[#allocation2 + $0x458] sm:$0xff] %vm821, %v2743
        %2825 = vst.msk [vmem:[#allocation2 + $0x470] sm:$0xff] %vm821, %v2745
        %2826 = vst.msk [vmem:[#allocation2 + $0x488] sm:$0xff] %vm821, %v2747
        %2827 = vst.msk [vmem:[#allocation2 + $0x4a0] sm:$0xff] %vm821, %v2749
        %2828 = vst.msk [vmem:[#allocation2 + $0x4b8] sm:$0xff] %vm821, %v2751
        %2829 = vst.msk [vmem:[#allocation2 + $0x4d0] sm:$0xff] %vm821, %v2753
        %2830 = vst.msk [vmem:[#allocation2 + $0x4e8] sm:$0xff] %vm821, %v2755
        %2831 = vst.msk [vmem:[#allocation2 + $0x500] sm:$0xff] %vm821, %v2757
        %2832 = vst.msk [vmem:[#allocation2 + $0x518] sm:$0xff] %vm821, %v2759
        %2833 = vst.msk [vmem:[#allocation2 + $0x530] sm:$0xff] %vm821, %v2761
        %2834 = vst.msk [vmem:[#allocation2 + $0x548] sm:$0xff] %vm821, %v2763
        %2835 = vst.msk [vmem:[#allocation2 + $0x560] sm:$0xff] %vm821, %v2765
        %2836 = vst.msk [vmem:[#allocation2 + $0x578] sm:$0xff] %vm821, %v2767
        %2837 = vst.msk [vmem:[#allocation2 + $0x590] sm:$0xff] %vm821, %v2769
        %2838 = vst.msk [vmem:[#allocation2 + $0x5a8] sm:$0xff] %vm821, %v2771
        %2839 = vst.msk [vmem:[#allocation2 + $0x5c0] sm:$0xff] %vm821, %v2773
        %2840 = vst.msk [vmem:[#allocation2 + $0x5d8] sm:$0xff] %vm821, %v2775
        %2841 = vst.msk [vmem:[#allocation2 + $0x5f0] sm:$0xff] %vm821, %v2777
        %v2842 = vld [vmem:[%s2457 + $0x2] sm:$0xff]
        %v2843 = vld [vmem:[%s2457 + $0xa] sm:$0xff]
        %v2844 = vld [vmem:[%s2457 + $0x1a] sm:$0xff]
        %v2845 = vld [vmem:[%s2457 + $0x22] sm:$0xff]
        %v2846 = vld [vmem:[%s2457 + $0x32] sm:$0xff]
        %v2847 = vld [vmem:[%s2457 + $0x3a] sm:$0xff]
        %v2848 = vld [vmem:[%s2457 + $0x4a] sm:$0xff]
        %v2849 = vld [vmem:[%s2457 + $0x52] sm:$0xff]
        %v2850 = vld [vmem:[%s2457 + $0x62] sm:$0xff]
        %v2851 = vld [vmem:[%s2457 + $0x6a] sm:$0xff]
        %v2852 = vld [vmem:[%s2457 + $0x7a] sm:$0xff]
        %v2853 = vld [vmem:[%s2457 + $0x82] sm:$0xff]
        %v2854 = vld [vmem:[%s2457 + $0x92] sm:$0xff]
        %v2855 = vld [vmem:[%s2457 + $0x9a] sm:$0xff]
        %v2856 = vld [vmem:[%s2457 + $0xaa] sm:$0xff]
        %v2857 = vld [vmem:[%s2457 + $0xb2] sm:$0xff]
        %v2858 = vld [vmem:[%s2457 + $0xc2] sm:$0xff]
        %v2859 = vld [vmem:[%s2457 + $0xca] sm:$0xff]
        %v2860 = vld [vmem:[%s2457 + $0xda] sm:$0xff]
        %v2861 = vld [vmem:[%s2457 + $0xe2] sm:$0xff]
        %v2862 = vld [vmem:[%s2457 + $0xf2] sm:$0xff]
        %v2863 = vld [vmem:[%s2457 + $0xfa] sm:$0xff]
        %v2864 = vld [vmem:[%s2457 + $0x10a] sm:$0xff]
        %v2865 = vld [vmem:[%s2457 + $0x112] sm:$0xff]
        %v2866 = vld [vmem:[%s2457 + $0x122] sm:$0xff]
        %v2867 = vld [vmem:[%s2457 + $0x12a] sm:$0xff]
        %v2868 = vld [vmem:[%s2457 + $0x13a] sm:$0xff]
        %v2869 = vld [vmem:[%s2457 + $0x142] sm:$0xff]
        %v2870 = vld [vmem:[%s2457 + $0x152] sm:$0xff]
        %v2871 = vld [vmem:[%s2457 + $0x15a] sm:$0xff]
        %v2872 = vld [vmem:[%s2457 + $0x16a] sm:$0xff]
        %v2873 = vld [vmem:[%s2457 + $0x172] sm:$0xff]
        %2874 = vst.msk [vmem:[#allocation2 + $0x310] sm:$0xff] %vm241, %v2842
        %2875 = vst.msk [vmem:[#allocation2 + $0x328] sm:$0xff] %vm241, %v2843
        %2876 = vst.msk [vmem:[#allocation2 + $0x340] sm:$0xff] %vm241, %v2844
        %2877 = vst.msk [vmem:[#allocation2 + $0x358] sm:$0xff] %vm241, %v2845
        %2878 = vst.msk [vmem:[#allocation2 + $0x370] sm:$0xff] %vm241, %v2846
        %2879 = vst.msk [vmem:[#allocation2 + $0x388] sm:$0xff] %vm241, %v2847
        %2880 = vst.msk [vmem:[#allocation2 + $0x3a0] sm:$0xff] %vm241, %v2848
        %2881 = vst.msk [vmem:[#allocation2 + $0x3b8] sm:$0xff] %vm241, %v2849
        %2882 = vst.msk [vmem:[#allocation2 + $0x3d0] sm:$0xff] %vm241, %v2850
        %2883 = vst.msk [vmem:[#allocation2 + $0x3e8] sm:$0xff] %vm241, %v2851
        %2884 = vst.msk [vmem:[#allocation2 + $0x400] sm:$0xff] %vm241, %v2852
        %2885 = vst.msk [vmem:[#allocation2 + $0x418] sm:$0xff] %vm241, %v2853
        %2886 = vst.msk [vmem:[#allocation2 + $0x430] sm:$0xff] %vm241, %v2854
        %2887 = vst.msk [vmem:[#allocation2 + $0x448] sm:$0xff] %vm241, %v2855
        %2888 = vst.msk [vmem:[#allocation2 + $0x460] sm:$0xff] %vm241, %v2856
        %2889 = vst.msk [vmem:[#allocation2 + $0x478] sm:$0xff] %vm241, %v2857
        %2890 = vst.msk [vmem:[#allocation2 + $0x490] sm:$0xff] %vm241, %v2858
        %2891 = vst.msk [vmem:[#allocation2 + $0x4a8] sm:$0xff] %vm241, %v2859
        %2892 = vst.msk [vmem:[#allocation2 + $0x4c0] sm:$0xff] %vm241, %v2860
        %2893 = vst.msk [vmem:[#allocation2 + $0x4d8] sm:$0xff] %vm241, %v2861
        %2894 = vst.msk [vmem:[#allocation2 + $0x4f0] sm:$0xff] %vm241, %v2862
        %2895 = vst.msk [vmem:[#allocation2 + $0x508] sm:$0xff] %vm241, %v2863
        %2896 = vst.msk [vmem:[#allocation2 + $0x520] sm:$0xff] %vm241, %v2864
        %2897 = vst.msk [vmem:[#allocation2 + $0x538] sm:$0xff] %vm241, %v2865
        %2898 = vst.msk [vmem:[#allocation2 + $0x550] sm:$0xff] %vm241, %v2866
        %2899 = vst.msk [vmem:[#allocation2 + $0x568] sm:$0xff] %vm241, %v2867
        %2900 = vst.msk [vmem:[#allocation2 + $0x580] sm:$0xff] %vm241, %v2868
        %2901 = vst.msk [vmem:[#allocation2 + $0x598] sm:$0xff] %vm241, %v2869
        %2902 = vst.msk [vmem:[#allocation2 + $0x5b0] sm:$0xff] %vm241, %v2870
        %2903 = vst.msk [vmem:[#allocation2 + $0x5c8] sm:$0xff] %vm241, %v2871
        %2904 = vst.msk [vmem:[#allocation2 + $0x5e0] sm:$0xff] %vm241, %v2872
        %2905 = vst.msk [vmem:[#allocation2 + $0x5f8] sm:$0xff] %vm241, %v2873
        %v2906 = vld [vmem:[%s203] sm:$0xff]
        %v2907 = vld [vmem:[%s203 + $0x8] sm:$0xff]
        %v2908 = vld [vmem:[%s203 + $0x10] sm:$0xff]
        %v2909 = vld [vmem:[%s203 + $0x18] sm:$0xff]
        %v2910 = vld [vmem:[%s203 + $0x20] sm:$0xff]
        %v2911 = vld [vmem:[%s203 + $0x28] sm:$0xff]
        %v2912 = vld [vmem:[#allocation2] sm:$0xff]
        %v2913 = vld [vmem:[#allocation2 + $0x8] sm:$0xff]
        %v2914 = vld [vmem:[#allocation2 + $0x10] sm:$0xff]
        %v2915 = vld [vmem:[#allocation2 + $0x18] sm:$0xff]
        %v2916 = vld [vmem:[#allocation2 + $0x20] sm:$0xff]
        %v2917 = vld [vmem:[#allocation2 + $0x28] sm:$0xff]
        %v2918 = vld [vmem:[#allocation2 + $0x30] sm:$0xff]
        %v2919 = vld [vmem:[#allocation2 + $0x38] sm:$0xff]
        %v2920 = vld [vmem:[#allocation2 + $0x40] sm:$0xff]
        %v2921 = vld [vmem:[#allocation2 + $0x48] sm:$0xff]
        %v2922 = vld [vmem:[#allocation2 + $0x50] sm:$0xff]
        %v2923 = vld [vmem:[#allocation2 + $0x58] sm:$0xff]
        %v2924 = vld [vmem:[#allocation2 + $0x60] sm:$0xff]
        %v2925 = vld [vmem:[#allocation2 + $0x68] sm:$0xff]
        %v2926 = vld [vmem:[#allocation2 + $0x70] sm:$0xff]
        %v2927 = vld [vmem:[#allocation2 + $0x78] sm:$0xff]
        %v2928 = vld [vmem:[#allocation2 + $0x80] sm:$0xff]
        %v2929 = vld [vmem:[#allocation2 + $0x88] sm:$0xff]
        %v2930 = vld [vmem:[#allocation2 + $0x90] sm:$0xff]
        %v2931 = vld [vmem:[#allocation2 + $0x98] sm:$0xff]
        %v2932 = vld [vmem:[#allocation2 + $0xa0] sm:$0xff]
        %v2933 = vld [vmem:[#allocation2 + $0xa8] sm:$0xff]
        %v2934 = vld [vmem:[#allocation2 + $0xb0] sm:$0xff]
        %v2935 = vld [vmem:[#allocation2 + $0xb8] sm:$0xff]
        %v2936 = vld [vmem:[#allocation2 + $0xc0] sm:$0xff]
        %v2937 = vld [vmem:[#allocation2 + $0xc8] sm:$0xff]
        %v2938 = vld [vmem:[#allocation2 + $0xd0] sm:$0xff]
        %v2939 = vld [vmem:[#allocation2 + $0xd8] sm:$0xff]
        %v2940 = vld [vmem:[#allocation2 + $0xe0] sm:$0xff]
        %v2941 = vld [vmem:[#allocation2 + $0xe8] sm:$0xff]
        %v2942 = vld [vmem:[#allocation2 + $0xf0] sm:$0xff]
        %v2943 = vld [vmem:[#allocation2 + $0xf8] sm:$0xff]
        %v2944 = vld [vmem:[#allocation2 + $0x100] sm:$0xff]
        %v2945 = vld [vmem:[#allocation2 + $0x108] sm:$0xff]
        %v2946 = vld [vmem:[#allocation2 + $0x110] sm:$0xff]
        %v2947 = vld [vmem:[#allocation2 + $0x118] sm:$0xff]
        %v2948 = vld [vmem:[#allocation2 + $0x120] sm:$0xff]
        %v2949 = vld [vmem:[#allocation2 + $0x128] sm:$0xff]
        %v2950 = vld [vmem:[#allocation2 + $0x130] sm:$0xff]
        %v2951 = vld [vmem:[#allocation2 + $0x138] sm:$0xff]
        %v2952 = vld [vmem:[#allocation2 + $0x140] sm:$0xff]
        %v2953 = vld [vmem:[#allocation2 + $0x148] sm:$0xff]
        %v2954 = vld [vmem:[#allocation2 + $0x150] sm:$0xff]
        %v2955 = vld [vmem:[#allocation2 + $0x158] sm:$0xff]
        %v2956 = vld [vmem:[#allocation2 + $0x160] sm:$0xff]
        %v2957 = vld [vmem:[#allocation2 + $0x168] sm:$0xff]
        %v2958 = vld [vmem:[#allocation2 + $0x170] sm:$0xff]
        %v2959 = vld [vmem:[#allocation2 + $0x178] sm:$0xff]
        %v2960 = vld [vmem:[#allocation2 + $0x180] sm:$0xff]
        %v2961 = vld [vmem:[#allocation2 + $0x188] sm:$0xff]
        %v2962 = vld [vmem:[#allocation2 + $0x190] sm:$0xff]
        %v2963 = vld [vmem:[#allocation2 + $0x198] sm:$0xff]
        %v2964 = vld [vmem:[#allocation2 + $0x1a0] sm:$0xff]
        %v2965 = vld [vmem:[#allocation2 + $0x1a8] sm:$0xff]
        %v2966 = vld [vmem:[#allocation2 + $0x1b0] sm:$0xff]
        %v2967 = vld [vmem:[#allocation2 + $0x1b8] sm:$0xff]
        %v2968 = vld [vmem:[#allocation2 + $0x1c0] sm:$0xff]
        %v2969 = vld [vmem:[#allocation2 + $0x1c8] sm:$0xff]
        %v2970 = vld [vmem:[#allocation2 + $0x1d0] sm:$0xff]
        %v2971 = vld [vmem:[#allocation2 + $0x1d8] sm:$0xff]
        %v2972 = vld [vmem:[#allocation2 + $0x1e0] sm:$0xff]
        %v2973 = vld [vmem:[#allocation2 + $0x1e8] sm:$0xff]
        %v2974 = vld [vmem:[#allocation2 + $0x1f0] sm:$0xff]
        %v2975 = vld [vmem:[#allocation2 + $0x1f8] sm:$0xff]
        %v2976 = vld [vmem:[#allocation2 + $0x200] sm:$0xff]
        %v2977 = vld [vmem:[#allocation2 + $0x208] sm:$0xff]
        %v2978 = vld [vmem:[#allocation2 + $0x210] sm:$0xff]
        %v2979 = vld [vmem:[#allocation2 + $0x218] sm:$0xff]
        %v2980 = vld [vmem:[#allocation2 + $0x220] sm:$0xff]
        %v2981 = vld [vmem:[#allocation2 + $0x228] sm:$0xff]
        %v2982 = vld [vmem:[#allocation2 + $0x230] sm:$0xff]
        %v2983 = vld [vmem:[#allocation2 + $0x238] sm:$0xff]
        %v2984 = vld [vmem:[#allocation2 + $0x240] sm:$0xff]
        %v2985 = vld [vmem:[#allocation2 + $0x248] sm:$0xff]
        %v2986 = vld [vmem:[#allocation2 + $0x250] sm:$0xff]
        %v2987 = vld [vmem:[#allocation2 + $0x258] sm:$0xff]
        %v2988 = vld [vmem:[#allocation2 + $0x260] sm:$0xff]
        %v2989 = vld [vmem:[#allocation2 + $0x268] sm:$0xff]
        %v2990 = vld [vmem:[#allocation2 + $0x270] sm:$0xff]
        %v2991 = vld [vmem:[#allocation2 + $0x278] sm:$0xff]
        %v2992 = vld [vmem:[#allocation2 + $0x280] sm:$0xff]
        %v2993 = vld [vmem:[#allocation2 + $0x288] sm:$0xff]
        %v2994 = vld [vmem:[#allocation2 + $0x290] sm:$0xff]
        %v2995 = vld [vmem:[#allocation2 + $0x298] sm:$0xff]
        %v2996 = vld [vmem:[#allocation2 + $0x2a0] sm:$0xff]
        %v2997 = vld [vmem:[#allocation2 + $0x2a8] sm:$0xff]
        %v2998 = vld [vmem:[#allocation2 + $0x2b0] sm:$0xff]
        %v2999 = vld [vmem:[#allocation2 + $0x2b8] sm:$0xff]
        %v3000 = vld [vmem:[#allocation2 + $0x2c0] sm:$0xff]
        %v3001 = vld [vmem:[#allocation2 + $0x2c8] sm:$0xff]
        %v3002 = vld [vmem:[#allocation2 + $0x2d0] sm:$0xff]
        %v3003 = vld [vmem:[#allocation2 + $0x2d8] sm:$0xff]
        %v3004 = vld [vmem:[#allocation2 + $0x2e0] sm:$0xff]
        %v3005 = vld [vmem:[#allocation2 + $0x2e8] sm:$0xff]
        %v3006 = vld [vmem:[#allocation2 + $0x2f0] sm:$0xff]
        %v3007 = vld [vmem:[#allocation2 + $0x2f8] sm:$0xff]
        %v3008 = vld [vmem:[#allocation2 + $0x300] sm:$0xff]
        %v3009 = vld [vmem:[#allocation2 + $0x308] sm:$0xff]
        %v3010 = vld [vmem:[#allocation2 + $0x310] sm:$0xff]
        %v3011 = vld [vmem:[#allocation2 + $0x318] sm:$0xff]
        %v3012 = vld [vmem:[#allocation2 + $0x320] sm:$0xff]
        %v3013 = vld [vmem:[#allocation2 + $0x328] sm:$0xff]
        %v3014 = vld [vmem:[#allocation2 + $0x330] sm:$0xff]
        %v3015 = vld [vmem:[#allocation2 + $0x338] sm:$0xff]
        %v3016 = vld [vmem:[#allocation2 + $0x340] sm:$0xff]
        %v3017 = vld [vmem:[#allocation2 + $0x348] sm:$0xff]
        %v3018 = vld [vmem:[#allocation2 + $0x350] sm:$0xff]
        %v3019 = vld [vmem:[#allocation2 + $0x358] sm:$0xff]
        %v3020 = vld [vmem:[#allocation2 + $0x360] sm:$0xff]
        %v3021 = vld [vmem:[#allocation2 + $0x368] sm:$0xff]
        %v3022 = vld [vmem:[#allocation2 + $0x370] sm:$0xff]
        %v3023 = vld [vmem:[#allocation2 + $0x378] sm:$0xff]
        %v3024 = vld [vmem:[#allocation2 + $0x380] sm:$0xff]
        %v3025 = vld [vmem:[#allocation2 + $0x388] sm:$0xff]
        %v3026 = vld [vmem:[#allocation2 + $0x390] sm:$0xff]
        %v3027 = vld [vmem:[#allocation2 + $0x398] sm:$0xff]
        %v3028 = vld [vmem:[#allocation2 + $0x3a0] sm:$0xff]
        %v3029 = vld [vmem:[#allocation2 + $0x3a8] sm:$0xff]
        %v3030 = vld [vmem:[#allocation2 + $0x3b0] sm:$0xff]
        %v3031 = vld [vmem:[#allocation2 + $0x3b8] sm:$0xff]
        %v3032 = vld [vmem:[#allocation2 + $0x3c0] sm:$0xff]
        %v3033 = vld [vmem:[#allocation2 + $0x3c8] sm:$0xff]
        %v3034 = vld [vmem:[#allocation2 + $0x3d0] sm:$0xff]
        %v3035 = vld [vmem:[#allocation2 + $0x3d8] sm:$0xff]
        %v3036 = vld [vmem:[#allocation2 + $0x3e0] sm:$0xff]
        %v3037 = vld [vmem:[#allocation2 + $0x3e8] sm:$0xff]
        %v3038 = vld [vmem:[#allocation2 + $0x3f0] sm:$0xff]
        %v3039 = vld [vmem:[#allocation2 + $0x3f8] sm:$0xff]
        %v3040 = vld [vmem:[#allocation2 + $0x400] sm:$0xff]
        %v3041 = vld [vmem:[#allocation2 + $0x408] sm:$0xff]
        %v3042 = vld [vmem:[#allocation2 + $0x410] sm:$0xff]
        %v3043 = vld [vmem:[#allocation2 + $0x418] sm:$0xff]
        %v3044 = vld [vmem:[#allocation2 + $0x420] sm:$0xff]
        %v3045 = vld [vmem:[#allocation2 + $0x428] sm:$0xff]
        %v3046 = vld [vmem:[#allocation2 + $0x430] sm:$0xff]
        %v3047 = vld [vmem:[#allocation2 + $0x438] sm:$0xff]
        %v3048 = vld [vmem:[#allocation2 + $0x440] sm:$0xff]
        %v3049 = vld [vmem:[#allocation2 + $0x448] sm:$0xff]
        %v3050 = vld [vmem:[#allocation2 + $0x450] sm:$0xff]
        %v3051 = vld [vmem:[#allocation2 + $0x458] sm:$0xff]
        %v3052 = vld [vmem:[#allocation2 + $0x460] sm:$0xff]
        %v3053 = vld [vmem:[#allocation2 + $0x468] sm:$0xff]
        %v3054 = vld [vmem:[#allocation2 + $0x470] sm:$0xff]
        %v3055 = vld [vmem:[#allocation2 + $0x478] sm:$0xff]
        %v3056 = vld [vmem:[#allocation2 + $0x480] sm:$0xff]
        %v3057 = vld [vmem:[#allocation2 + $0x488] sm:$0xff]
        %v3058 = vld [vmem:[#allocation2 + $0x490] sm:$0xff]
        %v3059 = vld [vmem:[#allocation2 + $0x498] sm:$0xff]
        %v3060 = vld [vmem:[#allocation2 + $0x4a0] sm:$0xff]
        %v3061 = vld [vmem:[#allocation2 + $0x4a8] sm:$0xff]
        %v3062 = vld [vmem:[#allocation2 + $0x4b0] sm:$0xff]
        %v3063 = vld [vmem:[#allocation2 + $0x4b8] sm:$0xff]
        %v3064 = vld [vmem:[#allocation2 + $0x4c0] sm:$0xff]
        %v3065 = vld [vmem:[#allocation2 + $0x4c8] sm:$0xff]
        %v3066 = vld [vmem:[#allocation2 + $0x4d0] sm:$0xff]
        %v3067 = vld [vmem:[#allocation2 + $0x4d8] sm:$0xff]
        %v3068 = vld [vmem:[#allocation2 + $0x4e0] sm:$0xff]
        %v3069 = vld [vmem:[#allocation2 + $0x4e8] sm:$0xff]
        %v3070 = vld [vmem:[#allocation2 + $0x4f0] sm:$0xff]
        %v3071 = vld [vmem:[#allocation2 + $0x4f8] sm:$0xff]
        %v3072 = vld [vmem:[#allocation2 + $0x500] sm:$0xff]
        %v3073 = vld [vmem:[#allocation2 + $0x508] sm:$0xff]
        %v3074 = vld [vmem:[#allocation2 + $0x510] sm:$0xff]
        %v3075 = vld [vmem:[#allocation2 + $0x518] sm:$0xff]
        %v3076 = vld [vmem:[#allocation2 + $0x520] sm:$0xff]
        %v3077 = vld [vmem:[#allocation2 + $0x528] sm:$0xff]
        %v3078 = vld [vmem:[#allocation2 + $0x530] sm:$0xff]
        %v3079 = vld [vmem:[#allocation2 + $0x538] sm:$0xff]
        %v3080 = vld [vmem:[#allocation2 + $0x540] sm:$0xff]
        %v3081 = vld [vmem:[#allocation2 + $0x548] sm:$0xff]
        %v3082 = vld [vmem:[#allocation2 + $0x550] sm:$0xff]
        %v3083 = vld [vmem:[#allocation2 + $0x558] sm:$0xff]
        %v3084 = vld [vmem:[#allocation2 + $0x560] sm:$0xff]
        %v3085 = vld [vmem:[#allocation2 + $0x568] sm:$0xff]
        %v3086 = vld [vmem:[#allocation2 + $0x570] sm:$0xff]
        %v3087 = vld [vmem:[#allocation2 + $0x578] sm:$0xff]
        %v3088 = vld [vmem:[#allocation2 + $0x580] sm:$0xff]
        %v3089 = vld [vmem:[#allocation2 + $0x588] sm:$0xff]
        %v3090 = vld [vmem:[#allocation2 + $0x590] sm:$0xff]
        %v3091 = vld [vmem:[#allocation2 + $0x598] sm:$0xff]
        %v3092 = vld [vmem:[#allocation2 + $0x5a0] sm:$0xff]
        %v3093 = vld [vmem:[#allocation2 + $0x5a8] sm:$0xff]
        %v3094 = vld [vmem:[#allocation2 + $0x5b0] sm:$0xff]
        %v3095 = vld [vmem:[#allocation2 + $0x5b8] sm:$0xff]
        %v3096 = vld [vmem:[#allocation2 + $0x5c0] sm:$0xff]
        %v3097 = vld [vmem:[#allocation2 + $0x5c8] sm:$0xff]
        %v3098 = vld [vmem:[#allocation2 + $0x5d0] sm:$0xff]
        %v3099 = vld [vmem:[#allocation2 + $0x5d8] sm:$0xff]
        %v3100 = vld [vmem:[#allocation2 + $0x5e0] sm:$0xff]
        %v3101 = vld [vmem:[#allocation2 + $0x5e8] sm:$0xff]
        %v3102 = vld [vmem:[#allocation2 + $0x5f0] sm:$0xff]
        %v3103 = vld [vmem:[#allocation2 + $0x5f8] sm:$0xff]
        %v3104 = vld [vmem:[%s208] sm:$0xff]
        %v3105 = vld [vmem:[%s208 + $0x8] sm:$0xff]
        %3107 = vset.pattern.permute.xlu0 0
        %3108 = vperm.xlu0 %3107, %v3104
        %v3109 = vpop.permute.xlu0 %3108
        %3112 = vset.pattern.permute.xlu0 0
        %3113 = vperm.xlu0 %3112, %v3105
        %v3114 = vpop.permute.xlu0 %3113
        %v3117 = vsel %vm241, %v2908, 0
        %v3120 = vsel %vm241, %v2911, 0
        %v3123 = vsel %vm241, %v2914, 0
        %v3126 = vsel %vm241, %v2917, 0
        %v3129 = vsel %vm241, %v2920, 0
        %v3132 = vsel %vm241, %v2923, 0
        %v3135 = vsel %vm241, %v2926, 0
        %v3138 = vsel %vm241, %v2929, 0
        %v3141 = vsel %vm241, %v2932, 0
        %v3144 = vsel %vm241, %v2935, 0
        %v3147 = vsel %vm241, %v2938, 0
        %v3150 = vsel %vm241, %v2941, 0
        %v3153 = vsel %vm241, %v2944, 0
        %v3156 = vsel %vm241, %v2947, 0
        %v3159 = vsel %vm241, %v2950, 0
        %v3162 = vsel %vm241, %v2953, 0
        %v3165 = vsel %vm241, %v2956, 0
        %v3168 = vsel %vm241, %v2959, 0
        %v3171 = vsel %vm241, %v2962, 0
        %v3174 = vsel %vm241, %v2965, 0
        %v3177 = vsel %vm241, %v2968, 0
        %v3180 = vsel %vm241, %v2971, 0
        %v3183 = vsel %vm241, %v2974, 0
        %v3186 = vsel %vm241, %v2977, 0
        %v3189 = vsel %vm241, %v2980, 0
        %v3192 = vsel %vm241, %v2983, 0
        %v3195 = vsel %vm241, %v2986, 0
        %v3198 = vsel %vm241, %v2989, 0
        %v3201 = vsel %vm241, %v2992, 0
        %v3204 = vsel %vm241, %v2995, 0
        %v3207 = vsel %vm241, %v2998, 0
        %v3210 = vsel %vm241, %v3001, 0
        %v3213 = vsel %vm241, %v3004, 0
        %v3216 = vsel %vm241, %v3007, 0
        %v3219 = vsel %vm241, %v3010, 0
        %v3222 = vsel %vm241, %v3013, 0
        %v3225 = vsel %vm241, %v3016, 0
        %v3228 = vsel %vm241, %v3019, 0
        %v3231 = vsel %vm241, %v3022, 0
        %v3234 = vsel %vm241, %v3025, 0
        %v3237 = vsel %vm241, %v3028, 0
        %v3240 = vsel %vm241, %v3031, 0
        %v3243 = vsel %vm241, %v3034, 0
        %v3246 = vsel %vm241, %v3037, 0
        %v3249 = vsel %vm241, %v3040, 0
        %v3252 = vsel %vm241, %v3043, 0
        %v3255 = vsel %vm241, %v3046, 0
        %v3258 = vsel %vm241, %v3049, 0
        %v3261 = vsel %vm241, %v3052, 0
        %v3264 = vsel %vm241, %v3055, 0
        %v3267 = vsel %vm241, %v3058, 0
        %v3270 = vsel %vm241, %v3061, 0
        %v3273 = vsel %vm241, %v3064, 0
        %v3276 = vsel %vm241, %v3067, 0
        %v3279 = vsel %vm241, %v3070, 0
        %v3282 = vsel %vm241, %v3073, 0
        %v3285 = vsel %vm241, %v3076, 0
        %v3288 = vsel %vm241, %v3079, 0
        %v3291 = vsel %vm241, %v3082, 0
        %v3294 = vsel %vm241, %v3085, 0
        %v3297 = vsel %vm241, %v3088, 0
        %v3300 = vsel %vm241, %v3091, 0
        %v3303 = vsel %vm241, %v3094, 0
        %v3306 = vsel %vm241, %v3097, 0
        %v3309 = vsel %vm241, %v3100, 0
        %v3312 = vsel %vm241, %v3103, 0
        %3314 = vmatprep.subr.mxu0 %v2958
        %3315 = vmatpush1.xpose.msra.mxu0 %v2957
        %3316 = vmatprep.subr.mxu0 %v2955
        %3317 = vmatpush1.xpose.msra.mxu0 %v2954
        %3318 = vmatprep.subr.mxu0 %v2952
        %3319 = vmatpush1.xpose.msra.mxu0 %v2951
        %3320 = vmatprep.subr.mxu0 %v2949
        %3321 = vmatpush1.xpose.msra.mxu0 %v2948
        %3322 = vmatprep.subr.mxu0 %v2946
        %3323 = vmatpush1.xpose.msra.mxu0 %v2945
        %3324 = vmatprep.subr.mxu0 %v2943
        %3325 = vmatpush1.xpose.msra.mxu0 %v2942
        %3326 = vmatprep.subr.mxu0 %v2940
        %3327 = vmatpush1.xpose.msra.mxu0 %v2939
        %3328 = vmatprep.subr.mxu0 %v2937
        %3329 = vmatpush1.xpose.msra.mxu0 %v2936
        %3330 = vmatprep.subr.mxu0 %v2934
        %3331 = vmatpush1.xpose.msra.mxu0 %v2933
        %3332 = vmatprep.subr.mxu0 %v2931
        %3333 = vmatpush1.xpose.msra.mxu0 %v2930
        %3334 = vmatprep.subr.mxu0 %v2928
        %3335 = vmatpush1.xpose.msra.mxu0 %v2927
        %3336 = vmatprep.subr.mxu0 %v2925
        %3337 = vmatpush1.xpose.msra.mxu0 %v2924
        %3338 = vmatprep.subr.mxu0 %v2922
        %3339 = vmatpush1.xpose.msra.mxu0 %v2921
        %3340 = vmatprep.subr.mxu0 %v2919
        %3341 = vmatpush1.xpose.msra.mxu0 %v2918
        %3342 = vmatprep.subr.mxu0 %v2916
        %3343 = vmatpush1.xpose.msra.mxu0 %v2915
        %3344 = vmatprep.subr.mxu0 %v2913
        %3345 = vmatpush1.xpose.msra.mxu0 %v2912
        %3346 = vmatprep.subr.mxu0 %v3006
        %3347 = vmatpush2.xpose.msra.mxu0 %v3005
        %3348 = vmatprep.subr.mxu0 %v3003
        %3349 = vmatpush2.xpose.msra.mxu0 %v3002
        %3350 = vmatprep.subr.mxu0 %v3000
        %3351 = vmatpush2.xpose.msra.mxu0 %v2999
        %3352 = vmatprep.subr.mxu0 %v2997
        %3353 = vmatpush2.xpose.msra.mxu0 %v2996
        %3354 = vmatprep.subr.mxu0 %v2994
        %3355 = vmatpush2.xpose.msra.mxu0 %v2993
        %3356 = vmatprep.subr.mxu0 %v2991
        %3357 = vmatpush2.xpose.msra.mxu0 %v2990
        %3358 = vmatprep.subr.mxu0 %v2988
        %3359 = vmatpush2.xpose.msra.mxu0 %v2987
        %3360 = vmatprep.subr.mxu0 %v2985
        %3361 = vmatpush2.xpose.msra.mxu0 %v2984
        %3362 = vmatprep.subr.mxu0 %v2982
        %3363 = vmatpush2.xpose.msra.mxu0 %v2981
        %3364 = vmatprep.subr.mxu0 %v2979
        %3365 = vmatpush2.xpose.msra.mxu0 %v2978
        %3366 = vmatprep.subr.mxu0 %v2976
        %3367 = vmatpush2.xpose.msra.mxu0 %v2975
        %3368 = vmatprep.subr.mxu0 %v2973
        %3369 = vmatpush2.xpose.msra.mxu0 %v2972
        %3370 = vmatprep.subr.mxu0 %v2970
        %3371 = vmatpush2.xpose.msra.mxu0 %v2969
        %3372 = vmatprep.subr.mxu0 %v2967
        %3373 = vmatpush2.xpose.msra.mxu0 %v2966
        %3374 = vmatprep.subr.mxu0 %v2964
        %3375 = vmatpush2.xpose.msra.mxu0 %v2963
        %3376 = vmatprep.subr.mxu0 %v2961
        %3377 = vmatpush2.xpose.msra.mxu0 %v2960
        %3378 = vmatprep.mubr.f32.mxu0 %v2907
        %3379 = vmatmul.mubr.f32.gmra.mxu0 %v2906
        %v3380 = vpop.f32.mrf.mxu0
        %v3381 = vadd.f32 %v3109, %v3380
        %v3382 = vpop.f32.mrf.mxu0
        %v3383 = vadd.f32 %v3109, %v3382
        %3384 = vmatprep.mubr.f32.mxu0 %v2910
        %3385 = vmatmul.mubr.f32.gmra.mxu0 %v2909
        %v3386 = vpop.f32.mrf.mxu0
        %v3387 = vadd.f32 %v3114, %v3386
        %v3388 = vpop.f32.mrf.mxu0
        %v3389 = vadd.f32 %v3114, %v3388
        %3390 = vdwg.mxu0
        %3391 = vmatprep.subr.mxu0 0.0
        %3392 = vmatpush1.xpose.msra.mxu0 %v3168
        %3393 = vmatprep.subr.mxu0 0.0
        %3394 = vmatpush1.xpose.msra.mxu0 %v3165
        %3395 = vmatprep.subr.mxu0 0.0
        %3396 = vmatpush1.xpose.msra.mxu0 %v3162
        %3397 = vmatprep.subr.mxu0 0.0
        %3398 = vmatpush1.xpose.msra.mxu0 %v3159
        %3399 = vmatprep.subr.mxu0 0.0
        %3400 = vmatpush1.xpose.msra.mxu0 %v3156
        %3401 = vmatprep.subr.mxu0 0.0
        %3402 = vmatpush1.xpose.msra.mxu0 %v3153
        %3403 = vmatprep.subr.mxu0 0.0
        %3404 = vmatpush1.xpose.msra.mxu0 %v3150
        %3405 = vmatprep.subr.mxu0 0.0
        %3406 = vmatpush1.xpose.msra.mxu0 %v3147
        %3407 = vmatprep.subr.mxu0 0.0
        %3408 = vmatpush1.xpose.msra.mxu0 %v3144
        %3409 = vmatprep.subr.mxu0 0.0
        %3410 = vmatpush1.xpose.msra.mxu0 %v3141
        %3411 = vmatprep.subr.mxu0 0.0
        %3412 = vmatpush1.xpose.msra.mxu0 %v3138
        %3413 = vmatprep.subr.mxu0 0.0
        %3414 = vmatpush1.xpose.msra.mxu0 %v3135
        %3415 = vmatprep.subr.mxu0 0.0
        %3416 = vmatpush1.xpose.msra.mxu0 %v3132
        %3417 = vmatprep.subr.mxu0 0.0
        %3418 = vmatpush1.xpose.msra.mxu0 %v3129
        %3419 = vmatprep.subr.mxu0 0.0
        %3420 = vmatpush1.xpose.msra.mxu0 %v3126
        %3421 = vmatprep.subr.mxu0 0.0
        %3422 = vmatpush1.xpose.msra.mxu0 %v3123
        %3423 = vmatprep.subr.mxu0 0.0
        %3424 = vmatpush2.xpose.msra.mxu0 %v3216
        %3425 = vmatprep.subr.mxu0 0.0
        %3426 = vmatpush2.xpose.msra.mxu0 %v3213
        %3427 = vmatprep.subr.mxu0 0.0
        %3428 = vmatpush2.xpose.msra.mxu0 %v3210
        %3429 = vmatprep.subr.mxu0 0.0
        %3430 = vmatpush2.xpose.msra.mxu0 %v3207
        %3431 = vmatprep.subr.mxu0 0.0
        %3432 = vmatpush2.xpose.msra.mxu0 %v3204
        %3433 = vmatprep.subr.mxu0 0.0
        %3434 = vmatpush2.xpose.msra.mxu0 %v3201
        %3435 = vmatprep.subr.mxu0 0.0
        %3436 = vmatpush2.xpose.msra.mxu0 %v3198
        %3437 = vmatprep.subr.mxu0 0.0
        %3438 = vmatpush2.xpose.msra.mxu0 %v3195
        %3439 = vmatprep.subr.mxu0 0.0
        %3440 = vmatpush2.xpose.msra.mxu0 %v3192
        %3441 = vmatprep.subr.mxu0 0.0
        %3442 = vmatpush2.xpose.msra.mxu0 %v3189
        %3443 = vmatprep.subr.mxu0 0.0
        %3444 = vmatpush2.xpose.msra.mxu0 %v3186
        %3445 = vmatprep.subr.mxu0 0.0
        %3446 = vmatpush2.xpose.msra.mxu0 %v3183
        %3447 = vmatprep.subr.mxu0 0.0
        %3448 = vmatpush2.xpose.msra.mxu0 %v3180
        %3449 = vmatprep.subr.mxu0 0.0
        %3450 = vmatpush2.xpose.msra.mxu0 %v3177
        %3451 = vmatprep.subr.mxu0 0.0
        %3452 = vmatpush2.xpose.msra.mxu0 %v3174
        %3453 = vmatprep.subr.mxu0 0.0
        %3454 = vmatpush2.xpose.msra.mxu0 %v3171
        %3455 = vmatprep.mubr.f32.mxu0 0.0
        %3456 = vmatmul.mubr.f32.gmra.mxu0 %v3117
        %v3457 = vpop.f32.mrf.mxu0
        %v3458 = vadd.f32 %v3381, %v3457
        %v3459 = vpop.f32.mrf.mxu0
        %v3460 = vadd.f32 %v3383, %v3459
        %3461 = vmatprep.mubr.f32.mxu0 0.0
        %3462 = vmatmul.mubr.f32.gmra.mxu0 %v3120
        %v3463 = vpop.f32.mrf.mxu0
        %v3464 = vadd.f32 %v3387, %v3463
        %v3465 = vpop.f32.mrf.mxu0
        %v3466 = vadd.f32 %v3389, %v3465
        %3467 = vdwg.mxu0
        %3468 = vmatprep.subr.mxu0 %v3054
        %3469 = vmatpush1.xpose.msra.mxu0 %v3053
        %3470 = vmatprep.subr.mxu0 %v3051
        %3471 = vmatpush1.xpose.msra.mxu0 %v3050
        %3472 = vmatprep.subr.mxu0 %v3048
        %3473 = vmatpush1.xpose.msra.mxu0 %v3047
        %3474 = vmatprep.subr.mxu0 %v3045
        %3475 = vmatpush1.xpose.msra.mxu0 %v3044
        %3476 = vmatprep.subr.mxu0 %v3042
        %3477 = vmatpush1.xpose.msra.mxu0 %v3041
        %3478 = vmatprep.subr.mxu0 %v3039
        %3479 = vmatpush1.xpose.msra.mxu0 %v3038
        %3480 = vmatprep.subr.mxu0 %v3036
        %3481 = vmatpush1.xpose.msra.mxu0 %v3035
        %3482 = vmatprep.subr.mxu0 %v3033
        %3483 = vmatpush1.xpose.msra.mxu0 %v3032
        %3484 = vmatprep.subr.mxu0 %v3030
        %3485 = vmatpush1.xpose.msra.mxu0 %v3029
        %3486 = vmatprep.subr.mxu0 %v3027
        %3487 = vmatpush1.xpose.msra.mxu0 %v3026
        %3488 = vmatprep.subr.mxu0 %v3024
        %3489 = vmatpush1.xpose.msra.mxu0 %v3023
        %3490 = vmatprep.subr.mxu0 %v3021
        %3491 = vmatpush1.xpose.msra.mxu0 %v3020
        %3492 = vmatprep.subr.mxu0 %v3018
        %3493 = vmatpush1.xpose.msra.mxu0 %v3017
        %3494 = vmatprep.subr.mxu0 %v3015
        %3495 = vmatpush1.xpose.msra.mxu0 %v3014
        %3496 = vmatprep.subr.mxu0 %v3012
        %3497 = vmatpush1.xpose.msra.mxu0 %v3011
        %3498 = vmatprep.subr.mxu0 %v3009
        %3499 = vmatpush1.xpose.msra.mxu0 %v3008
        %3500 = vmatprep.subr.mxu0 %v3102
        %3501 = vmatpush2.xpose.msra.mxu0 %v3101
        %3502 = vmatprep.subr.mxu0 %v3099
        %3503 = vmatpush2.xpose.msra.mxu0 %v3098
        %3504 = vmatprep.subr.mxu0 %v3096
        %3505 = vmatpush2.xpose.msra.mxu0 %v3095
        %3506 = vmatprep.subr.mxu0 %v3093
        %3507 = vmatpush2.xpose.msra.mxu0 %v3092
        %3508 = vmatprep.subr.mxu0 %v3090
        %3509 = vmatpush2.xpose.msra.mxu0 %v3089
        %3510 = vmatprep.subr.mxu0 %v3087
        %3511 = vmatpush2.xpose.msra.mxu0 %v3086
        %3512 = vmatprep.subr.mxu0 %v3084
        %3513 = vmatpush2.xpose.msra.mxu0 %v3083
        %3514 = vmatprep.subr.mxu0 %v3081
        %3515 = vmatpush2.xpose.msra.mxu0 %v3080
        %3516 = vmatprep.subr.mxu0 %v3078
        %3517 = vmatpush2.xpose.msra.mxu0 %v3077
        %3518 = vmatprep.subr.mxu0 %v3075
        %3519 = vmatpush2.xpose.msra.mxu0 %v3074
        %3520 = vmatprep.subr.mxu0 %v3072
        %3521 = vmatpush2.xpose.msra.mxu0 %v3071
        %3522 = vmatprep.subr.mxu0 %v3069
        %3523 = vmatpush2.xpose.msra.mxu0 %v3068
        %3524 = vmatprep.subr.mxu0 %v3066
        %3525 = vmatpush2.xpose.msra.mxu0 %v3065
        %3526 = vmatprep.subr.mxu0 %v3063
        %3527 = vmatpush2.xpose.msra.mxu0 %v3062
        %3528 = vmatprep.subr.mxu0 %v3060
        %3529 = vmatpush2.xpose.msra.mxu0 %v3059
        %3530 = vmatprep.subr.mxu0 %v3057
        %3531 = vmatpush2.xpose.msra.mxu0 %v3056
        %3532 = vmatprep.mubr.f32.mxu0 %v2907
        %3533 = vmatmul.mubr.f32.gmra.mxu0 %v2906
        %v3534 = vpop.f32.mrf.mxu0
        %v3535 = vadd.f32 %v3109, %v3534
        %v3536 = vpop.f32.mrf.mxu0
        %v3537 = vadd.f32 %v3109, %v3536
        %3538 = vmatprep.mubr.f32.mxu0 %v2910
        %3539 = vmatmul.mubr.f32.gmra.mxu0 %v2909
        %v3540 = vpop.f32.mrf.mxu0
        %v3541 = vadd.f32 %v3114, %v3540
        %v3542 = vpop.f32.mrf.mxu0
        %v3543 = vadd.f32 %v3114, %v3542
        %3544 = vdwg.mxu0
        %3545 = vmatprep.subr.mxu0 0.0
        %3546 = vmatpush1.xpose.msra.mxu0 %v3264
        %3547 = vmatprep.subr.mxu0 0.0
        %3548 = vmatpush1.xpose.msra.mxu0 %v3261
        %3549 = vmatprep.subr.mxu0 0.0
        %3550 = vmatpush1.xpose.msra.mxu0 %v3258
        %3551 = vmatprep.subr.mxu0 0.0
        %3552 = vmatpush1.xpose.msra.mxu0 %v3255
        %3553 = vmatprep.subr.mxu0 0.0
        %3554 = vmatpush1.xpose.msra.mxu0 %v3252
        %3555 = vmatprep.subr.mxu0 0.0
        %3556 = vmatpush1.xpose.msra.mxu0 %v3249
        %3557 = vmatprep.subr.mxu0 0.0
        %3558 = vmatpush1.xpose.msra.mxu0 %v3246
        %3559 = vmatprep.subr.mxu0 0.0
        %3560 = vmatpush1.xpose.msra.mxu0 %v3243
        %3561 = vmatprep.subr.mxu0 0.0
        %3562 = vmatpush1.xpose.msra.mxu0 %v3240
        %3563 = vmatprep.subr.mxu0 0.0
        %3564 = vmatpush1.xpose.msra.mxu0 %v3237
        %3565 = vmatprep.subr.mxu0 0.0
        %3566 = vmatpush1.xpose.msra.mxu0 %v3234
        %3567 = vmatprep.subr.mxu0 0.0
        %3568 = vmatpush1.xpose.msra.mxu0 %v3231
        %3569 = vmatprep.subr.mxu0 0.0
        %3570 = vmatpush1.xpose.msra.mxu0 %v3228
        %3571 = vmatprep.subr.mxu0 0.0
        %3572 = vmatpush1.xpose.msra.mxu0 %v3225
        %3573 = vmatprep.subr.mxu0 0.0
        %3574 = vmatpush1.xpose.msra.mxu0 %v3222
        %3575 = vmatprep.subr.mxu0 0.0
        %3576 = vmatpush1.xpose.msra.mxu0 %v3219
        %3577 = vmatprep.subr.mxu0 0.0
        %3578 = vmatpush2.xpose.msra.mxu0 %v3312
        %3579 = vmatprep.subr.mxu0 0.0
        %3580 = vmatpush2.xpose.msra.mxu0 %v3309
        %3581 = vmatprep.subr.mxu0 0.0
        %3582 = vmatpush2.xpose.msra.mxu0 %v3306
        %3583 = vmatprep.subr.mxu0 0.0
        %3584 = vmatpush2.xpose.msra.mxu0 %v3303
        %3585 = vmatprep.subr.mxu0 0.0
        %3586 = vmatpush2.xpose.msra.mxu0 %v3300
        %3587 = vmatprep.subr.mxu0 0.0
        %3588 = vmatpush2.xpose.msra.mxu0 %v3297
        %3589 = vmatprep.subr.mxu0 0.0
        %3590 = vmatpush2.xpose.msra.mxu0 %v3294
        %3591 = vmatprep.subr.mxu0 0.0
        %3592 = vmatpush2.xpose.msra.mxu0 %v3291
        %3593 = vmatprep.subr.mxu0 0.0
        %3594 = vmatpush2.xpose.msra.mxu0 %v3288
        %3595 = vmatprep.subr.mxu0 0.0
        %3596 = vmatpush2.xpose.msra.mxu0 %v3285
        %3597 = vmatprep.subr.mxu0 0.0
        %3598 = vmatpush2.xpose.msra.mxu0 %v3282
        %3599 = vmatprep.subr.mxu0 0.0
        %3600 = vmatpush2.xpose.msra.mxu0 %v3279
        %3601 = vmatprep.subr.mxu0 0.0
        %3602 = vmatpush2.xpose.msra.mxu0 %v3276
        %3603 = vmatprep.subr.mxu0 0.0
        %3604 = vmatpush2.xpose.msra.mxu0 %v3273
        %3605 = vmatprep.subr.mxu0 0.0
        %3606 = vmatpush2.xpose.msra.mxu0 %v3270
        %3607 = vmatprep.subr.mxu0 0.0
        %3608 = vmatpush2.xpose.msra.mxu0 %v3267
        %3609 = vmatprep.mubr.f32.mxu0 0.0
        %3610 = vmatmul.mubr.f32.gmra.mxu0 %v3117
        %v3611 = vpop.f32.mrf.mxu0
        %v3612 = vadd.f32 %v3535, %v3611
        %v3613 = vpop.f32.mrf.mxu0
        %v3614 = vadd.f32 %v3537, %v3613
        %3615 = vmatprep.mubr.f32.mxu0 0.0
        %3616 = vmatmul.mubr.f32.gmra.mxu0 %v3120
        %v3617 = vpop.f32.mrf.mxu0
        %v3618 = vadd.f32 %v3541, %v3617
        %v3619 = vpop.f32.mrf.mxu0
        %v3620 = vadd.f32 %v3543, %v3619
        %3621 = vdwg.mxu0
        %3622 = vst [vmem:[%s193] sm:$0xff] %v3458
        %3623 = vst [vmem:[%s193 + $0x8] sm:$0xff] %v3460
        %3624 = vst [vmem:[%s193 + $0x10] sm:$0xff] %v3464
        %3625 = vst [vmem:[%s193 + $0x18] sm:$0xff] %v3466
        %s3626 = scalar_lea.vmem %s193, 32 [#allocation3]
        %3627 = vst [vmem:[%s3626] sm:$0xff] %v3612
        %3628 = vst [vmem:[%s3626 + $0x8] sm:$0xff] %v3614
        %3629 = vst [vmem:[%s3626 + $0x10] sm:$0xff] %v3618
        %3630 = vst [vmem:[%s3626 + $0x18] sm:$0xff] %v3620
        %s3631 = sand.u32 %s103, 1
        %s3632 = scalar_lea.sflag [#allocation4], %s3631
        %s3633 = sand.u32 %s103, 1
        %s3634 = smul.addr %s3633, 64
        %s3635 = scalar_lea.vmem [#allocation3], %s3634
        // Predicated region
        $region33: #{tpu_custom_call.1} parent=31 // pred_check
          %p3636 = pneg %p113
        $region34: #{tpu_custom_call.1} parent=31 // pred_check_branch
          %3638 = sbr.rel (%p3636) target = $region36
        $region35: #{tpu_custom_call.1} parent=31 // pred_region
          %s3640 = ssub.s32 1024, 1024
          %3641 = vsyncadd %s3632, %s3640
          %s3642 = smul.addr %s17, 8
          %s3643 = smul.addr %s3642, 128
          %s3644 = scalar_lea.hbm %s3, %s3643
          %s3645 = sshll.u32 %s3635, 4
          %s3646 = int_to_ptr.vmem [resolvable:$true] %s3645
          %3651 = dma.vmem_to_hbm [thread:$0]  %s3646, 1024, %s3644, %s3632, 256, 256, 16
        $region36: #{tpu_custom_call.1} parent=31 // pred_fallthru
          _
      $region32: #{tpu_custom_call.1} parent=5 // pred_fallthru
        _
      %p3652 = scmp.le.s32.totalorder 2, %s12
      // Predicated region
      $region37: #{tpu_custom_call.1} parent=5 // pred_check
        %p3653 = pneg %p3652
      $region38: #{tpu_custom_call.1} parent=5 // pred_check_branch
        %3655 = sbr.rel (%p3653) target = $region40
      $region39: #{tpu_custom_call.1} parent=5 // pred_region
        %s3656 = ssub.s32 %s12, 2
        // Predicated region
        $region41: #{tpu_custom_call.1} parent=39 // pred_check
          %p3657 = pneg %p119
        $region42: #{tpu_custom_call.1} parent=39 // pred_check_branch
          %3659 = sbr.rel (%p3657) target = $region44
        $region43: #{tpu_custom_call.1} parent=39 // pred_region
          %s3660 = sand.u32 %s104, 1
          %s3661 = scalar_lea.sflag [#allocation4], %s3660
          %s3662 = sand.u32 %s104, 1
          %s3663 = smul.addr %s3662, 64
          %s3664 = scalar_lea.vmem [#allocation3], %s3663
          %3665 = dma.done %s3661, 1024
        $region44: #{tpu_custom_call.1} parent=39 // pred_fallthru
          _
      $region40: #{tpu_custom_call.1} parent=5 // pred_fallthru
        _
    $region6: #{tpu_custom_call.1} parent=1 // loop_footer
      %s16 = sadd.s32 1, %s12
    $region7: #{tpu_custom_call.1} parent=1 // loop_footer_branch
      %11 = sbr.rel target = $region3
    $region8: #{tpu_custom_call.1} parent=1 // loop_exit
      _
    %3666 = vsyncpa [#allocation4], 1
    %s3667 = scalar_lea.sflag [#allocation4], 1
    %3668 = vsyncpa %s3667, 1

</llo_original>
